<compile_context>
chip_gen: v7x
topology: tpu7x:2x2x1
jax: 0.10.0
libtpu: 0.0.40
codegen_flags: <defaults>
</compile_context>

<pallas_src>
import math

import jax
import jax.numpy as jnp
from jax.experimental import pallas as pl
from jax.experimental.pallas import tpu as pltpu


# ---------------------------------------------------------------------------
# helpers
# ---------------------------------------------------------------------------
def _round_up(n, m):
    return ((n + m - 1) // m) * m


def _pad2(x, rows, cols):
    return jnp.pad(x, ((0, rows - x.shape[0]), (0, cols - x.shape[1])))


def _l1_normalize(v):
    # torch.nn.functional.normalize(p=1, dim=1): v / clamp_min(sum(|v|, 1), 1e-12)
    denom = jnp.maximum(jnp.sum(jnp.abs(v), axis=1, keepdims=True), 1e-12)
    return v / denom                       # exact reciprocal: runs once per row tile


def _choose_tiles(n, tm_req, tk_req):
    """Pick power-of-two tiles (>=128) and the padded node count."""
    assert tm_req >= 128 and (tm_req & (tm_req - 1)) == 0
    assert tk_req >= 128 and (tk_req & (tk_req - 1)) == 0
    n128 = _round_up(n, 128)
    tm, tk = tm_req, tk_req
    # don't pad the reduction axis far past the graph just to fill one tile
    while tk > 128 and tk > n128:
        tk //= 2
    # keep >= 2 row tiles so the "parallel" axis can shard across 2 TensorCores (v7x)
    while tm > 128 and _round_up(n128, tm) // tm < 2:
        tm //= 2
    n_p = _round_up(n, math.lcm(tm, tk))
    return tm, tk, n_p


def _vmem_limit_bytes(n_p, dp, fp, rp, tm, tk):
    bf2, f4 = 2, 4
    est = (2 * tm * tk * bf2                       # double-buffered A_hat tiles
           + 2 * n_p * dp * bf2                    # resident XW / HW2 operand
           + 2 * tm * rp * bf2                     # RWR row tile (pass 2)
           + 2 * tm * fp * bf2                     # X row tile (XW pre-pass)
           + tm * dp * f4                          # f32 accumulator
           + 2 * tm * dp * f4                      # double-buffered output tile
           + 2 * (fp * dp + 3 * dp * dp + rp * dp) * bf2   # resident weights
           + 2 * 6 * dp * f4)                      # biases
    # generous headroom; cap at v7x's 64 MiB physical VMEM per TensorCore
    return int(min(max(2 * est, 32 * 1024 * 1024), 64 * 1024 * 1024))


# ---------------------------------------------------------------------------
# Pre-pass:  XW = X @ W1        (hoisted out of the pass-1 reduction loop)
# ---------------------------------------------------------------------------
def xw_kernel(x_ref, w1_ref, out_ref):
    out_ref[...] = jnp.dot(x_ref[...], w1_ref[...],
                           preferred_element_type=jnp.float32).astype(out_ref.dtype)


def _xw_pass(x_p, w1_p, *, tm, vmem_limit):
    n_p, fp = x_p.shape
    dp = w1_p.shape[1]
    return pl.pallas_call(
        xw_kernel,
        out_shape=jax.ShapeDtypeStruct((n_p, dp), jnp.bfloat16),
        grid_spec=pltpu.PrefetchScalarGridSpec(
            num_scalar_prefetch=0,
            grid=(n_p // tm,),
            in_specs=[pl.BlockSpec((tm, fp), lambda i: (i, 0)),
                      pl.BlockSpec((fp, dp), lambda i: (0, 0))],
            out_specs=pl.BlockSpec((tm, dp), lambda i: (i, 0)),
        ),
        compiler_params=pltpu.CompilerParams(
            dimension_semantics=("parallel",),
            vmem_limit_bytes=vmem_limit),
    )(x_p, w1_p)


# ---------------------------------------------------------------------------
# Pass 1:  HW2 = (A_hat @ XW + b1) @ W2
#   grid = (rows/TM, rows/TK); A_hat streamed in (TM, TK) bf16 tiles,
#   XW fully VMEM-resident (constant index_map), k-chunk sliced with pl.ds.
# ---------------------------------------------------------------------------
def gcn_pass1_kernel(xw_ref, a_ref, b1_ref, w2_ref, out_ref, acc_ref):
    k = pl.program_id(1)
    tk = a_ref.shape[1]

    @pl.when(k == 0)
    def _():
        acc_ref[...] = jnp.zeros_like(acc_ref)

    k_off = pl.multiple_of(k * tk, tk)
    acc_ref[...] += jnp.dot(a_ref[...], xw_ref[pl.ds(k_off, tk), :],
                            preferred_element_type=jnp.float32)

    @pl.when(k == pl.num_programs(1) - 1)
    def _():
        h1 = acc_ref[...] + b1_ref[...]
        out_ref[...] = jnp.dot(h1.astype(w2_ref.dtype), w2_ref[...],
                               preferred_element_type=jnp.float32
                               ).astype(out_ref.dtype)


def _gcn_pass1(xw, a_p, b1_p, w2_p, *, tm, tk, vmem_limit):
    n_p, dp = xw.shape
    grid = (n_p // tm, n_p // tk)
    return pl.pallas_call(
        gcn_pass1_kernel,
        out_shape=jax.ShapeDtypeStruct((n_p, dp), jnp.bfloat16),
        grid_spec=pltpu.PrefetchScalarGridSpec(
            num_scalar_prefetch=0,
            grid=grid,
            in_specs=[
                pl.BlockSpec((n_p, dp), lambda i, k: (0, 0)),   # XW (VMEM-resident)
                pl.BlockSpec((tm, tk), lambda i, k: (i, k)),    # A_hat tile (streamed)
                pl.BlockSpec((1, dp), lambda i, k: (0, 0)),     # b1 (resident)
                pl.BlockSpec((dp, dp), lambda i, k: (0, 0)),    # W2 (resident)
            ],
            out_specs=pl.BlockSpec((tm, dp), lambda i, k: (i, 0)),
            scratch_shapes=[pltpu.VMEM((tm, dp), jnp.float32)],
        ),
        compiler_params=pltpu.CompilerParams(
            dimension_semantics=("parallel", "arbitrary"),
            vmem_limit_bytes=vmem_limit),
    )(xw, a_p, b1_p, w2_p)


# ---------------------------------------------------------------------------
# Pass 2:  H2 = A_hat @ HW2 + b2 ; pos = RWR @ Wlin + blin
#          out = L1( L1(pos) @ Wc_pos + L1(H2) @ Wc_gcn + b_c )
# ---------------------------------------------------------------------------
def gcn_pass2_kernel(hw2_ref, a_ref, rwr_ref,
                     wlin_ref, blin_ref, b2_ref,
                     wcp_ref, wcg_ref, bc_ref,
                     out_ref, acc_ref):
    k = pl.program_id(1)
    tk = a_ref.shape[1]

    @pl.when(k == 0)
    def _():
        acc_ref[...] = jnp.zeros_like(acc_ref)

    k_off = pl.multiple_of(k * tk, tk)
    acc_ref[...] += jnp.dot(a_ref[...], hw2_ref[pl.ds(k_off, tk), :],
                            preferred_element_type=jnp.float32)

    @pl.when(k == pl.num_programs(1) - 1)
    def _():
        h2 = acc_ref[...] + b2_ref[...]
        pos = jnp.dot(rwr_ref[...], wlin_ref[...],
                      preferred_element_type=jnp.float32) + blin_ref[...]
        pos_n = _l1_normalize(pos)
        gcn_n = _l1_normalize(h2)
        comb = (jnp.dot(pos_n.astype(wcp_ref.dtype), wcp_ref[...],
                        preferred_element_type=jnp.float32)
                + jnp.dot(gcn_n.astype(wcg_ref.dtype), wcg_ref[...],
                          preferred_element_type=jnp.float32)
                + bc_ref[...])
        out_ref[...] = _l1_normalize(comb).astype(out_ref.dtype)


def _gcn_pass2(hw2, a_p, rwr_p, wlin_p, blin_p, b2_p, wcp_p, wcg_p, bc_p,
               *, tm, tk, vmem_limit):
    n_p, dp = hw2.shape
    rp = rwr_p.shape[1]
    grid = (n_p // tm, n_p // tk)
    return pl.pallas_call(
        gcn_pass2_kernel,
        out_shape=jax.ShapeDtypeStruct((n_p, dp), jnp.float32),
        grid_spec=pltpu.PrefetchScalarGridSpec(
            num_scalar_prefetch=0,
            grid=grid,
            in_specs=[
                pl.BlockSpec((n_p, dp), lambda i, k: (0, 0)),   # HW2 (VMEM-resident)
                pl.BlockSpec((tm, tk), lambda i, k: (i, k)),    # A_hat tile (streamed)
                pl.BlockSpec((tm, rp), lambda i, k: (i, 0)),    # RWR rows of this i tile
                pl.BlockSpec((rp, dp), lambda i, k: (0, 0)),    # Wlin (resident)
                pl.BlockSpec((1, dp), lambda i, k: (0, 0)),     # blin
                pl.BlockSpec((1, dp), lambda i, k: (0, 0)),     # b2
                pl.BlockSpec((dp, dp), lambda i, k: (0, 0)),    # Wc_pos
                pl.BlockSpec((dp, dp), lambda i, k: (0, 0)),    # Wc_gcn
                pl.BlockSpec((1, dp), lambda i, k: (0, 0)),     # b_c
            ],
            out_specs=pl.BlockSpec((tm, dp), lambda i, k: (i, 0)),
            scratch_shapes=[pltpu.VMEM((tm, dp), jnp.float32)],
        ),
        compiler_params=pltpu.CompilerParams(
            dimension_semantics=("parallel", "arbitrary"),
            vmem_limit_bytes=vmem_limit),
    )(hw2, a_p, rwr_p, wlin_p, blin_p, b2_p, wcp_p, wcg_p, bc_p)


# ---------------------------------------------------------------------------
# wrapper glue
# ---------------------------------------------------------------------------
def build_normalized_adj(edge_index, num_nodes, *, padded_nodes=None,
                         out_dtype=jnp.float32):
    """PyG GCNConv gcn_norm (add_self_loops=True, unit edge weights), dense.

    Self-loops are only added to nodes that don't already have one
    (add_remaining_self_loops semantics).  Built directly at the padded size and
    cast once to the target dtype so the wrapper avoids an extra pad+copy.
    """
    if padded_nodes is None:
        padded_nodes = num_nodes
    src, dst = edge_index[0], edge_index[1]
    a = jnp.zeros((padded_nodes, padded_nodes), jnp.float32)
    a = a.at[dst, src].add(1.0)                            # message flows src -> dst
    diag = jnp.diagonal(a)
    node_mask = jnp.arange(padded_nodes) < num_nodes
    a = a + jnp.diag(jnp.where((diag == 0.0) & node_mask, 1.0, 0.0))
    deg = jnp.sum(a, axis=1)
    d_inv_sqrt = jnp.where(deg > 0, 1.0 / jnp.sqrt(deg), 0.0)
    a = d_inv_sqrt[:, None] * a * d_inv_sqrt[None, :]
    return a.astype(out_dtype)


def _prep_params(params):
    rwr_dim, dim = params["w_lin"].shape
    feat_dim = params["w1"].shape[0]
    dp = _round_up(dim, 128)
    fp = _round_up(feat_dim, 128)
    rp = _round_up(rwr_dim, 128)
    bf = jnp.bfloat16
    pp = {
        "w_lin": _pad2(params["w_lin"], rp, dp).astype(bf),
        "b_lin": _pad2(params["b_lin"], 1, dp),
        "w1": _pad2(params["w1"], fp, dp).astype(bf),
        "b1": _pad2(params["b1"], 1, dp),
        "w2": _pad2(params["w2"], dp, dp).astype(bf),
        "b2": _pad2(params["b2"], 1, dp),
        "wc_pos": _pad2(params["wc_pos"], dp, dp).astype(bf),
        "wc_gcn": _pad2(params["wc_gcn"], dp, dp).astype(bf),
        "b_c": _pad2(params["b_c"], 1, dp),
    }
    return pp, dim, dp, fp, rp


def _run_side(rwr, x, edge_index, pp, dim, dp, fp, rp, tm_req, tk_req):
    n = rwr.shape[0]
    tm, tk, n_p = _choose_tiles(n, tm_req, tk_req)
    bf = jnp.bfloat16

    a_p = build_normalized_adj(edge_index, n, padded_nodes=n_p, out_dtype=bf)
    x_p = _pad2(x, n_p, fp).astype(bf)
    rwr_p = _pad2(rwr, n_p, rp).astype(bf)

    vmem_limit = _vmem_limit_bytes(n_p, dp, fp, rp, tm, tk)

    xw = _xw_pass(x_p, pp["w1"], tm=tm, vmem_limit=vmem_limit)
    hw2 = _gcn_pass1(xw, a_p, pp["b1"], pp["w2"], tm=tm, tk=tk,
                     vmem_limit=vmem_limit)
    out = _gcn_pass2(hw2, a_p, rwr_p,
                     pp["w_lin"], pp["b_lin"], pp["b2"],
                     pp["wc_pos"], pp["wc_gcn"], pp["b_c"],
                     tm=tm, tk=tk, vmem_limit=vmem_limit)
    return out[:n, :dim]


def bright_a_forward(rwr1, rwr2, x1, edge_index1, x2, edge_index2, params,
                     tm=512, tk=512):
    pp, dim, dp, fp, rp = _prep_params(params)
    emd1 = _run_side(rwr1, x1, edge_index1, pp, dim, dp, fp, rp, tm, tk)
    emd2 = _run_side(rwr2, x2, edge_index2, pp, dim, dp, fp, rp, tm, tk)
    return emd1, emd2


# ---------------------------------------------------------------------------
# pure-JAX f32 reference (same semantics as the torch module)
# ---------------------------------------------------------------------------
def reference_forward(rwr1, rwr2, x1, ei1, x2, ei2, params):
    def l1n(v):
        d = jnp.maximum(jnp.sum(jnp.abs(v), axis=1, keepdims=True), 1e-12)
        return v / d

    def side(rwr, x, ei):
        a = build_normalized_adj(ei, x.shape[0])
        pos = rwr @ params["w_lin"] + params["b_lin"]
        h = a @ (x @ params["w1"]) + params["b1"]
        h = a @ (h @ params["w2"]) + params["b2"]
        comb = l1n(pos) @ params["wc_pos"] + l1n(h) @ params["wc_gcn"] + params["b_c"]
        return l1n(comb)

    return side(rwr1, x1, ei1), side(rwr2, x2, ei2)


# ---------------------------------------------------------------------------
# deterministic parameter init (shapes follow BRIGHT_A.__init__)
# ---------------------------------------------------------------------------
def init_params(key, dim, rwr_dim, g1_feat_dim):
    ks = jax.random.split(key, 8)
    scale = 0.1
    return {
        "w_lin": scale * jax.random.normal(ks[0], (rwr_dim, dim), jnp.float32),
        "b_lin": scale * jax.random.normal(ks[1], (1, dim), jnp.float32),
        "w1": scale * jax.random.normal(ks[2], (g1_feat_dim, dim), jnp.float32),
        "b1": scale * jax.random.normal(ks[3], (1, dim), jnp.float32),
        "w2": scale * jax.random.normal(ks[4], (dim, dim), jnp.float32),
        "b2": scale * jax.random.normal(ks[5], (1, dim), jnp.float32),
        "wc_pos": scale * jax.random.normal(ks[6], (dim, dim), jnp.float32),
        "wc_gcn": scale * jax.random.normal(ks[7], (dim, dim), jnp.float32),
        "b_c": scale * jax.random.normal(jax.random.fold_in(key, 99), (1, dim), jnp.float32),
    }


def ring_edges(n):
    i = jnp.arange(n, dtype=jnp.int32)
    j = (i + 1) % n
    src = jnp.concatenate([i, j])
    dst = jnp.concatenate([j, i])
    return jnp.stack([src, dst], axis=0)


if __name__ == "__main__":
    key = jax.random.PRNGKey(0)
    k_in, k_par = jax.random.split(key)

    dim, rwr_dim, g1_feat_dim = 32, 16, 8
    n1, n2 = 300, 260  # small but big enough to exercise the (row, reduction) grid

    k1, k2, k3, k4 = jax.random.split(k_in, 4)
    rwr1 = jax.random.normal(k1, (n1, rwr_dim), jnp.float32)
    rwr2 = jax.random.normal(k2, (n2, rwr_dim), jnp.float32)
    x1 = jax.random.normal(k3, (n1, g1_feat_dim), jnp.float32)
    x2 = jax.random.normal(k4, (n2, g1_feat_dim), jnp.float32)
    ei1 = ring_edges(n1)
    ei2 = ring_edges(n2)

    params = init_params(k_par, dim, rwr_dim, g1_feat_dim)

    fwd = jax.jit(bright_a_forward, static_argnums=(7, 8))
    emd1, emd2 = fwd(rwr1, rwr2, x1, ei1, x2, ei2, params, 512, 512)
    jax.block_until_ready((emd1, emd2))

    ref1, ref2 = reference_forward(rwr1, rwr2, x1, ei1, x2, ei2, params)
    err1 = float(jnp.max(jnp.abs(emd1 - ref1)))
    err2 = float(jnp.max(jnp.abs(emd2 - ref2)))

    assert emd1.shape == (n1, dim) and emd2.shape == (n2, dim)
    assert bool(jnp.all(jnp.isfinite(emd1))) and bool(jnp.all(jnp.isfinite(emd2)))
    assert err1 < 2e-2 and err2 < 2e-2, (err1, err2)  # bf16 A/X/RWR/weights tolerance
    print("KERNEL_OK")
</pallas_src>

<mosaic_0001>
module attributes {stable_mosaic.version = 11 : i64} {
  func.func @xw_kernel(%arg0: i32, %arg1: memref<256x128xbf16, #tpu.memory_space<vmem>>, %arg2: memref<128x128xbf16, #tpu.memory_space<vmem>>, %arg3: memref<256x128xbf16, #tpu.memory_space<vmem>>) attributes {dimension_semantics = [#tpu.dimension_semantics<parallel>], iteration_bounds = array<i64: 2>, scalar_prefetch = 0 : i64, scratch_operands = 0 : i64, tpu.core_type = #tpu.core_type<tc>, window_params = [{transform_indices = @transform_0, window_bounds = array<i64: 256, 128>}, {pipeline_mode = #tpu.pipeline_mode<synchronous>, transform_indices = @transform_1, window_bounds = array<i64: 128, 128>}, {transform_indices = @transform_2, window_bounds = array<i64: 256, 128>}]} {
    %c0 = arith.constant 0 : index
    %c0_0 = arith.constant 0 : index
    %0 = vector.load %arg1[%c0, %c0_0] : memref<256x128xbf16, #tpu.memory_space<vmem>>, vector<256x128xbf16>
    %c0_1 = arith.constant 0 : index
    %c0_2 = arith.constant 0 : index
    %1 = vector.load %arg2[%c0_1, %c0_2] : memref<128x128xbf16, #tpu.memory_space<vmem>>, vector<128x128xbf16>
    %cst = arith.constant dense<0.000000e+00> : vector<256x128xf32>
    %2 = tpu.matmul %0, %1, %cst {dimension_numbers = #tpu.dot_dimension_numbers<[1], [0], [0], [1], [0, 0, 1, 1], [], []>} : vector<256x128xbf16>, vector<128x128xbf16>, vector<256x128xf32> -> vector<256x128xf32>
    %3 = arith.truncf %2 : vector<256x128xf32> to vector<256x128xbf16>
    %c0_3 = arith.constant 0 : index
    %c0_4 = arith.constant 0 : index
    %4 = vector.load %arg3[%c0_3, %c0_4] : memref<256x128xbf16, #tpu.memory_space<vmem>>, vector<256x128xbf16>
    tpu.vector_store %arg3[%c0_3, %c0_4], %3 {strides = array<i32>} : memref<256x128xbf16, #tpu.memory_space<vmem>>, vector<256x128xbf16>,
    return
  }
  func.func @transform_0(%arg0: i32) -> (i32, i32) {
    %c0_i32 = arith.constant 0 : i32
    %c0_i32_0 = arith.constant 0 : i32
    return %arg0, %c0_i32 : i32, i32
  }
  func.func @transform_1(%arg0: i32) -> (i32, i32) {
    %c0_i32 = arith.constant 0 : i32
    %c0_i32_0 = arith.constant 0 : i32
    %c0_i32_1 = arith.constant 0 : i32
    return %c0_i32, %c0_i32_0 : i32, i32
  }
  func.func @transform_2(%arg0: i32) -> (i32, i32) {
    %c0_i32 = arith.constant 0 : i32
    %c0_i32_0 = arith.constant 0 : i32
    return %arg0, %c0_i32 : i32, i32
  }
}

module attributes {stable_mosaic.version = 11 : i64} {
  func.func @gcn_pass1_kernel(%arg0: i32, %arg1: i32, %arg2: memref<512x128xbf16, #tpu.memory_space<vmem>>, %arg3: memref<256x256xbf16, #tpu.memory_space<vmem>>, %arg4: memref<1x128xf32, #tpu.memory_space<vmem>>, %arg5: memref<128x128xbf16, #tpu.memory_space<vmem>>, %arg6: memref<256x128xbf16, #tpu.memory_space<vmem>>, %arg7: memref<256x128xf32, #tpu.memory_space<vmem>>) attributes {dimension_semantics = [#tpu.dimension_semantics<parallel>, #tpu.dimension_semantics<arbitrary>], iteration_bounds = array<i64: 2, 2>, scalar_prefetch = 0 : i64, scratch_operands = 1 : i64, tpu.core_type = #tpu.core_type<tc>, window_params = [{pipeline_mode = #tpu.pipeline_mode<synchronous>, transform_indices = @transform_0, window_bounds = array<i64: 512, 128>}, {transform_indices = @transform_1, window_bounds = array<i64: 256, 256>}, {pipeline_mode = #tpu.pipeline_mode<synchronous>, transform_indices = @transform_2, window_bounds = array<i64: 1, 128>}, {pipeline_mode = #tpu.pipeline_mode<synchronous>, transform_indices = @transform_3, window_bounds = array<i64: 128, 128>}, {transform_indices = @transform_4, window_bounds = array<i64: 256, 128>}]} {
    %c0_i32 = arith.constant 0 : i32
    %0 = arith.cmpi eq, %arg1, %c0_i32 : i32
    %1 = arith.extui %0 : i1 to i32
    %c0_i32_0 = arith.constant 0 : i32
    %2 = arith.cmpi ne, %1, %c0_i32_0 : i32
    scf.if %2 {
      %cst_8 = arith.constant 0.000000e+00 : f32
      %15 = vector.broadcast %cst_8 : f32 to vector<256x128xf32>
      %c0_9 = arith.constant 0 : index
      %c0_10 = arith.constant 0 : index
      %16 = vector.load %arg7[%c0_9, %c0_10] : memref<256x128xf32, #tpu.memory_space<vmem>>, vector<256x128xf32>
      tpu.vector_store %arg7[%c0_9, %c0_10], %15 {strides = array<i32>} : memref<256x128xf32, #tpu.memory_space<vmem>>, vector<256x128xf32>,
    } else {
    }
    %c256_i32 = arith.constant 256 : i32
    %3 = arith.muli %arg1, %c256_i32 : i32
    %4 = tpu.assume_multiple %3, 256 : i32
    %c0 = arith.constant 0 : index
    %c0_1 = arith.constant 0 : index
    %5 = vector.load %arg7[%c0, %c0_1] : memref<256x128xf32, #tpu.memory_space<vmem>>, vector<256x128xf32>
    %c0_2 = arith.constant 0 : index
    %c0_3 = arith.constant 0 : index
    %6 = vector.load %arg3[%c0_2, %c0_3] : memref<256x256xbf16, #tpu.memory_space<vmem>>, vector<256x256xbf16>
    %7 = arith.index_cast %4 : i32 to index
    %c0_4 = arith.constant 0 : index
    %8 = vector.load %arg2[%7, %c0_4] : memref<512x128xbf16, #tpu.memory_space<vmem>>, vector<256x128xbf16>
    %cst = arith.constant dense<0.000000e+00> : vector<256x128xf32>
    %9 = tpu.matmul %6, %8, %cst {dimension_numbers = #tpu.dot_dimension_numbers<[1], [0], [0], [1], [0, 0, 1, 1], [], []>} : vector<256x256xbf16>, vector<256x128xbf16>, vector<256x128xf32> -> vector<256x128xf32>
    %10 = arith.addf %5, %9 : vector<256x128xf32>
    %c0_5 = arith.constant 0 : index
    %c0_6 = arith.constant 0 : index
    %11 = vector.load %arg7[%c0_5, %c0_6] : memref<256x128xf32, #tpu.memory_space<vmem>>, vector<256x128xf32>
    tpu.vector_store %arg7[%c0_5, %c0_6], %10 {strides = array<i32>} : memref<256x128xf32, #tpu.memory_space<vmem>>, vector<256x128xf32>,
    %c1_i32 = arith.constant 1 : i32
    %12 = arith.cmpi eq, %arg1, %c1_i32 : i32
    %13 = arith.extui %12 : i1 to i32
    %c0_i32_7 = arith.constant 0 : i32
    %14 = arith.cmpi ne, %13, %c0_i32_7 : i32
    scf.if %14 {
      %c0_8 = arith.constant 0 : index
      %c0_9 = arith.constant 0 : index
      %15 = vector.load %arg7[%c0_8, %c0_9] : memref<256x128xf32, #tpu.memory_space<vmem>>, vector<256x128xf32>
      %c0_10 = arith.constant 0 : index
      %c0_11 = arith.constant 0 : index
      %16 = vector.load %arg4[%c0_10, %c0_11] : memref<1x128xf32, #tpu.memory_space<vmem>>, vector<1x128xf32>
      %17 = vector.broadcast %16 : vector<1x128xf32> to vector<256x128xf32>
      %18 = arith.addf %15, %17 : vector<256x128xf32>
      %19 = arith.truncf %18 : vector<256x128xf32> to vector<256x128xbf16>
      %c0_12 = arith.constant 0 : index
      %c0_13 = arith.constant 0 : index
      %20 = vector.load %arg5[%c0_12, %c0_13] : memref<128x128xbf16, #tpu.memory_space<vmem>>, vector<128x128xbf16>
      %cst_14 = arith.constant dense<0.000000e+00> : vector<256x128xf32>
      %21 = tpu.matmul %19, %20, %cst_14 {dimension_numbers = #tpu.dot_dimension_numbers<[1], [0], [0], [1], [0, 0, 1, 1], [], []>} : vector<256x128xbf16>, vector<128x128xbf16>, vector<256x128xf32> -> vector<256x128xf32>
      %22 = arith.truncf %21 : vector<256x128xf32> to vector<256x128xbf16>
      %c0_15 = arith.constant 0 : index
      %c0_16 = arith.constant 0 : index
      %23 = vector.load %arg6[%c0_15, %c0_16] : memref<256x128xbf16, #tpu.memory_space<vmem>>, vector<256x128xbf16>
      tpu.vector_store %arg6[%c0_15, %c0_16], %22 {strides = array<i32>} : memref<256x128xbf16, #tpu.memory_space<vmem>>, vector<256x128xbf16>,
    } else {
    }
    return
  }
  func.func @transform_0(%arg0: i32, %arg1: i32) -> (i32, i32) {
    %c0_i32 = arith.constant 0 : i32
    %c0_i32_0 = arith.constant 0 : i32
    %c0_i32_1 = arith.constant 0 : i32
    return %c0_i32, %c0_i32_0 : i32, i32
  }
  func.func @transform_1(%arg0: i32, %arg1: i32) -> (i32, i32) {
    %c0_i32 = arith.constant 0 : i32
    return %arg0, %arg1 : i32, i32
  }
  func.func @transform_2(%arg0: i32, %arg1: i32) -> (i32, i32) {
    %c0_i32 = arith.constant 0 : i32
    %c0_i32_0 = arith.constant 0 : i32
    %c0_i32_1 = arith.constant 0 : i32
    return %c0_i32, %c0_i32_0 : i32, i32
  }
  func.func @transform_3(%arg0: i32, %arg1: i32) -> (i32, i32) {
    %c0_i32 = arith.constant 0 : i32
    %c0_i32_0 = arith.constant 0 : i32
    %c0_i32_1 = arith.constant 0 : i32
    return %c0_i32, %c0_i32_0 : i32, i32
  }
  func.func @transform_4(%arg0: i32, %arg1: i32) -> (i32, i32) {
    %c0_i32 = arith.constant 0 : i32
    %c0_i32_0 = arith.constant 0 : i32
    return %arg0, %c0_i32 : i32, i32
  }
}

module attributes {stable_mosaic.version = 11 : i64} {
  func.func @gcn_pass2_kernel(%arg0: i32, %arg1: i32, %arg2: memref<512x128xbf16, #tpu.memory_space<vmem>>, %arg3: memref<256x256xbf16, #tpu.memory_space<vmem>>, %arg4: memref<256x128xbf16, #tpu.memory_space<vmem>>, %arg5: memref<128x128xbf16, #tpu.memory_space<vmem>>, %arg6: memref<1x128xf32, #tpu.memory_space<vmem>>, %arg7: memref<1x128xf32, #tpu.memory_space<vmem>>, %arg8: memref<128x128xbf16, #tpu.memory_space<vmem>>, %arg9: memref<128x128xbf16, #tpu.memory_space<vmem>>, %arg10: memref<1x128xf32, #tpu.memory_space<vmem>>, %arg11: memref<256x128xf32, #tpu.memory_space<vmem>>, %arg12: memref<256x128xf32, #tpu.memory_space<vmem>>) attributes {dimension_semantics = [#tpu.dimension_semantics<parallel>, #tpu.dimension_semantics<arbitrary>], iteration_bounds = array<i64: 2, 2>, scalar_prefetch = 0 : i64, scratch_operands = 1 : i64, tpu.core_type = #tpu.core_type<tc>, window_params = [{pipeline_mode = #tpu.pipeline_mode<synchronous>, transform_indices = @transform_0, window_bounds = array<i64: 512, 128>}, {transform_indices = @transform_1, window_bounds = array<i64: 256, 256>}, {transform_indices = @transform_2, window_bounds = array<i64: 256, 128>}, {pipeline_mode = #tpu.pipeline_mode<synchronous>, transform_indices = @transform_3, window_bounds = array<i64: 128, 128>}, {pipeline_mode = #tpu.pipeline_mode<synchronous>, transform_indices = @transform_4, window_bounds = array<i64: 1, 128>}, {pipeline_mode = #tpu.pipeline_mode<synchronous>, transform_indices = @transform_5, window_bounds = array<i64: 1, 128>}, {pipeline_mode = #tpu.pipeline_mode<synchronous>, transform_indices = @transform_6, window_bounds = array<i64: 128, 128>}, {pipeline_mode = #tpu.pipeline_mode<synchronous>, transform_indices = @transform_7, window_bounds = array<i64: 128, 128>}, {pipeline_mode = #tpu.pipeline_mode<synchronous>, transform_indices = @transform_8, window_bounds = array<i64: 1, 128>}, {transform_indices = @transform_9, window_bounds = array<i64: 256, 128>}]} {
    %c0_i32 = arith.constant 0 : i32
    %0 = arith.cmpi eq, %arg1, %c0_i32 : i32
    %1 = arith.extui %0 : i1 to i32
    %c0_i32_0 = arith.constant 0 : i32
    %2 = arith.cmpi ne, %1, %c0_i32_0 : i32
    scf.if %2 {
      %cst_8 = arith.constant 0.000000e+00 : f32
      %15 = vector.broadcast %cst_8 : f32 to vector<256x128xf32>
      %c0_9 = arith.constant 0 : index
      %c0_10 = arith.constant 0 : index
      %16 = vector.load %arg12[%c0_9, %c0_10] : memref<256x128xf32, #tpu.memory_space<vmem>>, vector<256x128xf32>
      tpu.vector_store %arg12[%c0_9, %c0_10], %15 {strides = array<i32>} : memref<256x128xf32, #tpu.memory_space<vmem>>, vector<256x128xf32>,
    } else {
    }
    %c256_i32 = arith.constant 256 : i32
    %3 = arith.muli %arg1, %c256_i32 : i32
    %4 = tpu.assume_multiple %3, 256 : i32
    %c0 = arith.constant 0 : index
    %c0_1 = arith.constant 0 : index
    %5 = vector.load %arg12[%c0, %c0_1] : memref<256x128xf32, #tpu.memory_space<vmem>>, vector<256x128xf32>
    %c0_2 = arith.constant 0 : index
    %c0_3 = arith.constant 0 : index
    %6 = vector.load %arg3[%c0_2, %c0_3] : memref<256x256xbf16, #tpu.memory_space<vmem>>, vector<256x256xbf16>
    %7 = arith.index_cast %4 : i32 to index
    %c0_4 = arith.constant 0 : index
    %8 = vector.load %arg2[%7, %c0_4] : memref<512x128xbf16, #tpu.memory_space<vmem>>, vector<256x128xbf16>
    %cst = arith.constant dense<0.000000e+00> : vector<256x128xf32>
    %9 = tpu.matmul %6, %8, %cst {dimension_numbers = #tpu.dot_dimension_numbers<[1], [0], [0], [1], [0, 0, 1, 1], [], []>} : vector<256x256xbf16>, vector<256x128xbf16>, vector<256x128xf32> -> vector<256x128xf32>
    %10 = arith.addf %5, %9 : vector<256x128xf32>
    %c0_5 = arith.constant 0 : index
    %c0_6 = arith.constant 0 : index
    %11 = vector.load %arg12[%c0_5, %c0_6] : memref<256x128xf32, #tpu.memory_space<vmem>>, vector<256x128xf32>
    tpu.vector_store %arg12[%c0_5, %c0_6], %10 {strides = array<i32>} : memref<256x128xf32, #tpu.memory_space<vmem>>, vector<256x128xf32>,
    %c1_i32 = arith.constant 1 : i32
    %12 = arith.cmpi eq, %arg1, %c1_i32 : i32
    %13 = arith.extui %12 : i1 to i32
    %c0_i32_7 = arith.constant 0 : i32
    %14 = arith.cmpi ne, %13, %c0_i32_7 : i32
    scf.if %14 {
      %c0_8 = arith.constant 0 : index
      %c0_9 = arith.constant 0 : index
      %15 = vector.load %arg12[%c0_8, %c0_9] : memref<256x128xf32, #tpu.memory_space<vmem>>, vector<256x128xf32>
      %c0_10 = arith.constant 0 : index
      %c0_11 = arith.constant 0 : index
      %16 = vector.load %arg7[%c0_10, %c0_11] : memref<1x128xf32, #tpu.memory_space<vmem>>, vector<1x128xf32>
      %17 = vector.broadcast %16 : vector<1x128xf32> to vector<256x128xf32>
      %18 = arith.addf %15, %17 : vector<256x128xf32>
      %c0_12 = arith.constant 0 : index
      %c0_13 = arith.constant 0 : index
      %19 = vector.load %arg4[%c0_12, %c0_13] : memref<256x128xbf16, #tpu.memory_space<vmem>>, vector<256x128xbf16>
      %c0_14 = arith.constant 0 : index
      %c0_15 = arith.constant 0 : index
      %20 = vector.load %arg5[%c0_14, %c0_15] : memref<128x128xbf16, #tpu.memory_space<vmem>>, vector<128x128xbf16>
      %cst_16 = arith.constant dense<0.000000e+00> : vector<256x128xf32>
      %21 = tpu.matmul %19, %20, %cst_16 {dimension_numbers = #tpu.dot_dimension_numbers<[1], [0], [0], [1], [0, 0, 1, 1], [], []>} : vector<256x128xbf16>, vector<128x128xbf16>, vector<256x128xf32> -> vector<256x128xf32>
      %c0_17 = arith.constant 0 : index
      %c0_18 = arith.constant 0 : index
      %22 = vector.load %arg6[%c0_17, %c0_18] : memref<1x128xf32, #tpu.memory_space<vmem>>, vector<1x128xf32>
      %23 = vector.broadcast %22 : vector<1x128xf32> to vector<256x128xf32>
      %24 = arith.addf %21, %23 : vector<256x128xf32>
      %25 = math.absf %24 : vector<256x128xf32>
      %cst_19 = arith.constant dense<0.000000e+00> : vector<256xf32>
      %26 = vector.multi_reduction <add>, %25, %cst_19 [1] : vector<256x128xf32> to vector<256xf32>
      %27 = vector.shape_cast %26 : vector<256xf32> to vector<256x1xf32>
      %cst_20 = arith.constant 9.99999996E-13 : f32
      %28 = vector.broadcast %cst_20 : f32 to vector<256x1xf32>
      %29 = arith.maximumf %27, %28 : vector<256x1xf32>
      %30 = vector.broadcast %29 : vector<256x1xf32> to vector<256x128xf32>
      %31 = arith.divf %24, %30 : vector<256x128xf32>
      %32 = math.absf %18 : vector<256x128xf32>
      %cst_21 = arith.constant dense<0.000000e+00> : vector<256xf32>
      %33 = vector.multi_reduction <add>, %32, %cst_21 [1] : vector<256x128xf32> to vector<256xf32>
      %34 = vector.shape_cast %33 : vector<256xf32> to vector<256x1xf32>
      %cst_22 = arith.constant 9.99999996E-13 : f32
      %35 = vector.broadcast %cst_22 : f32 to vector<256x1xf32>
      %36 = arith.maximumf %34, %35 : vector<256x1xf32>
      %37 = vector.broadcast %36 : vector<256x1xf32> to vector<256x128xf32>
      %38 = arith.divf %18, %37 : vector<256x128xf32>
      %39 = arith.truncf %31 : vector<256x128xf32> to vector<256x128xbf16>
      %c0_23 = arith.constant 0 : index
      %c0_24 = arith.constant 0 : index
      %40 = vector.load %arg8[%c0_23, %c0_24] : memref<128x128xbf16, #tpu.memory_space<vmem>>, vector<128x128xbf16>
      %cst_25 = arith.constant dense<0.000000e+00> : vector<256x128xf32>
      %41 = tpu.matmul %39, %40, %cst_25 {dimension_numbers = #tpu.dot_dimension_numbers<[1], [0], [0], [1], [0, 0, 1, 1], [], []>} : vector<256x128xbf16>, vector<128x128xbf16>, vector<256x128xf32> -> vector<256x128xf32>
      %42 = arith.truncf %38 : vector<256x128xf32> to vector<256x128xbf16>
      %c0_26 = arith.constant 0 : index
      %c0_27 = arith.constant 0 : index
      %43 = vector.load %arg9[%c0_26, %c0_27] : memref<128x128xbf16, #tpu.memory_space<vmem>>, vector<128x128xbf16>
      %cst_28 = arith.constant dense<0.000000e+00> : vector<256x128xf32>
      %44 = tpu.matmul %42, %43, %cst_28 {dimension_numbers = #tpu.dot_dimension_numbers<[1], [0], [0], [1], [0, 0, 1, 1], [], []>} : vector<256x128xbf16>, vector<128x128xbf16>, vector<256x128xf32> -> vector<256x128xf32>
      %45 = arith.addf %41, %44 : vector<256x128xf32>
      %c0_29 = arith.constant 0 : index
      %c0_30 = arith.constant 0 : index
      %46 = vector.load %arg10[%c0_29, %c0_30] : memref<1x128xf32, #tpu.memory_space<vmem>>, vector<1x128xf32>
      %47 = vector.broadcast %46 : vector<1x128xf32> to vector<256x128xf32>
      %48 = arith.addf %45, %47 : vector<256x128xf32>
      %49 = math.absf %48 : vector<256x128xf32>
      %cst_31 = arith.constant dense<0.000000e+00> : vector<256xf32>
      %50 = vector.multi_reduction <add>, %49, %cst_31 [1] : vector<256x128xf32> to vector<256xf32>
      %51 = vector.shape_cast %50 : vector<256xf32> to vector<256x1xf32>
      %cst_32 = arith.constant 9.99999996E-13 : f32
      %52 = vector.broadcast %cst_32 : f32 to vector<256x1xf32>
      %53 = arith.maximumf %51, %52 : vector<256x1xf32>
      %54 = vector.broadcast %53 : vector<256x1xf32> to vector<256x128xf32>
      %55 = arith.divf %48, %54 : vector<256x128xf32>
      %c0_33 = arith.constant 0 : index
      %c0_34 = arith.constant 0 : index
      %56 = vector.load %arg11[%c0_33, %c0_34] : memref<256x128xf32, #tpu.memory_space<vmem>>, vector<256x128xf32>
      tpu.vector_store %arg11[%c0_33, %c0_34], %55 {strides = array<i32>} : memref<256x128xf32, #tpu.memory_space<vmem>>, vector<256x128xf32>,
    } else {
    }
    return
  }
  func.func @transform_0(%arg0: i32, %arg1: i32) -> (i32, i32) {
    %c0_i32 = arith.constant 0 : i32
    %c0_i32_0 = arith.constant 0 : i32
    %c0_i32_1 = arith.constant 0 : i32
    return %c0_i32, %c0_i32_0 : i32, i32
  }
  func.func @transform_1(%arg0: i32, %arg1: i32) -> (i32, i32) {
    %c0_i32 = arith.constant 0 : i32
    return %arg0, %arg1 : i32, i32
  }
  func.func @transform_2(%arg0: i32, %arg1: i32) -> (i32, i32) {
    %c0_i32 = arith.constant 0 : i32
    %c0_i32_0 = arith.constant 0 : i32
    return %arg0, %c0_i32 : i32, i32
  }
  func.func @transform_3(%arg0: i32, %arg1: i32) -> (i32, i32) {
    %c0_i32 = arith.constant 0 : i32
    %c0_i32_0 = arith.constant 0 : i32
    %c0_i32_1 = arith.constant 0 : i32
    return %c0_i32, %c0_i32_0 : i32, i32
  }
  func.func @transform_4(%arg0: i32, %arg1: i32) -> (i32, i32) {
    %c0_i32 = arith.constant 0 : i32
    %c0_i32_0 = arith.constant 0 : i32
    %c0_i32_1 = arith.constant 0 : i32
    return %c0_i32, %c0_i32_0 : i32, i32
  }
  func.func @transform_5(%arg0: i32, %arg1: i32) -> (i32, i32) {
    %c0_i32 = arith.constant 0 : i32
    %c0_i32_0 = arith.constant 0 : i32
    %c0_i32_1 = arith.constant 0 : i32
    return %c0_i32, %c0_i32_0 : i32, i32
  }
  func.func @transform_6(%arg0: i32, %arg1: i32) -> (i32, i32) {
    %c0_i32 = arith.constant 0 : i32
    %c0_i32_0 = arith.constant 0 : i32
    %c0_i32_1 = arith.constant 0 : i32
    return %c0_i32, %c0_i32_0 : i32, i32
  }
  func.func @transform_7(%arg0: i32, %arg1: i32) -> (i32, i32) {
    %c0_i32 = arith.constant 0 : i32
    %c0_i32_0 = arith.constant 0 : i32
    %c0_i32_1 = arith.constant 0 : i32
    return %c0_i32, %c0_i32_0 : i32, i32
  }
  func.func @transform_8(%arg0: i32, %arg1: i32) -> (i32, i32) {
    %c0_i32 = arith.constant 0 : i32
    %c0_i32_0 = arith.constant 0 : i32
    %c0_i32_1 = arith.constant 0 : i32
    return %c0_i32, %c0_i32_0 : i32, i32
  }
  func.func @transform_9(%arg0: i32, %arg1: i32) -> (i32, i32) {
    %c0_i32 = arith.constant 0 : i32
    %c0_i32_0 = arith.constant 0 : i32
    return %arg0, %c0_i32 : i32, i32
  }
}

</mosaic_0001>

<llo_original>
// kernel: bright_a_forward.9
$region0: #{bright_a_forward.9}
  #allocation0 [shape = 'u32[]', space=smem, size = 0x4, offset = 0x4, fixed_abs, tag = 'smem constant byte address 0x4 - core index']
  #allocation1 [shape = 'u32[144,128]{1,0:T(1,128)}', space=vmem, size = 0x12000, scoped, tag = 'internal scratch']
  %s0 = inlined_call_operand.vmem [shape: bf16[512,128], index: 0, kind: input, shape index: {}]
  %s1 = inlined_call_operand.vmem [shape: bf16[128,128], index: 1, kind: input, shape index: {}]
  %s2 = inlined_call_operand.vmem [shape: bf16[512,128], index: 2, kind: output, shape index: {}]
  %s3 = sld [smem:[#allocation0]]
  $region41: #{bright_a_forward.9} parent=0
    _
  %s5 = ssub.s32 1, %s3
  %s6 = scalar_select 0, %s5, %s3
  loop: start=0, step=1, limit=4
  $region2: #{bright_a_forward.9} parent=0 // loop_pre_header
    _
  $region3: #{bright_a_forward.9} parent=0 // loop_header
    %s8 = sphi 0, %s12
    %p9 = scmp.ge.s32.totalorder %s8, 4
    %s18 = sphi 0, %s20
    %s21 = sphi 0, %s18
    %s22 = sphi 0, %s21
    %s38 = sphi 0, %s22
    %s42 = sphi 0, %s42
    %s44 = sphi 0, %s42
    %s45 = sphi 0, %s44
    %s59 = sphi 0, %s45
    %s65 = sphi 0, %s67
    %s68 = sphi 0, %s65
    %s69 = sphi 0, %s68
    %s85 = sphi 0, %s69
  $region4: #{bright_a_forward.9} parent=0 // loop_header_branch
    %11 = sbr.rel (%p9) target = $region8
  $region5: #{bright_a_forward.9} parent=0 // loop_body
    %s13 = ssub.s32 %s8, 1
    %s14 = ssub.s32 %s8, 2
    %s15 = sadd.s32 %s8, 1
    %s16 = ssub.s32 %s8, %s15
    %p17 = scmp.eq.s32.totalorder %s16, 0
    %s19 = sadd.s32 %s18, 1
    %s20 = scalar_select %p17, %s18, %s19
    %p23 = pneg %p17
    %p24 = scmp.eq.s32.totalorder %s8, 1
    %p25 = por %p23, %p24
    %p26 = scmp.ne.s32.totalorder %s18, %s21
    %p27 = scmp.eq.s32.totalorder %s8, 0
    %p28 = por %p26, %p27
    %p29 = scmp.ne.s32.totalorder %s18, %s21
    %p30 = scmp.eq.s32.totalorder %s13, 1
    %p31 = por %p29, %p30
    %p32 = scmp.ne.s32.totalorder %s21, %s22
    %p33 = scmp.eq.s32.totalorder %s13, 0
    %p34 = por %p32, %p33
    %p35 = scmp.ne.s32.totalorder %s21, %s22
    %p36 = scmp.eq.s32.totalorder %s14, 1
    %p37 = por %p35, %p36
    %p39 = scmp.ne.s32.totalorder %s22, %s38
    %p40 = scmp.eq.s32.totalorder %s14, 0
    %p41 = por %p39, %p40
    %s43 = sadd.s32 %s42, 1
    %p46 = scmp.eq.s32.totalorder %s8, 1
    %p47 = scmp.ne.s32.totalorder %s42, %s44
    %p48 = scmp.eq.s32.totalorder %s8, 0
    %p49 = por %p47, %p48
    %p50 = scmp.ne.s32.totalorder %s42, %s44
    %p51 = scmp.eq.s32.totalorder %s13, 1
    %p52 = por %p50, %p51
    %p53 = scmp.ne.s32.totalorder %s44, %s45
    %p54 = scmp.eq.s32.totalorder %s13, 0
    %p55 = por %p53, %p54
    %p56 = scmp.ne.s32.totalorder %s44, %s45
    %p57 = scmp.eq.s32.totalorder %s14, 1
    %p58 = por %p56, %p57
    %p60 = scmp.ne.s32.totalorder %s45, %s59
    %p61 = scmp.eq.s32.totalorder %s14, 0
    %p62 = por %p60, %p61
    %s63 = ssub.s32 %s8, %s15
    %p64 = scmp.eq.s32.totalorder %s63, 0
    %s66 = sadd.s32 %s65, 1
    %s67 = scalar_select %p64, %s65, %s66
    %p70 = pneg %p64
    %p71 = scmp.eq.s32.totalorder %s8, 1
    %p72 = por %p70, %p71
    %p73 = scmp.ne.s32.totalorder %s65, %s68
    %p74 = scmp.eq.s32.totalorder %s8, 0
    %p75 = por %p73, %p74
    %p76 = scmp.ne.s32.totalorder %s65, %s68
    %p77 = scmp.eq.s32.totalorder %s13, 1
    %p78 = por %p76, %p77
    %p79 = scmp.ne.s32.totalorder %s68, %s69
    %p80 = scmp.eq.s32.totalorder %s13, 0
    %p81 = por %p79, %p80
    %p82 = scmp.ne.s32.totalorder %s68, %s69
    %p83 = scmp.eq.s32.totalorder %s14, 1
    %p84 = por %p82, %p83
    %p86 = scmp.ne.s32.totalorder %s69, %s85
    %p87 = scmp.eq.s32.totalorder %s14, 0
    %p88 = por %p86, %p87
    %p89 = scmp.le.s32.totalorder 1, %s8
    %p90 = scmp.lt.s32.totalorder %s8, 3
    %p91 = pnand %p89, %p90
    %p92 = pneg %p91
    // Predicated region
    $region9: #{bright_a_forward.9} parent=5 // pred_check
      _
    $region10: #{bright_a_forward.9} parent=5 // pred_check_branch
      %94 = sbr.rel (%p91) target = $region12
    $region11: #{bright_a_forward.9} parent=5 // pred_region
      %s95 = ssub.s32 %s8, 1
      // Predicated region
      $region13: #{bright_a_forward.9} parent=11 // pred_check
        %p96 = pneg %p55
      $region14: #{bright_a_forward.9} parent=11 // pred_check_branch
        %98 = sbr.rel (%p96) target = $region16
      $region15: #{bright_a_forward.9} parent=11 // pred_region
        _
      $region16: #{bright_a_forward.9} parent=11 // pred_fallthru
        _
    $region12: #{bright_a_forward.9} parent=5 // pred_fallthru
      _
    %p99 = scmp.lt.s32.totalorder %s8, 2
    // Predicated region
    $region17: #{bright_a_forward.9} parent=5 // pred_check
      %p100 = pneg %p99
    $region18: #{bright_a_forward.9} parent=5 // pred_check_branch
      %102 = sbr.rel (%p100) target = $region20
    $region19: #{bright_a_forward.9} parent=5 // pred_region
      // Predicated region
      $region21: #{bright_a_forward.9} parent=19 // pred_check
        %p103 = pneg %p28
      $region22: #{bright_a_forward.9} parent=19 // pred_check_branch
        %105 = sbr.rel (%p103) target = $region24
      $region23: #{bright_a_forward.9} parent=19 // pred_region
        %s106 = smul.u32 32, %s8
        %p107 = scmp.lt.s32.totalorder %s106, 63
        %s108 = scalar_select %p107, %s106, 63
        %s109 = smul.addr %s108, 4
        %s110 = scalar_lea.vmem %s0, %s109
        %s111 = smul.u32 32, %s8
      $region24: #{bright_a_forward.9} parent=19 // pred_fallthru
        _
    $region20: #{bright_a_forward.9} parent=5 // pred_fallthru
      _
    %p112 = scmp.le.s32.totalorder 1, %s8
    %p113 = scmp.lt.s32.totalorder %s8, 3
    %p114 = pnand %p112, %p113
    %p115 = pneg %p114
    // Predicated region
    $region25: #{bright_a_forward.9} parent=5 // pred_check
      _
    $region26: #{bright_a_forward.9} parent=5 // pred_check_branch
      %117 = sbr.rel (%p114) target = $region28
    $region27: #{bright_a_forward.9} parent=5 // pred_region
      %s118 = ssub.s32 %s8, 1
      %s119 = smul.u32 32, %s13
      %p120 = scmp.lt.s32.totalorder %s119, 63
      %s121 = scalar_select %p120, %s119, 63
      %s122 = smul.addr %s121, 4
      %s123 = scalar_lea.vmem %s0, %s122
      %p124 = pneg %p34
      %p125 = pneg %p31
      %p126 = pneg %p55
      %p127 = pneg %p52
      %p128 = pneg %p81
      %p129 = pneg %p78
      %s130 = smul.u32 32, %s13
      %p131 = scmp.lt.s32.totalorder %s130, 63
      %s132 = scalar_select %p131, %s130, 63
      %s133 = smul.addr %s132, 4
      %s134 = scalar_lea.vmem %s2, %s133
      %s135 = smul.u32 32, %s13
      %p136 = scmp.lt.s32.totalorder %s135, 63
      %s137 = scalar_select %p136, %s135, 63
      %s138 = smul.addr %s137, 4
      %s139 = scalar_lea.vmem %s0, %s138
      %s140 = smul.u32 32, %s13
      %s141 = smul.u32 32, %s13
      %p142 = scmp.lt.s32.totalorder %s141, 63
      %s143 = scalar_select %p142, %s141, 63
      %s144 = smul.addr %s143, 4
      %s145 = scalar_lea.vmem %s2, %s144
      %s146 = smul.u32 32, %s13
      %v148 = vld [vmem:[%s139] sm:$0xf]
      %v149 = vld [vmem:[%s139 + $0x4] sm:$0xf]
      %v150 = vld [vmem:[%s139 + $0x8] sm:$0xf]
      %v151 = vld [vmem:[%s139 + $0xc] sm:$0xf]
      %v152 = vld [vmem:[%s139 + $0x10] sm:$0xf]
      %v153 = vld [vmem:[%s139 + $0x14] sm:$0xf]
      %v154 = vld [vmem:[%s139 + $0x18] sm:$0xf]
      %v155 = vld [vmem:[%s139 + $0x1c] sm:$0xf]
      %v156 = vld [vmem:[%s139 + $0x20] sm:$0xf]
      %v157 = vld [vmem:[%s139 + $0x24] sm:$0xf]
      %v158 = vld [vmem:[%s139 + $0x28] sm:$0xf]
      %v159 = vld [vmem:[%s139 + $0x2c] sm:$0xf]
      %v160 = vld [vmem:[%s139 + $0x30] sm:$0xf]
      %v161 = vld [vmem:[%s139 + $0x34] sm:$0xf]
      %v162 = vld [vmem:[%s139 + $0x38] sm:$0xf]
      %v163 = vld [vmem:[%s139 + $0x3c] sm:$0xf]
      %v164 = vld [vmem:[%s139 + $0x40] sm:$0xf]
      %v165 = vld [vmem:[%s139 + $0x44] sm:$0xf]
      %v166 = vld [vmem:[%s139 + $0x48] sm:$0xf]
      %v167 = vld [vmem:[%s139 + $0x4c] sm:$0xf]
      %v168 = vld [vmem:[%s139 + $0x50] sm:$0xf]
      %v169 = vld [vmem:[%s139 + $0x54] sm:$0xf]
      %v170 = vld [vmem:[%s139 + $0x58] sm:$0xf]
      %v171 = vld [vmem:[%s139 + $0x5c] sm:$0xf]
      %v172 = vld [vmem:[%s139 + $0x60] sm:$0xf]
      %v173 = vld [vmem:[%s139 + $0x64] sm:$0xf]
      %v174 = vld [vmem:[%s139 + $0x68] sm:$0xf]
      %v175 = vld [vmem:[%s139 + $0x6c] sm:$0xf]
      %v176 = vld [vmem:[%s139 + $0x70] sm:$0xf]
      %v177 = vld [vmem:[%s139 + $0x74] sm:$0xf]
      %v178 = vld [vmem:[%s139 + $0x78] sm:$0xf]
      %v179 = vld [vmem:[%s139 + $0x7c] sm:$0xf]
      %v180 = vld [vmem:[%s1] sm:$0xf]
      %v181 = vld [vmem:[%s1 + $0x4] sm:$0xf]
      %v182 = vld [vmem:[%s1 + $0x8] sm:$0xf]
      %v183 = vld [vmem:[%s1 + $0xc] sm:$0xf]
      %v184 = vld [vmem:[%s1 + $0x10] sm:$0xf]
      %v185 = vld [vmem:[%s1 + $0x14] sm:$0xf]
      %v186 = vld [vmem:[%s1 + $0x18] sm:$0xf]
      %v187 = vld [vmem:[%s1 + $0x1c] sm:$0xf]
      %v188 = vld [vmem:[%s1 + $0x20] sm:$0xf]
      %v189 = vld [vmem:[%s1 + $0x24] sm:$0xf]
      %v190 = vld [vmem:[%s1 + $0x28] sm:$0xf]
      %v191 = vld [vmem:[%s1 + $0x2c] sm:$0xf]
      %v192 = vld [vmem:[%s1 + $0x30] sm:$0xf]
      %v193 = vld [vmem:[%s1 + $0x34] sm:$0xf]
      %v194 = vld [vmem:[%s1 + $0x38] sm:$0xf]
      %v195 = vld [vmem:[%s1 + $0x3c] sm:$0xf]
      %v228 = vunpack.c.l.b16 %v148
      %v229 = vunpack.c.l.b16 %v149
      %v230 = vunpack.c.l.b16 %v150
      %v231 = vunpack.c.l.b16 %v151
      %v232 = vunpack.c.l.b16 %v152
      %v233 = vunpack.c.l.b16 %v153
      %v234 = vunpack.c.l.b16 %v154
      %v235 = vunpack.c.l.b16 %v155
      %v236 = vunpack.c.l.b16 %v156
      %v237 = vunpack.c.l.b16 %v157
      %v238 = vunpack.c.l.b16 %v158
      %v239 = vunpack.c.l.b16 %v159
      %v240 = vunpack.c.l.b16 %v160
      %v241 = vunpack.c.l.b16 %v161
      %v242 = vunpack.c.l.b16 %v162
      %v243 = vunpack.c.l.b16 %v163
      %v244 = vunpack.c.l.b16 %v164
      %v245 = vunpack.c.l.b16 %v165
      %v246 = vunpack.c.l.b16 %v166
      %v247 = vunpack.c.l.b16 %v167
      %v248 = vunpack.c.l.b16 %v168
      %v249 = vunpack.c.l.b16 %v169
      %v250 = vunpack.c.l.b16 %v170
      %v251 = vunpack.c.l.b16 %v171
      %v252 = vunpack.c.l.b16 %v172
      %v253 = vunpack.c.l.b16 %v173
      %v254 = vunpack.c.l.b16 %v174
      %v255 = vunpack.c.l.b16 %v175
      %v256 = vunpack.c.l.b16 %v176
      %v257 = vunpack.c.l.b16 %v177
      %v258 = vunpack.c.l.b16 %v178
      %v259 = vunpack.c.l.b16 %v179
      %v260 = vpack.c.b16 %v229, %v228
      %v261 = vpack.c.b16 %v231, %v230
      %v262 = vpack.c.b16 %v233, %v232
      %v263 = vpack.c.b16 %v235, %v234
      %v264 = vpack.c.b16 %v237, %v236
      %v265 = vpack.c.b16 %v239, %v238
      %v266 = vpack.c.b16 %v241, %v240
      %v267 = vpack.c.b16 %v243, %v242
      %v268 = vpack.c.b16 %v245, %v244
      %v269 = vpack.c.b16 %v247, %v246
      %v270 = vpack.c.b16 %v249, %v248
      %v271 = vpack.c.b16 %v251, %v250
      %v272 = vpack.c.b16 %v253, %v252
      %v273 = vpack.c.b16 %v255, %v254
      %v274 = vpack.c.b16 %v257, %v256
      %v275 = vpack.c.b16 %v259, %v258
      %v308 = vunpack.c.l.b16 %v180
      %v309 = vunpack.c.l.b16 %v181
      %v310 = vunpack.c.l.b16 %v182
      %v311 = vunpack.c.l.b16 %v183
      %v312 = vunpack.c.l.b16 %v184
      %v313 = vunpack.c.l.b16 %v185
      %v314 = vunpack.c.l.b16 %v186
      %v315 = vunpack.c.l.b16 %v187
      %v316 = vunpack.c.l.b16 %v188
      %v317 = vunpack.c.l.b16 %v189
      %v318 = vunpack.c.l.b16 %v190
      %v319 = vunpack.c.l.b16 %v191
      %v320 = vunpack.c.l.b16 %v192
      %v321 = vunpack.c.l.b16 %v193
      %v322 = vunpack.c.l.b16 %v194
      %v323 = vunpack.c.l.b16 %v195
      %v324 = vpack.c.b16 %v309, %v308
      %v325 = vpack.c.b16 %v311, %v310
      %v326 = vpack.c.b16 %v313, %v312
      %v327 = vpack.c.b16 %v315, %v314
      %v328 = vpack.c.b16 %v317, %v316
      %v329 = vpack.c.b16 %v319, %v318
      %v330 = vpack.c.b16 %v321, %v320
      %v331 = vpack.c.b16 %v323, %v322
      %340 = vmatprep.subr.bf16.mxu0 0
      %341 = vmatpush1.bf16.msra.mxu0 %v324
      %342 = vmatprep.subr.bf16.mxu0 0
      %343 = vmatpush1.bf16.msra.mxu0 %v325
      %344 = vmatprep.subr.bf16.mxu0 0
      %345 = vmatpush1.bf16.msra.mxu0 %v326
      %346 = vmatprep.subr.bf16.mxu0 0
      %347 = vmatpush1.bf16.msra.mxu0 %v327
      %348 = vmatprep.subr.bf16.mxu0 0
      %349 = vmatpush1.bf16.msra.mxu0 %v328
      %350 = vmatprep.subr.bf16.mxu0 0
      %351 = vmatpush1.bf16.msra.mxu0 %v329
      %352 = vmatprep.subr.bf16.mxu0 0
      %353 = vmatpush1.bf16.msra.mxu0 %v330
      %354 = vmatprep.subr.bf16.mxu0 0
      %355 = vmatpush1.bf16.msra.mxu0 %v331
      %356 = vmatprep.subr.bf16.mxu0 0
      %357 = vmatpush1.bf16.msra.mxu0 0
      %358 = vmatprep.subr.bf16.mxu0 0
      %359 = vmatpush1.bf16.msra.mxu0 0
      %360 = vmatprep.subr.bf16.mxu0 0
      %361 = vmatpush1.bf16.msra.mxu0 0
      %362 = vmatprep.subr.bf16.mxu0 0
      %363 = vmatpush1.bf16.msra.mxu0 0
      %364 = vmatprep.subr.bf16.mxu0 0
      %365 = vmatpush1.bf16.msra.mxu0 0
      %366 = vmatprep.subr.bf16.mxu0 0
      %367 = vmatpush1.bf16.msra.mxu0 0
      %368 = vmatprep.subr.bf16.mxu0 0
      %369 = vmatpush1.bf16.msra.mxu0 0
      %370 = vmatprep.subr.bf16.mxu0 0
      %371 = vmatpush1.bf16.msra.mxu0 0
      %372 = vmatprep.mubr.bf16.mxu0 0
      %373 = vmatmul.mubr.bf16.gmra.mrb[0].mxu0 %v260
      %v374 = vpop.f32.mrb[0].mxu0
      %v375 = vadd.f32 0.0, %v374
      %v376 = vpop.f32.mrb[0].mxu0
      %v377 = vpop.f32.mrb[0].mxu0
      %v378 = vadd.f32 0.0, %v377
      %v379 = vpop.f32.mrb[0].mxu0
      %380 = vmatprep.mubr.bf16.mxu0 0
      %381 = vmatmul.mubr.bf16.gmra.mrb[0].mxu0 %v261
      %v382 = vpop.f32.mrb[0].mxu0
      %v383 = vadd.f32 0.0, %v382
      %v384 = vpop.f32.mrb[0].mxu0
      %v385 = vpop.f32.mrb[0].mxu0
      %v386 = vadd.f32 0.0, %v385
      %v387 = vpop.f32.mrb[0].mxu0
      %388 = vmatprep.mubr.bf16.mxu0 0
      %389 = vmatmul.mubr.bf16.gmra.mrb[0].mxu0 %v262
      %v390 = vpop.f32.mrb[0].mxu0
      %v391 = vadd.f32 0.0, %v390
      %v392 = vpop.f32.mrb[0].mxu0
      %v393 = vpop.f32.mrb[0].mxu0
      %v394 = vadd.f32 0.0, %v393
      %v395 = vpop.f32.mrb[0].mxu0
      %396 = vmatprep.mubr.bf16.mxu0 0
      %397 = vmatmul.mubr.bf16.gmra.mrb[0].mxu0 %v263
      %v398 = vpop.f32.mrb[0].mxu0
      %v399 = vadd.f32 0.0, %v398
      %v400 = vpop.f32.mrb[0].mxu0
      %v401 = vpop.f32.mrb[0].mxu0
      %v402 = vadd.f32 0.0, %v401
      %v403 = vpop.f32.mrb[0].mxu0
      %404 = vmatprep.mubr.bf16.mxu0 0
      %405 = vmatmul.mubr.bf16.gmra.mrb[0].mxu0 %v264
      %v406 = vpop.f32.mrb[0].mxu0
      %v407 = vadd.f32 0.0, %v406
      %v408 = vpop.f32.mrb[0].mxu0
      %v409 = vpop.f32.mrb[0].mxu0
      %v410 = vadd.f32 0.0, %v409
      %v411 = vpop.f32.mrb[0].mxu0
      %412 = vmatprep.mubr.bf16.mxu0 0
      %413 = vmatmul.mubr.bf16.gmra.mrb[0].mxu0 %v265
      %v414 = vpop.f32.mrb[0].mxu0
      %v415 = vadd.f32 0.0, %v414
      %v416 = vpop.f32.mrb[0].mxu0
      %v417 = vpop.f32.mrb[0].mxu0
      %v418 = vadd.f32 0.0, %v417
      %v419 = vpop.f32.mrb[0].mxu0
      %420 = vmatprep.mubr.bf16.mxu0 0
      %421 = vmatmul.mubr.bf16.gmra.mrb[0].mxu0 %v266
      %v422 = vpop.f32.mrb[0].mxu0
      %v423 = vadd.f32 0.0, %v422
      %v424 = vpop.f32.mrb[0].mxu0
      %v425 = vpop.f32.mrb[0].mxu0
      %v426 = vadd.f32 0.0, %v425
      %v427 = vpop.f32.mrb[0].mxu0
      %428 = vmatprep.mubr.bf16.mxu0 0
      %429 = vmatmul.mubr.bf16.gmra.mrb[0].mxu0 %v267
      %v430 = vpop.f32.mrb[0].mxu0
      %v431 = vadd.f32 0.0, %v430
      %v432 = vpop.f32.mrb[0].mxu0
      %v433 = vpop.f32.mrb[0].mxu0
      %v434 = vadd.f32 0.0, %v433
      %v435 = vpop.f32.mrb[0].mxu0
      %436 = vmatprep.mubr.bf16.mxu0 0
      %437 = vmatmul.mubr.bf16.gmra.mrb[0].mxu0 %v268
      %v438 = vpop.f32.mrb[0].mxu0
      %v439 = vadd.f32 0.0, %v438
      %v440 = vpop.f32.mrb[0].mxu0
      %v441 = vpop.f32.mrb[0].mxu0
      %v442 = vadd.f32 0.0, %v441
      %v443 = vpop.f32.mrb[0].mxu0
      %444 = vmatprep.mubr.bf16.mxu0 0
      %445 = vmatmul.mubr.bf16.gmra.mrb[0].mxu0 %v269
      %v446 = vpop.f32.mrb[0].mxu0
      %v447 = vadd.f32 0.0, %v446
      %v448 = vpop.f32.mrb[0].mxu0
      %v449 = vpop.f32.mrb[0].mxu0
      %v450 = vadd.f32 0.0, %v449
      %v451 = vpop.f32.mrb[0].mxu0
      %452 = vmatprep.mubr.bf16.mxu0 0
      %453 = vmatmul.mubr.bf16.gmra.mrb[0].mxu0 %v270
      %v454 = vpop.f32.mrb[0].mxu0
      %v455 = vadd.f32 0.0, %v454
      %v456 = vpop.f32.mrb[0].mxu0
      %v457 = vpop.f32.mrb[0].mxu0
      %v458 = vadd.f32 0.0, %v457
      %v459 = vpop.f32.mrb[0].mxu0
      %460 = vmatprep.mubr.bf16.mxu0 0
      %461 = vmatmul.mubr.bf16.gmra.mrb[0].mxu0 %v271
      %v462 = vpop.f32.mrb[0].mxu0
      %v463 = vadd.f32 0.0, %v462
      %v464 = vpop.f32.mrb[0].mxu0
      %v465 = vpop.f32.mrb[0].mxu0
      %v466 = vadd.f32 0.0, %v465
      %v467 = vpop.f32.mrb[0].mxu0
      %468 = vmatprep.mubr.bf16.mxu0 0
      %469 = vmatmul.mubr.bf16.gmra.mrb[0].mxu0 %v272
      %v470 = vpop.f32.mrb[0].mxu0
      %v471 = vadd.f32 0.0, %v470
      %v472 = vpop.f32.mrb[0].mxu0
      %v473 = vpop.f32.mrb[0].mxu0
      %v474 = vadd.f32 0.0, %v473
      %v475 = vpop.f32.mrb[0].mxu0
      %476 = vmatprep.mubr.bf16.mxu0 0
      %477 = vmatmul.mubr.bf16.gmra.mrb[0].mxu0 %v273
      %v478 = vpop.f32.mrb[0].mxu0
      %v479 = vadd.f32 0.0, %v478
      %v480 = vpop.f32.mrb[0].mxu0
      %v481 = vpop.f32.mrb[0].mxu0
      %v482 = vadd.f32 0.0, %v481
      %v483 = vpop.f32.mrb[0].mxu0
      %484 = vmatprep.mubr.bf16.mxu0 0
      %485 = vmatmul.mubr.bf16.gmra.mrb[0].mxu0 %v274
      %v486 = vpop.f32.mrb[0].mxu0
      %v487 = vadd.f32 0.0, %v486
      %v488 = vpop.f32.mrb[0].mxu0
      %v489 = vpop.f32.mrb[0].mxu0
      %v490 = vadd.f32 0.0, %v489
      %v491 = vpop.f32.mrb[0].mxu0
      %492 = vmatprep.mubr.bf16.mxu0 0
      %493 = vmatmul.mubr.bf16.gmra.mrb[0].mxu0 %v275
      %v494 = vpop.f32.mrb[0].mxu0
      %v495 = vadd.f32 0.0, %v494
      %v496 = vpop.f32.mrb[0].mxu0
      %v497 = vpop.f32.mrb[0].mxu0
      %v498 = vadd.f32 0.0, %v497
      %v499 = vpop.f32.mrb[0].mxu0
      %500 = vdwg.mxu0
      %v501 = vpack.c.bf16 %v378, %v375
      %v502 = vpack.c.bf16 %v386, %v383
      %v503 = vpack.c.bf16 %v394, %v391
      %v504 = vpack.c.bf16 %v402, %v399
      %v505 = vpack.c.bf16 %v410, %v407
      %v506 = vpack.c.bf16 %v418, %v415
      %v507 = vpack.c.bf16 %v426, %v423
      %v508 = vpack.c.bf16 %v434, %v431
      %v509 = vpack.c.bf16 %v442, %v439
      %v510 = vpack.c.bf16 %v450, %v447
      %v511 = vpack.c.bf16 %v458, %v455
      %v512 = vpack.c.bf16 %v466, %v463
      %v513 = vpack.c.bf16 %v474, %v471
      %v514 = vpack.c.bf16 %v482, %v479
      %v515 = vpack.c.bf16 %v490, %v487
      %v516 = vpack.c.bf16 %v498, %v495
      %v533 = vunpack.c.l.b16 %v501
      %v534 = vunpack.c.h.b16 %v501
      %v535 = vunpack.c.l.b16 %v502
      %v536 = vunpack.c.h.b16 %v502
      %v537 = vunpack.c.l.b16 %v503
      %v538 = vunpack.c.h.b16 %v503
      %v539 = vunpack.c.l.b16 %v504
      %v540 = vunpack.c.h.b16 %v504
      %v541 = vunpack.c.l.b16 %v505
      %v542 = vunpack.c.h.b16 %v505
      %v543 = vunpack.c.l.b16 %v506
      %v544 = vunpack.c.h.b16 %v506
      %v545 = vunpack.c.l.b16 %v507
      %v546 = vunpack.c.h.b16 %v507
      %v547 = vunpack.c.l.b16 %v508
      %v548 = vunpack.c.h.b16 %v508
      %v549 = vunpack.c.l.b16 %v509
      %v550 = vunpack.c.h.b16 %v509
      %v551 = vunpack.c.l.b16 %v510
      %v552 = vunpack.c.h.b16 %v510
      %v553 = vunpack.c.l.b16 %v511
      %v554 = vunpack.c.h.b16 %v511
      %v555 = vunpack.c.l.b16 %v512
      %v556 = vunpack.c.h.b16 %v512
      %v557 = vunpack.c.l.b16 %v513
      %v558 = vunpack.c.h.b16 %v513
      %v559 = vunpack.c.l.b16 %v514
      %v560 = vunpack.c.h.b16 %v514
      %v561 = vunpack.c.l.b16 %v515
      %v562 = vunpack.c.h.b16 %v515
      %v563 = vunpack.c.l.b16 %v516
      %v564 = vunpack.c.h.b16 %v516
      %v565 = vpack.c.b16 %v533, %v533
      %v566 = vpack.c.b16 %v534, %v534
      %v567 = vpack.c.b16 %v535, %v535
      %v568 = vpack.c.b16 %v536, %v536
      %v569 = vpack.c.b16 %v537, %v537
      %v570 = vpack.c.b16 %v538, %v538
      %v571 = vpack.c.b16 %v539, %v539
      %v572 = vpack.c.b16 %v540, %v540
      %v573 = vpack.c.b16 %v541, %v541
      %v574 = vpack.c.b16 %v542, %v542
      %v575 = vpack.c.b16 %v543, %v543
      %v576 = vpack.c.b16 %v544, %v544
      %v577 = vpack.c.b16 %v545, %v545
      %v578 = vpack.c.b16 %v546, %v546
      %v579 = vpack.c.b16 %v547, %v547
      %v580 = vpack.c.b16 %v548, %v548
      %v581 = vpack.c.b16 %v549, %v549
      %v582 = vpack.c.b16 %v550, %v550
      %v583 = vpack.c.b16 %v551, %v551
      %v584 = vpack.c.b16 %v552, %v552
      %v585 = vpack.c.b16 %v553, %v553
      %v586 = vpack.c.b16 %v554, %v554
      %v587 = vpack.c.b16 %v555, %v555
      %v588 = vpack.c.b16 %v556, %v556
      %v589 = vpack.c.b16 %v557, %v557
      %v590 = vpack.c.b16 %v558, %v558
      %v591 = vpack.c.b16 %v559, %v559
      %v592 = vpack.c.b16 %v560, %v560
      %v593 = vpack.c.b16 %v561, %v561
      %v594 = vpack.c.b16 %v562, %v562
      %v595 = vpack.c.b16 %v563, %v563
      %v596 = vpack.c.b16 %v564, %v564
      %629 = vst [vmem:[%s145] sm:$0xf] %v565
      %630 = vst [vmem:[%s145 + $0x4] sm:$0xf] %v566
      %631 = vst [vmem:[%s145 + $0x8] sm:$0xf] %v567
      %632 = vst [vmem:[%s145 + $0xc] sm:$0xf] %v568
      %633 = vst [vmem:[%s145 + $0x10] sm:$0xf] %v569
      %634 = vst [vmem:[%s145 + $0x14] sm:$0xf] %v570
      %635 = vst [vmem:[%s145 + $0x18] sm:$0xf] %v571
      %636 = vst [vmem:[%s145 + $0x1c] sm:$0xf] %v572
      %637 = vst [vmem:[%s145 + $0x20] sm:$0xf] %v573
      %638 = vst [vmem:[%s145 + $0x24] sm:$0xf] %v574
      %639 = vst [vmem:[%s145 + $0x28] sm:$0xf] %v575
      %640 = vst [vmem:[%s145 + $0x2c] sm:$0xf] %v576
      %641 = vst [vmem:[%s145 + $0x30] sm:$0xf] %v577
      %642 = vst [vmem:[%s145 + $0x34] sm:$0xf] %v578
      %643 = vst [vmem:[%s145 + $0x38] sm:$0xf] %v579
      %644 = vst [vmem:[%s145 + $0x3c] sm:$0xf] %v580
      %645 = vst [vmem:[%s145 + $0x40] sm:$0xf] %v581
      %646 = vst [vmem:[%s145 + $0x44] sm:$0xf] %v582
      %647 = vst [vmem:[%s145 + $0x48] sm:$0xf] %v583
      %648 = vst [vmem:[%s145 + $0x4c] sm:$0xf] %v584
      %649 = vst [vmem:[%s145 + $0x50] sm:$0xf] %v585
      %650 = vst [vmem:[%s145 + $0x54] sm:$0xf] %v586
      %651 = vst [vmem:[%s145 + $0x58] sm:$0xf] %v587
      %652 = vst [vmem:[%s145 + $0x5c] sm:$0xf] %v588
      %653 = vst [vmem:[%s145 + $0x60] sm:$0xf] %v589
      %654 = vst [vmem:[%s145 + $0x64] sm:$0xf] %v590
      %655 = vst [vmem:[%s145 + $0x68] sm:$0xf] %v591
      %656 = vst [vmem:[%s145 + $0x6c] sm:$0xf] %v592
      %657 = vst [vmem:[%s145 + $0x70] sm:$0xf] %v593
      %658 = vst [vmem:[%s145 + $0x74] sm:$0xf] %v594
      %659 = vst [vmem:[%s145 + $0x78] sm:$0xf] %v595
      %660 = vst [vmem:[%s145 + $0x7c] sm:$0xf] %v596
      %s661 = smul.u32 32, %s13
      %p662 = scmp.lt.s32.totalorder %s661, 63
      %s663 = scalar_select %p662, %s661, 63
      %s664 = smul.addr %s663, 4
      %s665 = scalar_lea.vmem %s2, %s664
      // Predicated region
      $region29: #{bright_a_forward.9} parent=27 // pred_check
        %p666 = pneg %p78
      $region30: #{bright_a_forward.9} parent=27 // pred_check_branch
        %668 = sbr.rel (%p666) target = $region32
      $region31: #{bright_a_forward.9} parent=27 // pred_region
        %s669 = smul.u32 32, %s13
      $region32: #{bright_a_forward.9} parent=27 // pred_fallthru
        _
    $region28: #{bright_a_forward.9} parent=5 // pred_fallthru
      _
    %p670 = scmp.le.s32.totalorder 2, %s8
    // Predicated region
    $region33: #{bright_a_forward.9} parent=5 // pred_check
      %p671 = pneg %p670
    $region34: #{bright_a_forward.9} parent=5 // pred_check_branch
      %673 = sbr.rel (%p671) target = $region36
    $region35: #{bright_a_forward.9} parent=5 // pred_region
      %s674 = ssub.s32 %s8, 2
      // Predicated region
      $region37: #{bright_a_forward.9} parent=35 // pred_check
        %p675 = pneg %p84
      $region38: #{bright_a_forward.9} parent=35 // pred_check_branch
        %677 = sbr.rel (%p675) target = $region40
      $region39: #{bright_a_forward.9} parent=35 // pred_region
        %s678 = smul.u32 32, %s14
        %p679 = scmp.lt.s32.totalorder %s678, 63
        %s680 = scalar_select %p679, %s678, 63
        %s681 = smul.addr %s680, 4
        %s682 = scalar_lea.vmem %s2, %s681
      $region40: #{bright_a_forward.9} parent=35 // pred_fallthru
        _
    $region36: #{bright_a_forward.9} parent=5 // pred_fallthru
      _
  $region6: #{bright_a_forward.9} parent=0 // loop_footer
    %s12 = sadd.s32 1, %s8
  $region7: #{bright_a_forward.9} parent=0 // loop_footer_branch
    %7 = sbr.rel target = $region3
  $region8: #{bright_a_forward.9} parent=0 // loop_exit
    _

// kernel: bright_a_forward.10
$region0: #{bright_a_forward.10}
  #allocation0 [shape = 'u32[]', space=smem, size = 0x4, offset = 0x4, fixed_abs, tag = 'smem constant byte address 0x4 - core index']
  #allocation1 [shape = 'u32[144,128]{1,0:T(1,128)}', space=vmem, size = 0x12000, scoped, tag = 'internal scratch']
  #allocation2 [shape = 'f32[256,128]{1,0:T(8,128)}', space=vmem, size = 0x20000, scoped, tag = 'scratch operand']
  %s0 = inlined_call_operand.vmem [shape: bf16[512,128], index: 0, kind: input, shape index: {}]
  %s1 = inlined_call_operand.vmem [shape: bf16[512,512], index: 1, kind: input, shape index: {}]
  %s2 = inlined_call_operand.vmem [shape: f32[1,128], index: 2, kind: input, shape index: {}]
  %s3 = inlined_call_operand.vmem [shape: bf16[128,128], index: 3, kind: input, shape index: {}]
  %s4 = inlined_call_operand.vmem [shape: bf16[512,128], index: 4, kind: output, shape index: {}]
  %s5 = sld [smem:[#allocation0]]
  $region95: #{bright_a_forward.10} parent=0
    _
  %s7 = ssub.s32 1, %s5
  %s8 = scalar_select 0, %s7, %s5
  $region1: #{bright_a_forward.10} parent=0
    #allocation3 [shape = 'u8[262144]{0}', space=vmem, size = 0x40000, scoped, tag = 'input window, operand 1']
    loop: start=0, step=1, limit=6
    $region2: #{bright_a_forward.10} parent=1 // loop_pre_header
      _
    $region3: #{bright_a_forward.10} parent=1 // loop_header
      %s10 = sphi 0, %s14
      %p11 = scmp.ge.s32.totalorder %s10, 6
      %s17 = sphi 0, %s29
      %s18 = sphi 0, %s25
      %s19 = sphi 0, %s17
      %s20 = sphi 0, %s18
      %s21 = sphi 0, %s19
      %s22 = sphi 0, %s20
      %s30 = sphi 0, %s30
      %s32 = sphi 0, %s30
      %s33 = sphi 0, %s32
      %s47 = sphi 0, %s33
      %s55 = sphi 0, %s57
      %s58 = sphi 0, %s55
      %s59 = sphi 0, %s58
      %s75 = sphi 0, %s59
      %s79 = sphi 0, %s79
      %s81 = sphi 0, %s79
      %s82 = sphi 0, %s81
      %s96 = sphi 0, %s82
      %s100 = sphi 0, %s100
      %s102 = sphi 0, %s100
      %s103 = sphi 0, %s102
      %s117 = sphi 0, %s103
      %s123 = sphi 0, %s125
      %s126 = sphi 0, %s123
      %s127 = sphi 0, %s126
      %s143 = sphi 0, %s127
    $region4: #{bright_a_forward.10} parent=1 // loop_header_branch
      %13 = sbr.rel (%p11) target = $region8
    $region5: #{bright_a_forward.10} parent=1 // loop_body
      %s15 = ssub.s32 %s10, 1
      %s16 = ssub.s32 %s10, 2
      %s23 = sadd.s32 1, %s18
      %p24 = scmp.ge.s32.totalorder %s23, 2
      %s25 = scalar_select %p24, 0, %s23
      %s26 = sadd.s32 1, %s17
      %s27 = scalar_select %p24, %s26, %s17
      %p28 = scmp.ge.s32.totalorder %s27, 2
      %s29 = scalar_select %p28, 0, %s27
      %s31 = sadd.s32 %s30, 1
      %p34 = scmp.eq.s32.totalorder %s10, 3
      %p35 = scmp.ne.s32.totalorder %s30, %s32
      %p36 = scmp.eq.s32.totalorder %s10, 0
      %p37 = por %p35, %p36
      %p38 = scmp.ne.s32.totalorder %s30, %s32
      %p39 = scmp.eq.s32.totalorder %s15, 3
      %p40 = por %p38, %p39
      %p41 = scmp.ne.s32.totalorder %s32, %s33
      %p42 = scmp.eq.s32.totalorder %s15, 0
      %p43 = por %p41, %p42
      %p44 = scmp.ne.s32.totalorder %s32, %s33
      %p45 = scmp.eq.s32.totalorder %s16, 3
      %p46 = por %p44, %p45
      %p48 = scmp.ne.s32.totalorder %s33, %s47
      %p49 = scmp.eq.s32.totalorder %s16, 0
      %p50 = por %p48, %p49
      %s51 = ssub.s32 %s17, %s29
      %s52 = ssub.s32 %s18, %s25
      %s53 = sor.u32 %s51, %s52
      %p54 = scmp.eq.s32.totalorder %s53, 0
      %s56 = sadd.s32 %s55, 1
      %s57 = scalar_select %p54, %s55, %s56
      %p60 = pneg %p54
      %p61 = scmp.eq.s32.totalorder %s10, 3
      %p62 = por %p60, %p61
      %p63 = scmp.ne.s32.totalorder %s55, %s58
      %p64 = scmp.eq.s32.totalorder %s10, 0
      %p65 = por %p63, %p64
      %p66 = scmp.ne.s32.totalorder %s55, %s58
      %p67 = scmp.eq.s32.totalorder %s15, 3
      %p68 = por %p66, %p67
      %p69 = scmp.ne.s32.totalorder %s58, %s59
      %p70 = scmp.eq.s32.totalorder %s15, 0
      %p71 = por %p69, %p70
      %p72 = scmp.ne.s32.totalorder %s58, %s59
      %p73 = scmp.eq.s32.totalorder %s16, 3
      %p74 = por %p72, %p73
      %p76 = scmp.ne.s32.totalorder %s59, %s75
      %p77 = scmp.eq.s32.totalorder %s16, 0
      %p78 = por %p76, %p77
      %s80 = sadd.s32 %s79, 1
      %p83 = scmp.eq.s32.totalorder %s10, 3
      %p84 = scmp.ne.s32.totalorder %s79, %s81
      %p85 = scmp.eq.s32.totalorder %s10, 0
      %p86 = por %p84, %p85
      %p87 = scmp.ne.s32.totalorder %s79, %s81
      %p88 = scmp.eq.s32.totalorder %s15, 3
      %p89 = por %p87, %p88
      %p90 = scmp.ne.s32.totalorder %s81, %s82
      %p91 = scmp.eq.s32.totalorder %s15, 0
      %p92 = por %p90, %p91
      %p93 = scmp.ne.s32.totalorder %s81, %s82
      %p94 = scmp.eq.s32.totalorder %s16, 3
      %p95 = por %p93, %p94
      %p97 = scmp.ne.s32.totalorder %s82, %s96
      %p98 = scmp.eq.s32.totalorder %s16, 0
      %p99 = por %p97, %p98
      %s101 = sadd.s32 %s100, 1
      %p104 = scmp.eq.s32.totalorder %s10, 3
      %p105 = scmp.ne.s32.totalorder %s100, %s102
      %p106 = scmp.eq.s32.totalorder %s10, 0
      %p107 = por %p105, %p106
      %p108 = scmp.ne.s32.totalorder %s100, %s102
      %p109 = scmp.eq.s32.totalorder %s15, 3
      %p110 = por %p108, %p109
      %p111 = scmp.ne.s32.totalorder %s102, %s103
      %p112 = scmp.eq.s32.totalorder %s15, 0
      %p113 = por %p111, %p112
      %p114 = scmp.ne.s32.totalorder %s102, %s103
      %p115 = scmp.eq.s32.totalorder %s16, 3
      %p116 = por %p114, %p115
      %p118 = scmp.ne.s32.totalorder %s103, %s117
      %p119 = scmp.eq.s32.totalorder %s16, 0
      %p120 = por %p118, %p119
      %s121 = ssub.s32 %s17, %s29
      %p122 = scmp.eq.s32.totalorder %s121, 0
      %s124 = sadd.s32 %s123, 1
      %s125 = scalar_select %p122, %s123, %s124
      %p128 = pneg %p122
      %p129 = scmp.eq.s32.totalorder %s10, 3
      %p130 = por %p128, %p129
      %p131 = scmp.ne.s32.totalorder %s123, %s126
      %p132 = scmp.eq.s32.totalorder %s10, 0
      %p133 = por %p131, %p132
      %p134 = scmp.ne.s32.totalorder %s123, %s126
      %p135 = scmp.eq.s32.totalorder %s15, 3
      %p136 = por %p134, %p135
      %p137 = scmp.ne.s32.totalorder %s126, %s127
      %p138 = scmp.eq.s32.totalorder %s15, 0
      %p139 = por %p137, %p138
      %p140 = scmp.ne.s32.totalorder %s126, %s127
      %p141 = scmp.eq.s32.totalorder %s16, 3
      %p142 = por %p140, %p141
      %p144 = scmp.ne.s32.totalorder %s127, %s143
      %p145 = scmp.eq.s32.totalorder %s16, 0
      %p146 = por %p144, %p145
      %p147 = scmp.le.s32.totalorder 1, %s10
      %p148 = scmp.lt.s32.totalorder %s10, 5
      %p149 = pnand %p147, %p148
      %p150 = pneg %p149
      // Predicated region
      $region9: #{bright_a_forward.10} parent=5 // pred_check
        _
      $region10: #{bright_a_forward.10} parent=5 // pred_check_branch
        %152 = sbr.rel (%p149) target = $region12
      $region11: #{bright_a_forward.10} parent=5 // pred_region
        %s153 = ssub.s32 %s10, 1
        // Predicated region
        $region13: #{bright_a_forward.10} parent=11 // pred_check
          %p154 = pneg %p43
        $region14: #{bright_a_forward.10} parent=11 // pred_check_branch
          %156 = sbr.rel (%p154) target = $region16
        $region15: #{bright_a_forward.10} parent=11 // pred_region
          _
        $region16: #{bright_a_forward.10} parent=11 // pred_fallthru
          _
        // Predicated region
        $region17: #{bright_a_forward.10} parent=11 // pred_check
          %p157 = pneg %p92
        $region18: #{bright_a_forward.10} parent=11 // pred_check_branch
          %159 = sbr.rel (%p157) target = $region20
        $region19: #{bright_a_forward.10} parent=11 // pred_region
          _
        $region20: #{bright_a_forward.10} parent=11 // pred_fallthru
          _
        // Predicated region
        $region21: #{bright_a_forward.10} parent=11 // pred_check
          %p160 = pneg %p113
        $region22: #{bright_a_forward.10} parent=11 // pred_check_branch
          %162 = sbr.rel (%p160) target = $region24
        $region23: #{bright_a_forward.10} parent=11 // pred_region
          _
        $region24: #{bright_a_forward.10} parent=11 // pred_fallthru
          _
      $region12: #{bright_a_forward.10} parent=5 // pred_fallthru
        _
      %p163 = scmp.lt.s32.totalorder %s10, 4
      // Predicated region
      $region25: #{bright_a_forward.10} parent=5 // pred_check
        %p164 = pneg %p163
      $region26: #{bright_a_forward.10} parent=5 // pred_check_branch
        %166 = sbr.rel (%p164) target = $region28
      $region27: #{bright_a_forward.10} parent=5 // pred_region
        // Predicated region
        $region29: #{bright_a_forward.10} parent=27 // pred_check
          %p167 = pneg %p65
        $region30: #{bright_a_forward.10} parent=27 // pred_check_branch
          %169 = sbr.rel (%p167) target = $region32
        $region31: #{bright_a_forward.10} parent=27 // pred_region
          %s170 = sand.u32 %s55, 1
          %s171 = sand.u32 %s55, 1
          %s172 = smul.addr %s171, 256
          %s173 = scalar_lea.vmem [#allocation3], %s172
          %s174 = smul.u32 32, %s17
          %s175 = smul.u32 2, %s18
          %s176 = smul.addr %s174, 4
          %s177 = sadd.s32 %s175, %s176
          %s178 = smul.addr %s177, 4
          %s179 = scalar_lea.vmem %s1, %s178
          // Predicated region
          $region33: #{bright_a_forward.10} parent=31 // pred_check
            _
          $region34: #{bright_a_forward.10} parent=31 // pred_check_branch
            %181 = sbr.rel (0) target = $region36
          $region35: #{bright_a_forward.10} parent=31 // pred_region
            // Predicated region
            $region37: #{bright_a_forward.10} parent=35 // pred_check
              _
            $region38: #{bright_a_forward.10} parent=35 // pred_check_branch
              %183 = sbr.rel (0) target = $region40
            $region39: #{bright_a_forward.10} parent=35 // pred_region
              // Predicated region
              $region52: #{bright_a_forward.10} parent=39 // pred_check
                _
              $region53: #{bright_a_forward.10} parent=39 // pred_check_branch
                %260 = sbr.rel (0) target = $region55
              $region54: #{bright_a_forward.10} parent=39 // pred_region
                loop: start=0, step=1, limit=1
                $region56: #{bright_a_forward.10} parent=54 // loop_pre_header
                  _
                $region57: #{bright_a_forward.10} parent=54 // loop_header
                  %s262 = sphi 0, %s266
                  %p263 = scmp.ge.s32.totalorder %s262, 1
                  %s267 = sphi %s179, %s179
                  %s268 = sphi %s173, %s173
                $region58: #{bright_a_forward.10} parent=54 // loop_header_branch
                  %265 = sbr.rel (%p263) target = $region62
                $region59: #{bright_a_forward.10} parent=54 // loop_body
                  %v269 = vld [vmem:[%s267] sm:$0xff]
                  %270 = vst [vmem:[%s268] sm:$0xff] %v269
                  %v271 = vld [vmem:[%s267 + $0x10] sm:$0xff]
                  %272 = vst [vmem:[%s268 + $0x8] sm:$0xff] %v271
                  %v273 = vld [vmem:[%s267 + $0x20] sm:$0xff]
                  %274 = vst [vmem:[%s268 + $0x10] sm:$0xff] %v273
                  %v275 = vld [vmem:[%s267 + $0x30] sm:$0xff]
                  %276 = vst [vmem:[%s268 + $0x18] sm:$0xff] %v275
                  %v277 = vld [vmem:[%s267 + $0x40] sm:$0xff]
                  %278 = vst [vmem:[%s268 + $0x20] sm:$0xff] %v277
                  %v279 = vld [vmem:[%s267 + $0x50] sm:$0xff]
                  %280 = vst [vmem:[%s268 + $0x28] sm:$0xff] %v279
                  %v281 = vld [vmem:[%s267 + $0x60] sm:$0xff]
                  %282 = vst [vmem:[%s268 + $0x30] sm:$0xff] %v281
                  %v283 = vld [vmem:[%s267 + $0x70] sm:$0xff]
                  %284 = vst [vmem:[%s268 + $0x38] sm:$0xff] %v283
                  %v285 = vld [vmem:[%s267 + $0x80] sm:$0xff]
                  %286 = vst [vmem:[%s268 + $0x40] sm:$0xff] %v285
                  %v287 = vld [vmem:[%s267 + $0x90] sm:$0xff]
                  %288 = vst [vmem:[%s268 + $0x48] sm:$0xff] %v287
                  %v289 = vld [vmem:[%s267 + $0xa0] sm:$0xff]
                  %290 = vst [vmem:[%s268 + $0x50] sm:$0xff] %v289
                  %v291 = vld [vmem:[%s267 + $0xb0] sm:$0xff]
                  %292 = vst [vmem:[%s268 + $0x58] sm:$0xff] %v291
                  %v293 = vld [vmem:[%s267 + $0xc0] sm:$0xff]
                  %294 = vst [vmem:[%s268 + $0x60] sm:$0xff] %v293
                  %v295 = vld [vmem:[%s267 + $0xd0] sm:$0xff]
                  %296 = vst [vmem:[%s268 + $0x68] sm:$0xff] %v295
                  %v297 = vld [vmem:[%s267 + $0xe0] sm:$0xff]
                  %298 = vst [vmem:[%s268 + $0x70] sm:$0xff] %v297
                  %v299 = vld [vmem:[%s267 + $0xf0] sm:$0xff]
                  %300 = vst [vmem:[%s268 + $0x78] sm:$0xff] %v299
                  %v301 = vld [vmem:[%s267 + $0x100] sm:$0xff]
                  %302 = vst [vmem:[%s268 + $0x80] sm:$0xff] %v301
                  %v303 = vld [vmem:[%s267 + $0x110] sm:$0xff]
                  %304 = vst [vmem:[%s268 + $0x88] sm:$0xff] %v303
                  %v305 = vld [vmem:[%s267 + $0x120] sm:$0xff]
                  %306 = vst [vmem:[%s268 + $0x90] sm:$0xff] %v305
                  %v307 = vld [vmem:[%s267 + $0x130] sm:$0xff]
                  %308 = vst [vmem:[%s268 + $0x98] sm:$0xff] %v307
                  %v309 = vld [vmem:[%s267 + $0x140] sm:$0xff]
                  %310 = vst [vmem:[%s268 + $0xa0] sm:$0xff] %v309
                  %v311 = vld [vmem:[%s267 + $0x150] sm:$0xff]
                  %312 = vst [vmem:[%s268 + $0xa8] sm:$0xff] %v311
                  %v313 = vld [vmem:[%s267 + $0x160] sm:$0xff]
                  %314 = vst [vmem:[%s268 + $0xb0] sm:$0xff] %v313
                  %v315 = vld [vmem:[%s267 + $0x170] sm:$0xff]
                  %316 = vst [vmem:[%s268 + $0xb8] sm:$0xff] %v315
                  %v317 = vld [vmem:[%s267 + $0x180] sm:$0xff]
                  %318 = vst [vmem:[%s268 + $0xc0] sm:$0xff] %v317
                  %v319 = vld [vmem:[%s267 + $0x190] sm:$0xff]
                  %320 = vst [vmem:[%s268 + $0xc8] sm:$0xff] %v319
                  %v321 = vld [vmem:[%s267 + $0x1a0] sm:$0xff]
                  %322 = vst [vmem:[%s268 + $0xd0] sm:$0xff] %v321
                  %v323 = vld [vmem:[%s267 + $0x1b0] sm:$0xff]
                  %324 = vst [vmem:[%s268 + $0xd8] sm:$0xff] %v323
                  %v325 = vld [vmem:[%s267 + $0x1c0] sm:$0xff]
                  %326 = vst [vmem:[%s268 + $0xe0] sm:$0xff] %v325
                  %v327 = vld [vmem:[%s267 + $0x1d0] sm:$0xff]
                  %328 = vst [vmem:[%s268 + $0xe8] sm:$0xff] %v327
                  %v329 = vld [vmem:[%s267 + $0x1e0] sm:$0xff]
                  %330 = vst [vmem:[%s268 + $0xf0] sm:$0xff] %v329
                  %v331 = vld [vmem:[%s267 + $0x1f0] sm:$0xff]
                  %332 = vst [vmem:[%s268 + $0xf8] sm:$0xff] %v331
                $region60: #{bright_a_forward.10} parent=54 // loop_footer
                  %s266 = sadd.s32 1, %s262
                $region61: #{bright_a_forward.10} parent=54 // loop_footer_branch
                  %261 = sbr.rel target = $region57
                $region62: #{bright_a_forward.10} parent=54 // loop_exit
                  _
              $region55: #{bright_a_forward.10} parent=39 // pred_fallthru
                _
              // Predicated region
              $region63: #{bright_a_forward.10} parent=39 // pred_check
                _
              $region64: #{bright_a_forward.10} parent=39 // pred_check_branch
                %334 = sbr.rel target = $region66
              $region65: #{bright_a_forward.10} parent=39 // pred_region
                _
              $region66: #{bright_a_forward.10} parent=39 // pred_fallthru
                _
            $region40: #{bright_a_forward.10} parent=35 // pred_fallthru
              _
            // Predicated region
            $region41: #{bright_a_forward.10} parent=35 // pred_check
              _
            $region42: #{bright_a_forward.10} parent=35 // pred_check_branch
              %185 = sbr.rel target = $region44
            $region43: #{bright_a_forward.10} parent=35 // pred_region
              loop: start=0, step=1, limit=1
              $region45: #{bright_a_forward.10} parent=43 // loop_pre_header
                _
              $region46: #{bright_a_forward.10} parent=43 // loop_header
                %s188 = sphi 0, %s192
                %p189 = scmp.ge.s32.totalorder %s188, 1
                %s193 = sphi %s179, %s179
                %s194 = sphi %s173, %s173
              $region47: #{bright_a_forward.10} parent=43 // loop_header_branch
                %191 = sbr.rel (%p189) target = $region51
              $region48: #{bright_a_forward.10} parent=43 // loop_body
                %v195 = vld [vmem:[%s193] sm:$0xff]
                %196 = vst [vmem:[%s194] sm:$0xff] %v195
                %v197 = vld [vmem:[%s193 + $0x10] sm:$0xff]
                %198 = vst [vmem:[%s194 + $0x8] sm:$0xff] %v197
                %v199 = vld [vmem:[%s193 + $0x20] sm:$0xff]
                %200 = vst [vmem:[%s194 + $0x10] sm:$0xff] %v199
                %v201 = vld [vmem:[%s193 + $0x30] sm:$0xff]
                %202 = vst [vmem:[%s194 + $0x18] sm:$0xff] %v201
                %v203 = vld [vmem:[%s193 + $0x40] sm:$0xff]
                %204 = vst [vmem:[%s194 + $0x20] sm:$0xff] %v203
                %v205 = vld [vmem:[%s193 + $0x50] sm:$0xff]
                %206 = vst [vmem:[%s194 + $0x28] sm:$0xff] %v205
                %v207 = vld [vmem:[%s193 + $0x60] sm:$0xff]
                %208 = vst [vmem:[%s194 + $0x30] sm:$0xff] %v207
                %v209 = vld [vmem:[%s193 + $0x70] sm:$0xff]
                %210 = vst [vmem:[%s194 + $0x38] sm:$0xff] %v209
                %v211 = vld [vmem:[%s193 + $0x80] sm:$0xff]
                %212 = vst [vmem:[%s194 + $0x40] sm:$0xff] %v211
                %v213 = vld [vmem:[%s193 + $0x90] sm:$0xff]
                %214 = vst [vmem:[%s194 + $0x48] sm:$0xff] %v213
                %v215 = vld [vmem:[%s193 + $0xa0] sm:$0xff]
                %216 = vst [vmem:[%s194 + $0x50] sm:$0xff] %v215
                %v217 = vld [vmem:[%s193 + $0xb0] sm:$0xff]
                %218 = vst [vmem:[%s194 + $0x58] sm:$0xff] %v217
                %v219 = vld [vmem:[%s193 + $0xc0] sm:$0xff]
                %220 = vst [vmem:[%s194 + $0x60] sm:$0xff] %v219
                %v221 = vld [vmem:[%s193 + $0xd0] sm:$0xff]
                %222 = vst [vmem:[%s194 + $0x68] sm:$0xff] %v221
                %v223 = vld [vmem:[%s193 + $0xe0] sm:$0xff]
                %224 = vst [vmem:[%s194 + $0x70] sm:$0xff] %v223
                %v225 = vld [vmem:[%s193 + $0xf0] sm:$0xff]
                %226 = vst [vmem:[%s194 + $0x78] sm:$0xff] %v225
                %v227 = vld [vmem:[%s193 + $0x100] sm:$0xff]
                %228 = vst [vmem:[%s194 + $0x80] sm:$0xff] %v227
                %v229 = vld [vmem:[%s193 + $0x110] sm:$0xff]
                %230 = vst [vmem:[%s194 + $0x88] sm:$0xff] %v229
                %v231 = vld [vmem:[%s193 + $0x120] sm:$0xff]
                %232 = vst [vmem:[%s194 + $0x90] sm:$0xff] %v231
                %v233 = vld [vmem:[%s193 + $0x130] sm:$0xff]
                %234 = vst [vmem:[%s194 + $0x98] sm:$0xff] %v233
                %v235 = vld [vmem:[%s193 + $0x140] sm:$0xff]
                %236 = vst [vmem:[%s194 + $0xa0] sm:$0xff] %v235
                %v237 = vld [vmem:[%s193 + $0x150] sm:$0xff]
                %238 = vst [vmem:[%s194 + $0xa8] sm:$0xff] %v237
                %v239 = vld [vmem:[%s193 + $0x160] sm:$0xff]
                %240 = vst [vmem:[%s194 + $0xb0] sm:$0xff] %v239
                %v241 = vld [vmem:[%s193 + $0x170] sm:$0xff]
                %242 = vst [vmem:[%s194 + $0xb8] sm:$0xff] %v241
                %v243 = vld [vmem:[%s193 + $0x180] sm:$0xff]
                %244 = vst [vmem:[%s194 + $0xc0] sm:$0xff] %v243
                %v245 = vld [vmem:[%s193 + $0x190] sm:$0xff]
                %246 = vst [vmem:[%s194 + $0xc8] sm:$0xff] %v245
                %v247 = vld [vmem:[%s193 + $0x1a0] sm:$0xff]
                %248 = vst [vmem:[%s194 + $0xd0] sm:$0xff] %v247
                %v249 = vld [vmem:[%s193 + $0x1b0] sm:$0xff]
                %250 = vst [vmem:[%s194 + $0xd8] sm:$0xff] %v249
                %v251 = vld [vmem:[%s193 + $0x1c0] sm:$0xff]
                %252 = vst [vmem:[%s194 + $0xe0] sm:$0xff] %v251
                %v253 = vld [vmem:[%s193 + $0x1d0] sm:$0xff]
                %254 = vst [vmem:[%s194 + $0xe8] sm:$0xff] %v253
                %v255 = vld [vmem:[%s193 + $0x1e0] sm:$0xff]
                %256 = vst [vmem:[%s194 + $0xf0] sm:$0xff] %v255
                %v257 = vld [vmem:[%s193 + $0x1f0] sm:$0xff]
                %258 = vst [vmem:[%s194 + $0xf8] sm:$0xff] %v257
              $region49: #{bright_a_forward.10} parent=43 // loop_footer
                %s192 = sadd.s32 1, %s188
              $region50: #{bright_a_forward.10} parent=43 // loop_footer_branch
                %187 = sbr.rel target = $region46
              $region51: #{bright_a_forward.10} parent=43 // loop_exit
                _
            $region44: #{bright_a_forward.10} parent=35 // pred_fallthru
              _
          $region36: #{bright_a_forward.10} parent=31 // pred_fallthru
            _
          %335 = vnop
        $region32: #{bright_a_forward.10} parent=27 // pred_fallthru
          _
      $region28: #{bright_a_forward.10} parent=5 // pred_fallthru
        _
      %p336 = scmp.le.s32.totalorder 1, %s10
      %p337 = scmp.lt.s32.totalorder %s10, 5
      %p338 = pnand %p336, %p337
      %p339 = pneg %p338
      // Predicated region
      $region67: #{bright_a_forward.10} parent=5 // pred_check
        _
      $region68: #{bright_a_forward.10} parent=5 // pred_check_branch
        %341 = sbr.rel (%p338) target = $region70
      $region69: #{bright_a_forward.10} parent=5 // pred_region
        %s342 = ssub.s32 %s10, 1
        %s343 = sand.u32 %s58, 1
        %s344 = sand.u32 %s58, 1
        %s345 = smul.addr %s344, 256
        %s346 = scalar_lea.vmem [#allocation3], %s345
        // Predicated region
        $region71: #{bright_a_forward.10} parent=69 // pred_check
          %p347 = pneg %p71
        $region72: #{bright_a_forward.10} parent=69 // pred_check_branch
          %349 = sbr.rel (%p347) target = $region74
        $region73: #{bright_a_forward.10} parent=69 // pred_region
          _
        $region74: #{bright_a_forward.10} parent=69 // pred_fallthru
          _
        %p350 = pneg %p43
        %p351 = pneg %p40
        %s352 = sand.u32 %s58, 1
        %s353 = sand.u32 %s58, 1
        %s354 = smul.addr %s353, 256
        %s355 = scalar_lea.vmem [#allocation3], %s354
        %p356 = pneg %p71
        %p357 = pneg %p68
        %p358 = pneg %p92
        %p359 = pneg %p89
        %p360 = pneg %p113
        %p361 = pneg %p110
        %p362 = pneg %p139
        %p363 = pneg %p136
        %s364 = smul.u32 32, %s19
        %p365 = scmp.lt.s32.totalorder %s364, 63
        %s366 = scalar_select %p365, %s364, 63
        %s367 = smul.addr %s366, 4
        %s368 = scalar_lea.vmem %s4, %s367
        %s369 = smul.u32 32, %s19
        %s370 = smul.u32 2, %s20
        %s371 = smul.u32 32, %s19
        %p372 = scmp.lt.s32.totalorder %s371, 63
        %s373 = scalar_select %p372, %s371, 63
        %s374 = smul.addr %s373, 4
        %s375 = scalar_lea.vmem %s4, %s374
        %s376 = smul.u32 32, %s19
        %p378 = scmp.eq.s32.totalorder %s20, 0
        // Predicated region
        $region75: #{bright_a_forward.10} parent=69 // pred_check
          %p379 = pneg %p378
        $region76: #{bright_a_forward.10} parent=69 // pred_check_branch
          %381 = sbr.rel (%p379) target = $region78
        $region77: #{bright_a_forward.10} parent=69 // pred_region
          %382 = vst [vmem:[#allocation2] sm:$0xff] 0.0
          %383 = vst [vmem:[#allocation2 + $0x8] sm:$0xff] 0.0
          %384 = vst [vmem:[#allocation2 + $0x10] sm:$0xff] 0.0
          %385 = vst [vmem:[#allocation2 + $0x18] sm:$0xff] 0.0
          %386 = vst [vmem:[#allocation2 + $0x20] sm:$0xff] 0.0
          %387 = vst [vmem:[#allocation2 + $0x28] sm:$0xff] 0.0
          %388 = vst [vmem:[#allocation2 + $0x30] sm:$0xff] 0.0
          %389 = vst [vmem:[#allocation2 + $0x38] sm:$0xff] 0.0
          %390 = vst [vmem:[#allocation2 + $0x40] sm:$0xff] 0.0
          %391 = vst [vmem:[#allocation2 + $0x48] sm:$0xff] 0.0
          %392 = vst [vmem:[#allocation2 + $0x50] sm:$0xff] 0.0
          %393 = vst [vmem:[#allocation2 + $0x58] sm:$0xff] 0.0
          %394 = vst [vmem:[#allocation2 + $0x60] sm:$0xff] 0.0
          %395 = vst [vmem:[#allocation2 + $0x68] sm:$0xff] 0.0
          %396 = vst [vmem:[#allocation2 + $0x70] sm:$0xff] 0.0
          %397 = vst [vmem:[#allocation2 + $0x78] sm:$0xff] 0.0
          %398 = vst [vmem:[#allocation2 + $0x80] sm:$0xff] 0.0
          %399 = vst [vmem:[#allocation2 + $0x88] sm:$0xff] 0.0
          %400 = vst [vmem:[#allocation2 + $0x90] sm:$0xff] 0.0
          %401 = vst [vmem:[#allocation2 + $0x98] sm:$0xff] 0.0
          %402 = vst [vmem:[#allocation2 + $0xa0] sm:$0xff] 0.0
          %403 = vst [vmem:[#allocation2 + $0xa8] sm:$0xff] 0.0
          %404 = vst [vmem:[#allocation2 + $0xb0] sm:$0xff] 0.0
          %405 = vst [vmem:[#allocation2 + $0xb8] sm:$0xff] 0.0
          %406 = vst [vmem:[#allocation2 + $0xc0] sm:$0xff] 0.0
          %407 = vst [vmem:[#allocation2 + $0xc8] sm:$0xff] 0.0
          %408 = vst [vmem:[#allocation2 + $0xd0] sm:$0xff] 0.0
          %409 = vst [vmem:[#allocation2 + $0xd8] sm:$0xff] 0.0
          %410 = vst [vmem:[#allocation2 + $0xe0] sm:$0xff] 0.0
          %411 = vst [vmem:[#allocation2 + $0xe8] sm:$0xff] 0.0
          %412 = vst [vmem:[#allocation2 + $0xf0] sm:$0xff] 0.0
          %413 = vst [vmem:[#allocation2 + $0xf8] sm:$0xff] 0.0
        $region78: #{bright_a_forward.10} parent=69 // pred_fallthru
          _
        %s414 = smul.u32 %s20, 256
        %v415 = vld [vmem:[#allocation2] sm:$0xff]
        %v416 = vld [vmem:[#allocation2 + $0x8] sm:$0xff]
        %v417 = vld [vmem:[#allocation2 + $0x10] sm:$0xff]
        %v418 = vld [vmem:[#allocation2 + $0x18] sm:$0xff]
        %v419 = vld [vmem:[#allocation2 + $0x20] sm:$0xff]
        %v420 = vld [vmem:[#allocation2 + $0x28] sm:$0xff]
        %v421 = vld [vmem:[#allocation2 + $0x30] sm:$0xff]
        %v422 = vld [vmem:[#allocation2 + $0x38] sm:$0xff]
        %v423 = vld [vmem:[#allocation2 + $0x40] sm:$0xff]
        %v424 = vld [vmem:[#allocation2 + $0x48] sm:$0xff]
        %v425 = vld [vmem:[#allocation2 + $0x50] sm:$0xff]
        %v426 = vld [vmem:[#allocation2 + $0x58] sm:$0xff]
        %v427 = vld [vmem:[#allocation2 + $0x60] sm:$0xff]
        %v428 = vld [vmem:[#allocation2 + $0x68] sm:$0xff]
        %v429 = vld [vmem:[#allocation2 + $0x70] sm:$0xff]
        %v430 = vld [vmem:[#allocation2 + $0x78] sm:$0xff]
        %v431 = vld [vmem:[#allocation2 + $0x80] sm:$0xff]
        %v432 = vld [vmem:[#allocation2 + $0x88] sm:$0xff]
        %v433 = vld [vmem:[#allocation2 + $0x90] sm:$0xff]
        %v434 = vld [vmem:[#allocation2 + $0x98] sm:$0xff]
        %v435 = vld [vmem:[#allocation2 + $0xa0] sm:$0xff]
        %v436 = vld [vmem:[#allocation2 + $0xa8] sm:$0xff]
        %v437 = vld [vmem:[#allocation2 + $0xb0] sm:$0xff]
        %v438 = vld [vmem:[#allocation2 + $0xb8] sm:$0xff]
        %v439 = vld [vmem:[#allocation2 + $0xc0] sm:$0xff]
        %v440 = vld [vmem:[#allocation2 + $0xc8] sm:$0xff]
        %v441 = vld [vmem:[#allocation2 + $0xd0] sm:$0xff]
        %v442 = vld [vmem:[#allocation2 + $0xd8] sm:$0xff]
        %v443 = vld [vmem:[#allocation2 + $0xe0] sm:$0xff]
        %v444 = vld [vmem:[#allocation2 + $0xe8] sm:$0xff]
        %v445 = vld [vmem:[#allocation2 + $0xf0] sm:$0xff]
        %v446 = vld [vmem:[#allocation2 + $0xf8] sm:$0xff]
        %v447 = vld [vmem:[%s346] sm:$0xff]
        %v448 = vld [vmem:[%s346 + $0x8] sm:$0xff]
        %v449 = vld [vmem:[%s346 + $0x10] sm:$0xff]
        %v450 = vld [vmem:[%s346 + $0x18] sm:$0xff]
        %v451 = vld [vmem:[%s346 + $0x20] sm:$0xff]
        %v452 = vld [vmem:[%s346 + $0x28] sm:$0xff]
        %v453 = vld [vmem:[%s346 + $0x30] sm:$0xff]
        %v454 = vld [vmem:[%s346 + $0x38] sm:$0xff]
        %v455 = vld [vmem:[%s346 + $0x40] sm:$0xff]
        %v456 = vld [vmem:[%s346 + $0x48] sm:$0xff]
        %v457 = vld [vmem:[%s346 + $0x50] sm:$0xff]
        %v458 = vld [vmem:[%s346 + $0x58] sm:$0xff]
        %v459 = vld [vmem:[%s346 + $0x60] sm:$0xff]
        %v460 = vld [vmem:[%s346 + $0x68] sm:$0xff]
        %v461 = vld [vmem:[%s346 + $0x70] sm:$0xff]
        %v462 = vld [vmem:[%s346 + $0x78] sm:$0xff]
        %v463 = vld [vmem:[%s346 + $0x80] sm:$0xff]
        %v464 = vld [vmem:[%s346 + $0x88] sm:$0xff]
        %v465 = vld [vmem:[%s346 + $0x90] sm:$0xff]
        %v466 = vld [vmem:[%s346 + $0x98] sm:$0xff]
        %v467 = vld [vmem:[%s346 + $0xa0] sm:$0xff]
        %v468 = vld [vmem:[%s346 + $0xa8] sm:$0xff]
        %v469 = vld [vmem:[%s346 + $0xb0] sm:$0xff]
        %v470 = vld [vmem:[%s346 + $0xb8] sm:$0xff]
        %v471 = vld [vmem:[%s346 + $0xc0] sm:$0xff]
        %v472 = vld [vmem:[%s346 + $0xc8] sm:$0xff]
        %v473 = vld [vmem:[%s346 + $0xd0] sm:$0xff]
        %v474 = vld [vmem:[%s346 + $0xd8] sm:$0xff]
        %v475 = vld [vmem:[%s346 + $0xe0] sm:$0xff]
        %v476 = vld [vmem:[%s346 + $0xe8] sm:$0xff]
        %v477 = vld [vmem:[%s346 + $0xf0] sm:$0xff]
        %v478 = vld [vmem:[%s346 + $0xf8] sm:$0xff]
        %s479 = sshra.s32 %s414, 3
        %s480 = sand.u32 %s414, 7
        %s481 = smul.addr %s479, 4
        %s482 = scalar_lea.vmem %s0, %s481
        %v483 = vld [vmem:[%s482] sm:$0xf]
        %v484 = vld [vmem:[%s482 + $0x4] sm:$0xf]
        %v485 = vld [vmem:[%s482 + $0x8] sm:$0xf]
        %v486 = vld [vmem:[%s482 + $0xc] sm:$0xf]
        %v487 = vld [vmem:[%s482 + $0x10] sm:$0xf]
        %v488 = vld [vmem:[%s482 + $0x14] sm:$0xf]
        %v489 = vld [vmem:[%s482 + $0x18] sm:$0xf]
        %v490 = vld [vmem:[%s482 + $0x1c] sm:$0xf]
        %v491 = vld [vmem:[%s482 + $0x20] sm:$0xf]
        %v492 = vld [vmem:[%s482 + $0x24] sm:$0xf]
        %v493 = vld [vmem:[%s482 + $0x28] sm:$0xf]
        %v494 = vld [vmem:[%s482 + $0x2c] sm:$0xf]
        %v495 = vld [vmem:[%s482 + $0x30] sm:$0xf]
        %v496 = vld [vmem:[%s482 + $0x34] sm:$0xf]
        %v497 = vld [vmem:[%s482 + $0x38] sm:$0xf]
        %v498 = vld [vmem:[%s482 + $0x3c] sm:$0xf]
        %v499 = vld [vmem:[%s482 + $0x40] sm:$0xf]
        %v500 = vld [vmem:[%s482 + $0x44] sm:$0xf]
        %v501 = vld [vmem:[%s482 + $0x48] sm:$0xf]
        %v502 = vld [vmem:[%s482 + $0x4c] sm:$0xf]
        %v503 = vld [vmem:[%s482 + $0x50] sm:$0xf]
        %v504 = vld [vmem:[%s482 + $0x54] sm:$0xf]
        %v505 = vld [vmem:[%s482 + $0x58] sm:$0xf]
        %v506 = vld [vmem:[%s482 + $0x5c] sm:$0xf]
        %v507 = vld [vmem:[%s482 + $0x60] sm:$0xf]
        %v508 = vld [vmem:[%s482 + $0x64] sm:$0xf]
        %v509 = vld [vmem:[%s482 + $0x68] sm:$0xf]
        %v510 = vld [vmem:[%s482 + $0x6c] sm:$0xf]
        %v511 = vld [vmem:[%s482 + $0x70] sm:$0xf]
        %v512 = vld [vmem:[%s482 + $0x74] sm:$0xf]
        %v513 = vld [vmem:[%s482 + $0x78] sm:$0xf]
        %v514 = vld [vmem:[%s482 + $0x7c] sm:$0xf]
        %v547 = vunpack.c.l.b16 %v447
        %v548 = vunpack.c.h.b16 %v447
        %v549 = vunpack.c.l.b16 %v448
        %v550 = vunpack.c.h.b16 %v448
        %v551 = vunpack.c.l.b16 %v449
        %v552 = vunpack.c.h.b16 %v449
        %v553 = vunpack.c.l.b16 %v450
        %v554 = vunpack.c.h.b16 %v450
        %v555 = vunpack.c.l.b16 %v451
        %v556 = vunpack.c.h.b16 %v451
        %v557 = vunpack.c.l.b16 %v452
        %v558 = vunpack.c.h.b16 %v452
        %v559 = vunpack.c.l.b16 %v453
        %v560 = vunpack.c.h.b16 %v453
        %v561 = vunpack.c.l.b16 %v454
        %v562 = vunpack.c.h.b16 %v454
        %v563 = vunpack.c.l.b16 %v455
        %v564 = vunpack.c.h.b16 %v455
        %v565 = vunpack.c.l.b16 %v456
        %v566 = vunpack.c.h.b16 %v456
        %v567 = vunpack.c.l.b16 %v457
        %v568 = vunpack.c.h.b16 %v457
        %v569 = vunpack.c.l.b16 %v458
        %v570 = vunpack.c.h.b16 %v458
        %v571 = vunpack.c.l.b16 %v459
        %v572 = vunpack.c.h.b16 %v459
        %v573 = vunpack.c.l.b16 %v460
        %v574 = vunpack.c.h.b16 %v460
        %v575 = vunpack.c.l.b16 %v461
        %v576 = vunpack.c.h.b16 %v461
        %v577 = vunpack.c.l.b16 %v462
        %v578 = vunpack.c.h.b16 %v462
        %v579 = vunpack.c.l.b16 %v463
        %v580 = vunpack.c.h.b16 %v463
        %v581 = vunpack.c.l.b16 %v464
        %v582 = vunpack.c.h.b16 %v464
        %v583 = vunpack.c.l.b16 %v465
        %v584 = vunpack.c.h.b16 %v465
        %v585 = vunpack.c.l.b16 %v466
        %v586 = vunpack.c.h.b16 %v466
        %v587 = vunpack.c.l.b16 %v467
        %v588 = vunpack.c.h.b16 %v467
        %v589 = vunpack.c.l.b16 %v468
        %v590 = vunpack.c.h.b16 %v468
        %v591 = vunpack.c.l.b16 %v469
        %v592 = vunpack.c.h.b16 %v469
        %v593 = vunpack.c.l.b16 %v470
        %v594 = vunpack.c.h.b16 %v470
        %v595 = vunpack.c.l.b16 %v471
        %v596 = vunpack.c.h.b16 %v471
        %v597 = vunpack.c.l.b16 %v472
        %v598 = vunpack.c.h.b16 %v472
        %v599 = vunpack.c.l.b16 %v473
        %v600 = vunpack.c.h.b16 %v473
        %v601 = vunpack.c.l.b16 %v474
        %v602 = vunpack.c.h.b16 %v474
        %v603 = vunpack.c.l.b16 %v475
        %v604 = vunpack.c.h.b16 %v475
        %v605 = vunpack.c.l.b16 %v476
        %v606 = vunpack.c.h.b16 %v476
        %v607 = vunpack.c.l.b16 %v477
        %v608 = vunpack.c.h.b16 %v477
        %v609 = vunpack.c.l.b16 %v478
        %v610 = vunpack.c.h.b16 %v478
        %v611 = vpack.c.b16 %v549, %v547
        %v612 = vpack.c.b16 %v550, %v548
        %v613 = vpack.c.b16 %v553, %v551
        %v614 = vpack.c.b16 %v554, %v552
        %v615 = vpack.c.b16 %v557, %v555
        %v616 = vpack.c.b16 %v558, %v556
        %v617 = vpack.c.b16 %v561, %v559
        %v618 = vpack.c.b16 %v562, %v560
        %v619 = vpack.c.b16 %v565, %v563
        %v620 = vpack.c.b16 %v566, %v564
        %v621 = vpack.c.b16 %v569, %v567
        %v622 = vpack.c.b16 %v570, %v568
        %v623 = vpack.c.b16 %v573, %v571
        %v624 = vpack.c.b16 %v574, %v572
        %v625 = vpack.c.b16 %v577, %v575
        %v626 = vpack.c.b16 %v578, %v576
        %v627 = vpack.c.b16 %v581, %v579
        %v628 = vpack.c.b16 %v582, %v580
        %v629 = vpack.c.b16 %v585, %v583
        %v630 = vpack.c.b16 %v586, %v584
        %v631 = vpack.c.b16 %v589, %v587
        %v632 = vpack.c.b16 %v590, %v588
        %v633 = vpack.c.b16 %v593, %v591
        %v634 = vpack.c.b16 %v594, %v592
        %v635 = vpack.c.b16 %v597, %v595
        %v636 = vpack.c.b16 %v598, %v596
        %v637 = vpack.c.b16 %v601, %v599
        %v638 = vpack.c.b16 %v602, %v600
        %v639 = vpack.c.b16 %v605, %v603
        %v640 = vpack.c.b16 %v606, %v604
        %v641 = vpack.c.b16 %v609, %v607
        %v642 = vpack.c.b16 %v610, %v608
        %v707 = vunpack.c.l.b16 %v483
        %v708 = vunpack.c.l.b16 %v484
        %v709 = vunpack.c.l.b16 %v485
        %v710 = vunpack.c.l.b16 %v486
        %v711 = vunpack.c.l.b16 %v487
        %v712 = vunpack.c.l.b16 %v488
        %v713 = vunpack.c.l.b16 %v489
        %v714 = vunpack.c.l.b16 %v490
        %v715 = vunpack.c.l.b16 %v491
        %v716 = vunpack.c.l.b16 %v492
        %v717 = vunpack.c.l.b16 %v493
        %v718 = vunpack.c.l.b16 %v494
        %v719 = vunpack.c.l.b16 %v495
        %v720 = vunpack.c.l.b16 %v496
        %v721 = vunpack.c.l.b16 %v497
        %v722 = vunpack.c.l.b16 %v498
        %v723 = vunpack.c.l.b16 %v499
        %v724 = vunpack.c.l.b16 %v500
        %v725 = vunpack.c.l.b16 %v501
        %v726 = vunpack.c.l.b16 %v502
        %v727 = vunpack.c.l.b16 %v503
        %v728 = vunpack.c.l.b16 %v504
        %v729 = vunpack.c.l.b16 %v505
        %v730 = vunpack.c.l.b16 %v506
        %v731 = vunpack.c.l.b16 %v507
        %v732 = vunpack.c.l.b16 %v508
        %v733 = vunpack.c.l.b16 %v509
        %v734 = vunpack.c.l.b16 %v510
        %v735 = vunpack.c.l.b16 %v511
        %v736 = vunpack.c.l.b16 %v512
        %v737 = vunpack.c.l.b16 %v513
        %v738 = vunpack.c.l.b16 %v514
        %v739 = vpack.c.b16 %v708, %v707
        %v740 = vpack.c.b16 %v710, %v709
        %v741 = vpack.c.b16 %v712, %v711
        %v742 = vpack.c.b16 %v714, %v713
        %v743 = vpack.c.b16 %v716, %v715
        %v744 = vpack.c.b16 %v718, %v717
        %v745 = vpack.c.b16 %v720, %v719
        %v746 = vpack.c.b16 %v722, %v721
        %v747 = vpack.c.b16 %v724, %v723
        %v748 = vpack.c.b16 %v726, %v725
        %v749 = vpack.c.b16 %v728, %v727
        %v750 = vpack.c.b16 %v730, %v729
        %v751 = vpack.c.b16 %v732, %v731
        %v752 = vpack.c.b16 %v734, %v733
        %v753 = vpack.c.b16 %v736, %v735
        %v754 = vpack.c.b16 %v738, %v737
        %771 = vmatprep.subr.bf16.mxu0 0
        %772 = vmatpush1.bf16.msra.mxu0 %v739
        %773 = vmatprep.subr.bf16.mxu0 0
        %774 = vmatpush1.bf16.msra.mxu0 %v740
        %775 = vmatprep.subr.bf16.mxu0 0
        %776 = vmatpush1.bf16.msra.mxu0 %v741
        %777 = vmatprep.subr.bf16.mxu0 0
        %778 = vmatpush1.bf16.msra.mxu0 %v742
        %779 = vmatprep.subr.bf16.mxu0 0
        %780 = vmatpush1.bf16.msra.mxu0 %v743
        %781 = vmatprep.subr.bf16.mxu0 0
        %782 = vmatpush1.bf16.msra.mxu0 %v744
        %783 = vmatprep.subr.bf16.mxu0 0
        %784 = vmatpush1.bf16.msra.mxu0 %v745
        %785 = vmatprep.subr.bf16.mxu0 0
        %786 = vmatpush1.bf16.msra.mxu0 %v746
        %787 = vmatprep.subr.bf16.mxu0 0
        %788 = vmatpush1.bf16.msra.mxu0 %v747
        %789 = vmatprep.subr.bf16.mxu0 0
        %790 = vmatpush1.bf16.msra.mxu0 %v748
        %791 = vmatprep.subr.bf16.mxu0 0
        %792 = vmatpush1.bf16.msra.mxu0 %v749
        %793 = vmatprep.subr.bf16.mxu0 0
        %794 = vmatpush1.bf16.msra.mxu0 %v750
        %795 = vmatprep.subr.bf16.mxu0 0
        %796 = vmatpush1.bf16.msra.mxu0 %v751
        %797 = vmatprep.subr.bf16.mxu0 0
        %798 = vmatpush1.bf16.msra.mxu0 %v752
        %799 = vmatprep.subr.bf16.mxu0 0
        %800 = vmatpush1.bf16.msra.mxu0 %v753
        %801 = vmatprep.subr.bf16.mxu0 0
        %802 = vmatpush1.bf16.msra.mxu0 %v754
        %803 = vmatprep.mubr.bf16.mxu0 %v612
        %804 = vmatmul.mubr.bf16.gmra.mrb[0].mxu0 %v611
        %v805 = vpop.f32.mrb[0].mxu0
        %v806 = vadd.f32 0.0, %v805
        %v807 = vpop.f32.mrb[0].mxu0
        %v808 = vpop.f32.mrb[0].mxu0
        %v809 = vadd.f32 0.0, %v808
        %v810 = vpop.f32.mrb[0].mxu0
        %811 = vmatprep.mubr.bf16.mxu0 %v614
        %812 = vmatmul.mubr.bf16.gmra.mrb[0].mxu0 %v613
        %v813 = vpop.f32.mrb[0].mxu0
        %v814 = vadd.f32 0.0, %v813
        %v815 = vpop.f32.mrb[0].mxu0
        %v816 = vpop.f32.mrb[0].mxu0
        %v817 = vadd.f32 0.0, %v816
        %v818 = vpop.f32.mrb[0].mxu0
        %819 = vmatprep.mubr.bf16.mxu0 %v616
        %820 = vmatmul.mubr.bf16.gmra.mrb[0].mxu0 %v615
        %v821 = vpop.f32.mrb[0].mxu0
        %v822 = vadd.f32 0.0, %v821
        %v823 = vpop.f32.mrb[0].mxu0
        %v824 = vpop.f32.mrb[0].mxu0
        %v825 = vadd.f32 0.0, %v824
        %v826 = vpop.f32.mrb[0].mxu0
        %827 = vmatprep.mubr.bf16.mxu0 %v618
        %828 = vmatmul.mubr.bf16.gmra.mrb[0].mxu0 %v617
        %v829 = vpop.f32.mrb[0].mxu0
        %v830 = vadd.f32 0.0, %v829
        %v831 = vpop.f32.mrb[0].mxu0
        %v832 = vpop.f32.mrb[0].mxu0
        %v833 = vadd.f32 0.0, %v832
        %v834 = vpop.f32.mrb[0].mxu0
        %835 = vmatprep.mubr.bf16.mxu0 %v620
        %836 = vmatmul.mubr.bf16.gmra.mrb[0].mxu0 %v619
        %v837 = vpop.f32.mrb[0].mxu0
        %v838 = vadd.f32 0.0, %v837
        %v839 = vpop.f32.mrb[0].mxu0
        %v840 = vpop.f32.mrb[0].mxu0
        %v841 = vadd.f32 0.0, %v840
        %v842 = vpop.f32.mrb[0].mxu0
        %843 = vmatprep.mubr.bf16.mxu0 %v622
        %844 = vmatmul.mubr.bf16.gmra.mrb[0].mxu0 %v621
        %v845 = vpop.f32.mrb[0].mxu0
        %v846 = vadd.f32 0.0, %v845
        %v847 = vpop.f32.mrb[0].mxu0
        %v848 = vpop.f32.mrb[0].mxu0
        %v849 = vadd.f32 0.0, %v848
        %v850 = vpop.f32.mrb[0].mxu0
        %851 = vmatprep.mubr.bf16.mxu0 %v624
        %852 = vmatmul.mubr.bf16.gmra.mrb[0].mxu0 %v623
        %v853 = vpop.f32.mrb[0].mxu0
        %v854 = vadd.f32 0.0, %v853
        %v855 = vpop.f32.mrb[0].mxu0
        %v856 = vpop.f32.mrb[0].mxu0
        %v857 = vadd.f32 0.0, %v856
        %v858 = vpop.f32.mrb[0].mxu0
        %859 = vmatprep.mubr.bf16.mxu0 %v626
        %860 = vmatmul.mubr.bf16.gmra.mrb[0].mxu0 %v625
        %v861 = vpop.f32.mrb[0].mxu0
        %v862 = vadd.f32 0.0, %v861
        %v863 = vpop.f32.mrb[0].mxu0
        %v864 = vpop.f32.mrb[0].mxu0
        %v865 = vadd.f32 0.0, %v864
        %v866 = vpop.f32.mrb[0].mxu0
        %867 = vmatprep.mubr.bf16.mxu0 %v628
        %868 = vmatmul.mubr.bf16.gmra.mrb[0].mxu0 %v627
        %v869 = vpop.f32.mrb[0].mxu0
        %v870 = vadd.f32 0.0, %v869
        %v871 = vpop.f32.mrb[0].mxu0
        %v872 = vpop.f32.mrb[0].mxu0
        %v873 = vadd.f32 0.0, %v872
        %v874 = vpop.f32.mrb[0].mxu0
        %875 = vmatprep.mubr.bf16.mxu0 %v630
        %876 = vmatmul.mubr.bf16.gmra.mrb[0].mxu0 %v629
        %v877 = vpop.f32.mrb[0].mxu0
        %v878 = vadd.f32 0.0, %v877
        %v879 = vpop.f32.mrb[0].mxu0
        %v880 = vpop.f32.mrb[0].mxu0
        %v881 = vadd.f32 0.0, %v880
        %v882 = vpop.f32.mrb[0].mxu0
        %883 = vmatprep.mubr.bf16.mxu0 %v632
        %884 = vmatmul.mubr.bf16.gmra.mrb[0].mxu0 %v631
        %v885 = vpop.f32.mrb[0].mxu0
        %v886 = vadd.f32 0.0, %v885
        %v887 = vpop.f32.mrb[0].mxu0
        %v888 = vpop.f32.mrb[0].mxu0
        %v889 = vadd.f32 0.0, %v888
        %v890 = vpop.f32.mrb[0].mxu0
        %891 = vmatprep.mubr.bf16.mxu0 %v634
        %892 = vmatmul.mubr.bf16.gmra.mrb[0].mxu0 %v633
        %v893 = vpop.f32.mrb[0].mxu0
        %v894 = vadd.f32 0.0, %v893
        %v895 = vpop.f32.mrb[0].mxu0
        %v896 = vpop.f32.mrb[0].mxu0
        %v897 = vadd.f32 0.0, %v896
        %v898 = vpop.f32.mrb[0].mxu0
        %899 = vmatprep.mubr.bf16.mxu0 %v636
        %900 = vmatmul.mubr.bf16.gmra.mrb[0].mxu0 %v635
        %v901 = vpop.f32.mrb[0].mxu0
        %v902 = vadd.f32 0.0, %v901
        %v903 = vpop.f32.mrb[0].mxu0
        %v904 = vpop.f32.mrb[0].mxu0
        %v905 = vadd.f32 0.0, %v904
        %v906 = vpop.f32.mrb[0].mxu0
        %907 = vmatprep.mubr.bf16.mxu0 %v638
        %908 = vmatmul.mubr.bf16.gmra.mrb[0].mxu0 %v637
        %v909 = vpop.f32.mrb[0].mxu0
        %v910 = vadd.f32 0.0, %v909
        %v911 = vpop.f32.mrb[0].mxu0
        %v912 = vpop.f32.mrb[0].mxu0
        %v913 = vadd.f32 0.0, %v912
        %v914 = vpop.f32.mrb[0].mxu0
        %915 = vmatprep.mubr.bf16.mxu0 %v640
        %916 = vmatmul.mubr.bf16.gmra.mrb[0].mxu0 %v639
        %v917 = vpop.f32.mrb[0].mxu0
        %v918 = vadd.f32 0.0, %v917
        %v919 = vpop.f32.mrb[0].mxu0
        %v920 = vpop.f32.mrb[0].mxu0
        %v921 = vadd.f32 0.0, %v920
        %v922 = vpop.f32.mrb[0].mxu0
        %923 = vmatprep.mubr.bf16.mxu0 %v642
        %924 = vmatmul.mubr.bf16.gmra.mrb[0].mxu0 %v641
        %v925 = vpop.f32.mrb[0].mxu0
        %v926 = vadd.f32 0.0, %v925
        %v927 = vpop.f32.mrb[0].mxu0
        %v928 = vpop.f32.mrb[0].mxu0
        %v929 = vadd.f32 0.0, %v928
        %v930 = vpop.f32.mrb[0].mxu0
        %931 = vdwg.mxu0
        %v932 = vadd.f32 %v415, %v806
        %v933 = vadd.f32 %v416, %v809
        %v934 = vadd.f32 %v417, %v814
        %v935 = vadd.f32 %v418, %v817
        %v936 = vadd.f32 %v419, %v822
        %v937 = vadd.f32 %v420, %v825
        %v938 = vadd.f32 %v421, %v830
        %v939 = vadd.f32 %v422, %v833
        %v940 = vadd.f32 %v423, %v838
        %v941 = vadd.f32 %v424, %v841
        %v942 = vadd.f32 %v425, %v846
        %v943 = vadd.f32 %v426, %v849
        %v944 = vadd.f32 %v427, %v854
        %v945 = vadd.f32 %v428, %v857
        %v946 = vadd.f32 %v429, %v862
        %v947 = vadd.f32 %v430, %v865
        %v948 = vadd.f32 %v431, %v870
        %v949 = vadd.f32 %v432, %v873
        %v950 = vadd.f32 %v433, %v878
        %v951 = vadd.f32 %v434, %v881
        %v952 = vadd.f32 %v435, %v886
        %v953 = vadd.f32 %v436, %v889
        %v954 = vadd.f32 %v437, %v894
        %v955 = vadd.f32 %v438, %v897
        %v956 = vadd.f32 %v439, %v902
        %v957 = vadd.f32 %v440, %v905
        %v958 = vadd.f32 %v441, %v910
        %v959 = vadd.f32 %v442, %v913
        %v960 = vadd.f32 %v443, %v918
        %v961 = vadd.f32 %v444, %v921
        %v962 = vadd.f32 %v445, %v926
        %v963 = vadd.f32 %v446, %v929
        %964 = vst [vmem:[#allocation2] sm:$0xff] %v932
        %965 = vst [vmem:[#allocation2 + $0x8] sm:$0xff] %v933
        %966 = vst [vmem:[#allocation2 + $0x10] sm:$0xff] %v934
        %967 = vst [vmem:[#allocation2 + $0x18] sm:$0xff] %v935
        %968 = vst [vmem:[#allocation2 + $0x20] sm:$0xff] %v936
        %969 = vst [vmem:[#allocation2 + $0x28] sm:$0xff] %v937
        %970 = vst [vmem:[#allocation2 + $0x30] sm:$0xff] %v938
        %971 = vst [vmem:[#allocation2 + $0x38] sm:$0xff] %v939
        %972 = vst [vmem:[#allocation2 + $0x40] sm:$0xff] %v940
        %973 = vst [vmem:[#allocation2 + $0x48] sm:$0xff] %v941
        %974 = vst [vmem:[#allocation2 + $0x50] sm:$0xff] %v942
        %975 = vst [vmem:[#allocation2 + $0x58] sm:$0xff] %v943
        %976 = vst [vmem:[#allocation2 + $0x60] sm:$0xff] %v944
        %977 = vst [vmem:[#allocation2 + $0x68] sm:$0xff] %v945
        %978 = vst [vmem:[#allocation2 + $0x70] sm:$0xff] %v946
        %979 = vst [vmem:[#allocation2 + $0x78] sm:$0xff] %v947
        %980 = vst [vmem:[#allocation2 + $0x80] sm:$0xff] %v948
        %981 = vst [vmem:[#allocation2 + $0x88] sm:$0xff] %v949
        %982 = vst [vmem:[#allocation2 + $0x90] sm:$0xff] %v950
        %983 = vst [vmem:[#allocation2 + $0x98] sm:$0xff] %v951
        %984 = vst [vmem:[#allocation2 + $0xa0] sm:$0xff] %v952
        %985 = vst [vmem:[#allocation2 + $0xa8] sm:$0xff] %v953
        %986 = vst [vmem:[#allocation2 + $0xb0] sm:$0xff] %v954
        %987 = vst [vmem:[#allocation2 + $0xb8] sm:$0xff] %v955
        %988 = vst [vmem:[#allocation2 + $0xc0] sm:$0xff] %v956
        %989 = vst [vmem:[#allocation2 + $0xc8] sm:$0xff] %v957
        %990 = vst [vmem:[#allocation2 + $0xd0] sm:$0xff] %v958
        %991 = vst [vmem:[#allocation2 + $0xd8] sm:$0xff] %v959
        %992 = vst [vmem:[#allocation2 + $0xe0] sm:$0xff] %v960
        %993 = vst [vmem:[#allocation2 + $0xe8] sm:$0xff] %v961
        %994 = vst [vmem:[#allocation2 + $0xf0] sm:$0xff] %v962
        %995 = vst [vmem:[#allocation2 + $0xf8] sm:$0xff] %v963
        %p996 = scmp.eq.s32.totalorder %s20, 1
        // Predicated region
        $region79: #{bright_a_forward.10} parent=69 // pred_check
          %p997 = pneg %p996
        $region80: #{bright_a_forward.10} parent=69 // pred_check_branch
          %999 = sbr.rel (%p997) target = $region82
        $region81: #{bright_a_forward.10} parent=69 // pred_region
          %v1000 = vld [vmem:[#allocation2] sm:$0xff]
          %v1001 = vld [vmem:[#allocation2 + $0x8] sm:$0xff]
          %v1002 = vld [vmem:[#allocation2 + $0x10] sm:$0xff]
          %v1003 = vld [vmem:[#allocation2 + $0x18] sm:$0xff]
          %v1004 = vld [vmem:[#allocation2 + $0x20] sm:$0xff]
          %v1005 = vld [vmem:[#allocation2 + $0x28] sm:$0xff]
          %v1006 = vld [vmem:[#allocation2 + $0x30] sm:$0xff]
          %v1007 = vld [vmem:[#allocation2 + $0x38] sm:$0xff]
          %v1008 = vld [vmem:[#allocation2 + $0x40] sm:$0xff]
          %v1009 = vld [vmem:[#allocation2 + $0x48] sm:$0xff]
          %v1010 = vld [vmem:[#allocation2 + $0x50] sm:$0xff]
          %v1011 = vld [vmem:[#allocation2 + $0x58] sm:$0xff]
          %v1012 = vld [vmem:[#allocation2 + $0x60] sm:$0xff]
          %v1013 = vld [vmem:[#allocation2 + $0x68] sm:$0xff]
          %v1014 = vld [vmem:[#allocation2 + $0x70] sm:$0xff]
          %v1015 = vld [vmem:[#allocation2 + $0x78] sm:$0xff]
          %v1016 = vld [vmem:[#allocation2 + $0x80] sm:$0xff]
          %v1017 = vld [vmem:[#allocation2 + $0x88] sm:$0xff]
          %v1018 = vld [vmem:[#allocation2 + $0x90] sm:$0xff]
          %v1019 = vld [vmem:[#allocation2 + $0x98] sm:$0xff]
          %v1020 = vld [vmem:[#allocation2 + $0xa0] sm:$0xff]
          %v1021 = vld [vmem:[#allocation2 + $0xa8] sm:$0xff]
          %v1022 = vld [vmem:[#allocation2 + $0xb0] sm:$0xff]
          %v1023 = vld [vmem:[#allocation2 + $0xb8] sm:$0xff]
          %v1024 = vld [vmem:[#allocation2 + $0xc0] sm:$0xff]
          %v1025 = vld [vmem:[#allocation2 + $0xc8] sm:$0xff]
          %v1026 = vld [vmem:[#allocation2 + $0xd0] sm:$0xff]
          %v1027 = vld [vmem:[#allocation2 + $0xd8] sm:$0xff]
          %v1028 = vld [vmem:[#allocation2 + $0xe0] sm:$0xff]
          %v1029 = vld [vmem:[#allocation2 + $0xe8] sm:$0xff]
          %v1030 = vld [vmem:[#allocation2 + $0xf0] sm:$0xff]
          %v1031 = vld [vmem:[#allocation2 + $0xf8] sm:$0xff]
          %v1032 = vld [vmem:[%s2] sm:$0x1]
          %v1034 = vlaneseq
          %v1035 = vshrl.u32 %v1034, 7
          %v1036 = vsub.s32 0, %v1035
          %v1037 = vrot.slane %v1032, %v1036
          %v1039 = vadd.f32 %v1000, %v1037
          %v1040 = vadd.f32 %v1001, %v1037
          %v1041 = vadd.f32 %v1002, %v1037
          %v1042 = vadd.f32 %v1003, %v1037
          %v1043 = vadd.f32 %v1004, %v1037
          %v1044 = vadd.f32 %v1005, %v1037
          %v1045 = vadd.f32 %v1006, %v1037
          %v1046 = vadd.f32 %v1007, %v1037
          %v1047 = vadd.f32 %v1008, %v1037
          %v1048 = vadd.f32 %v1009, %v1037
          %v1049 = vadd.f32 %v1010, %v1037
          %v1050 = vadd.f32 %v1011, %v1037
          %v1051 = vadd.f32 %v1012, %v1037
          %v1052 = vadd.f32 %v1013, %v1037
          %v1053 = vadd.f32 %v1014, %v1037
          %v1054 = vadd.f32 %v1015, %v1037
          %v1055 = vadd.f32 %v1016, %v1037
          %v1056 = vadd.f32 %v1017, %v1037
          %v1057 = vadd.f32 %v1018, %v1037
          %v1058 = vadd.f32 %v1019, %v1037
          %v1059 = vadd.f32 %v1020, %v1037
          %v1060 = vadd.f32 %v1021, %v1037
          %v1061 = vadd.f32 %v1022, %v1037
          %v1062 = vadd.f32 %v1023, %v1037
          %v1063 = vadd.f32 %v1024, %v1037
          %v1064 = vadd.f32 %v1025, %v1037
          %v1065 = vadd.f32 %v1026, %v1037
          %v1066 = vadd.f32 %v1027, %v1037
          %v1067 = vadd.f32 %v1028, %v1037
          %v1068 = vadd.f32 %v1029, %v1037
          %v1069 = vadd.f32 %v1030, %v1037
          %v1070 = vadd.f32 %v1031, %v1037
          %v1071 = vpack.c.bf16 %v1040, %v1039
          %v1072 = vpack.c.bf16 %v1042, %v1041
          %v1073 = vpack.c.bf16 %v1044, %v1043
          %v1074 = vpack.c.bf16 %v1046, %v1045
          %v1075 = vpack.c.bf16 %v1048, %v1047
          %v1076 = vpack.c.bf16 %v1050, %v1049
          %v1077 = vpack.c.bf16 %v1052, %v1051
          %v1078 = vpack.c.bf16 %v1054, %v1053
          %v1079 = vpack.c.bf16 %v1056, %v1055
          %v1080 = vpack.c.bf16 %v1058, %v1057
          %v1081 = vpack.c.bf16 %v1060, %v1059
          %v1082 = vpack.c.bf16 %v1062, %v1061
          %v1083 = vpack.c.bf16 %v1064, %v1063
          %v1084 = vpack.c.bf16 %v1066, %v1065
          %v1085 = vpack.c.bf16 %v1068, %v1067
          %v1086 = vpack.c.bf16 %v1070, %v1069
          %v1087 = vld [vmem:[%s3] sm:$0xf]
          %v1088 = vld [vmem:[%s3 + $0x4] sm:$0xf]
          %v1089 = vld [vmem:[%s3 + $0x8] sm:$0xf]
          %v1090 = vld [vmem:[%s3 + $0xc] sm:$0xf]
          %v1091 = vld [vmem:[%s3 + $0x10] sm:$0xf]
          %v1092 = vld [vmem:[%s3 + $0x14] sm:$0xf]
          %v1093 = vld [vmem:[%s3 + $0x18] sm:$0xf]
          %v1094 = vld [vmem:[%s3 + $0x1c] sm:$0xf]
          %v1095 = vld [vmem:[%s3 + $0x20] sm:$0xf]
          %v1096 = vld [vmem:[%s3 + $0x24] sm:$0xf]
          %v1097 = vld [vmem:[%s3 + $0x28] sm:$0xf]
          %v1098 = vld [vmem:[%s3 + $0x2c] sm:$0xf]
          %v1099 = vld [vmem:[%s3 + $0x30] sm:$0xf]
          %v1100 = vld [vmem:[%s3 + $0x34] sm:$0xf]
          %v1101 = vld [vmem:[%s3 + $0x38] sm:$0xf]
          %v1102 = vld [vmem:[%s3 + $0x3c] sm:$0xf]
          %v1119 = vunpack.c.l.b16 %v1087
          %v1120 = vunpack.c.l.b16 %v1088
          %v1121 = vunpack.c.l.b16 %v1089
          %v1122 = vunpack.c.l.b16 %v1090
          %v1123 = vunpack.c.l.b16 %v1091
          %v1124 = vunpack.c.l.b16 %v1092
          %v1125 = vunpack.c.l.b16 %v1093
          %v1126 = vunpack.c.l.b16 %v1094
          %v1127 = vunpack.c.l.b16 %v1095
          %v1128 = vunpack.c.l.b16 %v1096
          %v1129 = vunpack.c.l.b16 %v1097
          %v1130 = vunpack.c.l.b16 %v1098
          %v1131 = vunpack.c.l.b16 %v1099
          %v1132 = vunpack.c.l.b16 %v1100
          %v1133 = vunpack.c.l.b16 %v1101
          %v1134 = vunpack.c.l.b16 %v1102
          %v1135 = vpack.c.b16 %v1120, %v1119
          %v1136 = vpack.c.b16 %v1122, %v1121
          %v1137 = vpack.c.b16 %v1124, %v1123
          %v1138 = vpack.c.b16 %v1126, %v1125
          %v1139 = vpack.c.b16 %v1128, %v1127
          %v1140 = vpack.c.b16 %v1130, %v1129
          %v1141 = vpack.c.b16 %v1132, %v1131
          %v1142 = vpack.c.b16 %v1134, %v1133
          %1151 = vmatprep.subr.bf16.mxu0 0
          %1152 = vmatpush1.bf16.msra.mxu0 %v1135
          %1153 = vmatprep.subr.bf16.mxu0 0
          %1154 = vmatpush1.bf16.msra.mxu0 %v1136
          %1155 = vmatprep.subr.bf16.mxu0 0
          %1156 = vmatpush1.bf16.msra.mxu0 %v1137
          %1157 = vmatprep.subr.bf16.mxu0 0
          %1158 = vmatpush1.bf16.msra.mxu0 %v1138
          %1159 = vmatprep.subr.bf16.mxu0 0
          %1160 = vmatpush1.bf16.msra.mxu0 %v1139
          %1161 = vmatprep.subr.bf16.mxu0 0
          %1162 = vmatpush1.bf16.msra.mxu0 %v1140
          %1163 = vmatprep.subr.bf16.mxu0 0
          %1164 = vmatpush1.bf16.msra.mxu0 %v1141
          %1165 = vmatprep.subr.bf16.mxu0 0
          %1166 = vmatpush1.bf16.msra.mxu0 %v1142
          %1167 = vmatprep.subr.bf16.mxu0 0
          %1168 = vmatpush1.bf16.msra.mxu0 0
          %1169 = vmatprep.subr.bf16.mxu0 0
          %1170 = vmatpush1.bf16.msra.mxu0 0
          %1171 = vmatprep.subr.bf16.mxu0 0
          %1172 = vmatpush1.bf16.msra.mxu0 0
          %1173 = vmatprep.subr.bf16.mxu0 0
          %1174 = vmatpush1.bf16.msra.mxu0 0
          %1175 = vmatprep.subr.bf16.mxu0 0
          %1176 = vmatpush1.bf16.msra.mxu0 0
          %1177 = vmatprep.subr.bf16.mxu0 0
          %1178 = vmatpush1.bf16.msra.mxu0 0
          %1179 = vmatprep.subr.bf16.mxu0 0
          %1180 = vmatpush1.bf16.msra.mxu0 0
          %1181 = vmatprep.subr.bf16.mxu0 0
          %1182 = vmatpush1.bf16.msra.mxu0 0
          %1183 = vmatprep.mubr.bf16.mxu0 0
          %1184 = vmatmul.mubr.bf16.gmra.mrb[0].mxu0 %v1071
          %v1185 = vpop.f32.mrb[0].mxu0
          %v1186 = vadd.f32 0.0, %v1185
          %v1187 = vpop.f32.mrb[0].mxu0
          %v1188 = vpop.f32.mrb[0].mxu0
          %v1189 = vadd.f32 0.0, %v1188
          %v1190 = vpop.f32.mrb[0].mxu0
          %1191 = vmatprep.mubr.bf16.mxu0 0
          %1192 = vmatmul.mubr.bf16.gmra.mrb[0].mxu0 %v1072
          %v1193 = vpop.f32.mrb[0].mxu0
          %v1194 = vadd.f32 0.0, %v1193
          %v1195 = vpop.f32.mrb[0].mxu0
          %v1196 = vpop.f32.mrb[0].mxu0
          %v1197 = vadd.f32 0.0, %v1196
          %v1198 = vpop.f32.mrb[0].mxu0
          %1199 = vmatprep.mubr.bf16.mxu0 0
          %1200 = vmatmul.mubr.bf16.gmra.mrb[0].mxu0 %v1073
          %v1201 = vpop.f32.mrb[0].mxu0
          %v1202 = vadd.f32 0.0, %v1201
          %v1203 = vpop.f32.mrb[0].mxu0
          %v1204 = vpop.f32.mrb[0].mxu0
          %v1205 = vadd.f32 0.0, %v1204
          %v1206 = vpop.f32.mrb[0].mxu0
          %1207 = vmatprep.mubr.bf16.mxu0 0
          %1208 = vmatmul.mubr.bf16.gmra.mrb[0].mxu0 %v1074
          %v1209 = vpop.f32.mrb[0].mxu0
          %v1210 = vadd.f32 0.0, %v1209
          %v1211 = vpop.f32.mrb[0].mxu0
          %v1212 = vpop.f32.mrb[0].mxu0
          %v1213 = vadd.f32 0.0, %v1212
          %v1214 = vpop.f32.mrb[0].mxu0
          %1215 = vmatprep.mubr.bf16.mxu0 0
          %1216 = vmatmul.mubr.bf16.gmra.mrb[0].mxu0 %v1075
          %v1217 = vpop.f32.mrb[0].mxu0
          %v1218 = vadd.f32 0.0, %v1217
          %v1219 = vpop.f32.mrb[0].mxu0
          %v1220 = vpop.f32.mrb[0].mxu0
          %v1221 = vadd.f32 0.0, %v1220
          %v1222 = vpop.f32.mrb[0].mxu0
          %1223 = vmatprep.mubr.bf16.mxu0 0
          %1224 = vmatmul.mubr.bf16.gmra.mrb[0].mxu0 %v1076
          %v1225 = vpop.f32.mrb[0].mxu0
          %v1226 = vadd.f32 0.0, %v1225
          %v1227 = vpop.f32.mrb[0].mxu0
          %v1228 = vpop.f32.mrb[0].mxu0
          %v1229 = vadd.f32 0.0, %v1228
          %v1230 = vpop.f32.mrb[0].mxu0
          %1231 = vmatprep.mubr.bf16.mxu0 0
          %1232 = vmatmul.mubr.bf16.gmra.mrb[0].mxu0 %v1077
          %v1233 = vpop.f32.mrb[0].mxu0
          %v1234 = vadd.f32 0.0, %v1233
          %v1235 = vpop.f32.mrb[0].mxu0
          %v1236 = vpop.f32.mrb[0].mxu0
          %v1237 = vadd.f32 0.0, %v1236
          %v1238 = vpop.f32.mrb[0].mxu0
          %1239 = vmatprep.mubr.bf16.mxu0 0
          %1240 = vmatmul.mubr.bf16.gmra.mrb[0].mxu0 %v1078
          %v1241 = vpop.f32.mrb[0].mxu0
          %v1242 = vadd.f32 0.0, %v1241
          %v1243 = vpop.f32.mrb[0].mxu0
          %v1244 = vpop.f32.mrb[0].mxu0
          %v1245 = vadd.f32 0.0, %v1244
          %v1246 = vpop.f32.mrb[0].mxu0
          %1247 = vmatprep.mubr.bf16.mxu0 0
          %1248 = vmatmul.mubr.bf16.gmra.mrb[0].mxu0 %v1079
          %v1249 = vpop.f32.mrb[0].mxu0
          %v1250 = vadd.f32 0.0, %v1249
          %v1251 = vpop.f32.mrb[0].mxu0
          %v1252 = vpop.f32.mrb[0].mxu0
          %v1253 = vadd.f32 0.0, %v1252
          %v1254 = vpop.f32.mrb[0].mxu0
          %1255 = vmatprep.mubr.bf16.mxu0 0
          %1256 = vmatmul.mubr.bf16.gmra.mrb[0].mxu0 %v1080
          %v1257 = vpop.f32.mrb[0].mxu0
          %v1258 = vadd.f32 0.0, %v1257
          %v1259 = vpop.f32.mrb[0].mxu0
          %v1260 = vpop.f32.mrb[0].mxu0
          %v1261 = vadd.f32 0.0, %v1260
          %v1262 = vpop.f32.mrb[0].mxu0
          %1263 = vmatprep.mubr.bf16.mxu0 0
          %1264 = vmatmul.mubr.bf16.gmra.mrb[0].mxu0 %v1081
          %v1265 = vpop.f32.mrb[0].mxu0
          %v1266 = vadd.f32 0.0, %v1265
          %v1267 = vpop.f32.mrb[0].mxu0
          %v1268 = vpop.f32.mrb[0].mxu0
          %v1269 = vadd.f32 0.0, %v1268
          %v1270 = vpop.f32.mrb[0].mxu0
          %1271 = vmatprep.mubr.bf16.mxu0 0
          %1272 = vmatmul.mubr.bf16.gmra.mrb[0].mxu0 %v1082
          %v1273 = vpop.f32.mrb[0].mxu0
          %v1274 = vadd.f32 0.0, %v1273
          %v1275 = vpop.f32.mrb[0].mxu0
          %v1276 = vpop.f32.mrb[0].mxu0
          %v1277 = vadd.f32 0.0, %v1276
          %v1278 = vpop.f32.mrb[0].mxu0
          %1279 = vmatprep.mubr.bf16.mxu0 0
          %1280 = vmatmul.mubr.bf16.gmra.mrb[0].mxu0 %v1083
          %v1281 = vpop.f32.mrb[0].mxu0
          %v1282 = vadd.f32 0.0, %v1281
          %v1283 = vpop.f32.mrb[0].mxu0
          %v1284 = vpop.f32.mrb[0].mxu0
          %v1285 = vadd.f32 0.0, %v1284
          %v1286 = vpop.f32.mrb[0].mxu0
          %1287 = vmatprep.mubr.bf16.mxu0 0
          %1288 = vmatmul.mubr.bf16.gmra.mrb[0].mxu0 %v1084
          %v1289 = vpop.f32.mrb[0].mxu0
          %v1290 = vadd.f32 0.0, %v1289
          %v1291 = vpop.f32.mrb[0].mxu0
          %v1292 = vpop.f32.mrb[0].mxu0
          %v1293 = vadd.f32 0.0, %v1292
          %v1294 = vpop.f32.mrb[0].mxu0
          %1295 = vmatprep.mubr.bf16.mxu0 0
          %1296 = vmatmul.mubr.bf16.gmra.mrb[0].mxu0 %v1085
          %v1297 = vpop.f32.mrb[0].mxu0
          %v1298 = vadd.f32 0.0, %v1297
          %v1299 = vpop.f32.mrb[0].mxu0
          %v1300 = vpop.f32.mrb[0].mxu0
          %v1301 = vadd.f32 0.0, %v1300
          %v1302 = vpop.f32.mrb[0].mxu0
          %1303 = vmatprep.mubr.bf16.mxu0 0
          %1304 = vmatmul.mubr.bf16.gmra.mrb[0].mxu0 %v1086
          %v1305 = vpop.f32.mrb[0].mxu0
          %v1306 = vadd.f32 0.0, %v1305
          %v1307 = vpop.f32.mrb[0].mxu0
          %v1308 = vpop.f32.mrb[0].mxu0
          %v1309 = vadd.f32 0.0, %v1308
          %v1310 = vpop.f32.mrb[0].mxu0
          %1311 = vdwg.mxu0
          %v1312 = vpack.c.bf16 %v1189, %v1186
          %v1313 = vpack.c.bf16 %v1197, %v1194
          %v1314 = vpack.c.bf16 %v1205, %v1202
          %v1315 = vpack.c.bf16 %v1213, %v1210
          %v1316 = vpack.c.bf16 %v1221, %v1218
          %v1317 = vpack.c.bf16 %v1229, %v1226
          %v1318 = vpack.c.bf16 %v1237, %v1234
          %v1319 = vpack.c.bf16 %v1245, %v1242
          %v1320 = vpack.c.bf16 %v1253, %v1250
          %v1321 = vpack.c.bf16 %v1261, %v1258
          %v1322 = vpack.c.bf16 %v1269, %v1266
          %v1323 = vpack.c.bf16 %v1277, %v1274
          %v1324 = vpack.c.bf16 %v1285, %v1282
          %v1325 = vpack.c.bf16 %v1293, %v1290
          %v1326 = vpack.c.bf16 %v1301, %v1298
          %v1327 = vpack.c.bf16 %v1309, %v1306
          %v1344 = vunpack.c.l.b16 %v1312
          %v1345 = vunpack.c.h.b16 %v1312
          %v1346 = vunpack.c.l.b16 %v1313
          %v1347 = vunpack.c.h.b16 %v1313
          %v1348 = vunpack.c.l.b16 %v1314
          %v1349 = vunpack.c.h.b16 %v1314
          %v1350 = vunpack.c.l.b16 %v1315
          %v1351 = vunpack.c.h.b16 %v1315
          %v1352 = vunpack.c.l.b16 %v1316
          %v1353 = vunpack.c.h.b16 %v1316
          %v1354 = vunpack.c.l.b16 %v1317
          %v1355 = vunpack.c.h.b16 %v1317
          %v1356 = vunpack.c.l.b16 %v1318
          %v1357 = vunpack.c.h.b16 %v1318
          %v1358 = vunpack.c.l.b16 %v1319
          %v1359 = vunpack.c.h.b16 %v1319
          %v1360 = vunpack.c.l.b16 %v1320
          %v1361 = vunpack.c.h.b16 %v1320
          %v1362 = vunpack.c.l.b16 %v1321
          %v1363 = vunpack.c.h.b16 %v1321
          %v1364 = vunpack.c.l.b16 %v1322
          %v1365 = vunpack.c.h.b16 %v1322
          %v1366 = vunpack.c.l.b16 %v1323
          %v1367 = vunpack.c.h.b16 %v1323
          %v1368 = vunpack.c.l.b16 %v1324
          %v1369 = vunpack.c.h.b16 %v1324
          %v1370 = vunpack.c.l.b16 %v1325
          %v1371 = vunpack.c.h.b16 %v1325
          %v1372 = vunpack.c.l.b16 %v1326
          %v1373 = vunpack.c.h.b16 %v1326
          %v1374 = vunpack.c.l.b16 %v1327
          %v1375 = vunpack.c.h.b16 %v1327
          %v1376 = vpack.c.b16 %v1344, %v1344
          %v1377 = vpack.c.b16 %v1345, %v1345
          %v1378 = vpack.c.b16 %v1346, %v1346
          %v1379 = vpack.c.b16 %v1347, %v1347
          %v1380 = vpack.c.b16 %v1348, %v1348
          %v1381 = vpack.c.b16 %v1349, %v1349
          %v1382 = vpack.c.b16 %v1350, %v1350
          %v1383 = vpack.c.b16 %v1351, %v1351
          %v1384 = vpack.c.b16 %v1352, %v1352
          %v1385 = vpack.c.b16 %v1353, %v1353
          %v1386 = vpack.c.b16 %v1354, %v1354
          %v1387 = vpack.c.b16 %v1355, %v1355
          %v1388 = vpack.c.b16 %v1356, %v1356
          %v1389 = vpack.c.b16 %v1357, %v1357
          %v1390 = vpack.c.b16 %v1358, %v1358
          %v1391 = vpack.c.b16 %v1359, %v1359
          %v1392 = vpack.c.b16 %v1360, %v1360
          %v1393 = vpack.c.b16 %v1361, %v1361
          %v1394 = vpack.c.b16 %v1362, %v1362
          %v1395 = vpack.c.b16 %v1363, %v1363
          %v1396 = vpack.c.b16 %v1364, %v1364
          %v1397 = vpack.c.b16 %v1365, %v1365
          %v1398 = vpack.c.b16 %v1366, %v1366
          %v1399 = vpack.c.b16 %v1367, %v1367
          %v1400 = vpack.c.b16 %v1368, %v1368
          %v1401 = vpack.c.b16 %v1369, %v1369
          %v1402 = vpack.c.b16 %v1370, %v1370
          %v1403 = vpack.c.b16 %v1371, %v1371
          %v1404 = vpack.c.b16 %v1372, %v1372
          %v1405 = vpack.c.b16 %v1373, %v1373
          %v1406 = vpack.c.b16 %v1374, %v1374
          %v1407 = vpack.c.b16 %v1375, %v1375
          %1440 = vst [vmem:[%s375] sm:$0xf] %v1376
          %1441 = vst [vmem:[%s375 + $0x4] sm:$0xf] %v1377
          %1442 = vst [vmem:[%s375 + $0x8] sm:$0xf] %v1378
          %1443 = vst [vmem:[%s375 + $0xc] sm:$0xf] %v1379
          %1444 = vst [vmem:[%s375 + $0x10] sm:$0xf] %v1380
          %1445 = vst [vmem:[%s375 + $0x14] sm:$0xf] %v1381
          %1446 = vst [vmem:[%s375 + $0x18] sm:$0xf] %v1382
          %1447 = vst [vmem:[%s375 + $0x1c] sm:$0xf] %v1383
          %1448 = vst [vmem:[%s375 + $0x20] sm:$0xf] %v1384
          %1449 = vst [vmem:[%s375 + $0x24] sm:$0xf] %v1385
          %1450 = vst [vmem:[%s375 + $0x28] sm:$0xf] %v1386
          %1451 = vst [vmem:[%s375 + $0x2c] sm:$0xf] %v1387
          %1452 = vst [vmem:[%s375 + $0x30] sm:$0xf] %v1388
          %1453 = vst [vmem:[%s375 + $0x34] sm:$0xf] %v1389
          %1454 = vst [vmem:[%s375 + $0x38] sm:$0xf] %v1390
          %1455 = vst [vmem:[%s375 + $0x3c] sm:$0xf] %v1391
          %1456 = vst [vmem:[%s375 + $0x40] sm:$0xf] %v1392
          %1457 = vst [vmem:[%s375 + $0x44] sm:$0xf] %v1393
          %1458 = vst [vmem:[%s375 + $0x48] sm:$0xf] %v1394
          %1459 = vst [vmem:[%s375 + $0x4c] sm:$0xf] %v1395
          %1460 = vst [vmem:[%s375 + $0x50] sm:$0xf] %v1396
          %1461 = vst [vmem:[%s375 + $0x54] sm:$0xf] %v1397
          %1462 = vst [vmem:[%s375 + $0x58] sm:$0xf] %v1398
          %1463 = vst [vmem:[%s375 + $0x5c] sm:$0xf] %v1399
          %1464 = vst [vmem:[%s375 + $0x60] sm:$0xf] %v1400
          %1465 = vst [vmem:[%s375 + $0x64] sm:$0xf] %v1401
          %1466 = vst [vmem:[%s375 + $0x68] sm:$0xf] %v1402
          %1467 = vst [vmem:[%s375 + $0x6c] sm:$0xf] %v1403
          %1468 = vst [vmem:[%s375 + $0x70] sm:$0xf] %v1404
          %1469 = vst [vmem:[%s375 + $0x74] sm:$0xf] %v1405
          %1470 = vst [vmem:[%s375 + $0x78] sm:$0xf] %v1406
          %1471 = vst [vmem:[%s375 + $0x7c] sm:$0xf] %v1407
        $region82: #{bright_a_forward.10} parent=69 // pred_fallthru
          _
        %s1472 = smul.u32 32, %s19
        %p1473 = scmp.lt.s32.totalorder %s1472, 63
        %s1474 = scalar_select %p1473, %s1472, 63
        %s1475 = smul.addr %s1474, 4
        %s1476 = scalar_lea.vmem %s4, %s1475
        // Predicated region
        $region83: #{bright_a_forward.10} parent=69 // pred_check
          %p1477 = pneg %p136
        $region84: #{bright_a_forward.10} parent=69 // pred_check_branch
          %1479 = sbr.rel (%p1477) target = $region86
        $region85: #{bright_a_forward.10} parent=69 // pred_region
          %s1480 = smul.u32 32, %s19
        $region86: #{bright_a_forward.10} parent=69 // pred_fallthru
          _
      $region70: #{bright_a_forward.10} parent=5 // pred_fallthru
        _
      %p1481 = scmp.le.s32.totalorder 2, %s10
      // Predicated region
      $region87: #{bright_a_forward.10} parent=5 // pred_check
        %p1482 = pneg %p1481
      $region88: #{bright_a_forward.10} parent=5 // pred_check_branch
        %1484 = sbr.rel (%p1482) target = $region90
      $region89: #{bright_a_forward.10} parent=5 // pred_region
        %s1485 = ssub.s32 %s10, 2
        // Predicated region
        $region91: #{bright_a_forward.10} parent=89 // pred_check
          %p1486 = pneg %p142
        $region92: #{bright_a_forward.10} parent=89 // pred_check_branch
          %1488 = sbr.rel (%p1486) target = $region94
        $region93: #{bright_a_forward.10} parent=89 // pred_region
          %s1489 = smul.u32 32, %s21
          %p1490 = scmp.lt.s32.totalorder %s1489, 63
          %s1491 = scalar_select %p1490, %s1489, 63
          %s1492 = smul.addr %s1491, 4
          %s1493 = scalar_lea.vmem %s4, %s1492
        $region94: #{bright_a_forward.10} parent=89 // pred_fallthru
          _
      $region90: #{bright_a_forward.10} parent=5 // pred_fallthru
        _
    $region6: #{bright_a_forward.10} parent=1 // loop_footer
      %s14 = sadd.s32 1, %s10
    $region7: #{bright_a_forward.10} parent=1 // loop_footer_branch
      %9 = sbr.rel target = $region3
    $region8: #{bright_a_forward.10} parent=1 // loop_exit
      _

// kernel: bright_a_forward.11
$region0: #{bright_a_forward.11}
  #allocation0 [shape = 'u32[]', space=smem, size = 0x4, offset = 0x4, fixed_abs, tag = 'smem constant byte address 0x4 - core index']
  #allocation1 [shape = 'u32[144,128]{1,0:T(1,128)}', space=vmem, size = 0x12000, scoped, tag = 'internal scratch']
  #allocation2 [shape = 'f32[256,128]{1,0:T(8,128)}', space=vmem, size = 0x20000, scoped, tag = 'scratch operand']
  %s0 = inlined_call_operand.vmem [shape: bf16[512,128], index: 0, kind: input, shape index: {}]
  %s1 = inlined_call_operand.vmem [shape: bf16[512,512], index: 1, kind: input, shape index: {}]
  %s2 = inlined_call_operand.vmem [shape: bf16[512,128], index: 2, kind: input, shape index: {}]
  %s3 = inlined_call_operand.vmem [shape: bf16[128,128], index: 3, kind: input, shape index: {}]
  %s4 = inlined_call_operand.vmem [shape: f32[1,128], index: 4, kind: input, shape index: {}]
  %s5 = inlined_call_operand.vmem [shape: f32[1,128], index: 5, kind: input, shape index: {}]
  %s6 = inlined_call_operand.vmem [shape: bf16[128,128], index: 6, kind: input, shape index: {}]
  %s7 = inlined_call_operand.vmem [shape: bf16[128,128], index: 7, kind: input, shape index: {}]
  %s8 = inlined_call_operand.vmem [shape: f32[1,128], index: 8, kind: input, shape index: {}]
  %s9 = inlined_call_operand.vmem [shape: f32[512,128], index: 9, kind: output, shape index: {}]
  %s10 = sld [smem:[#allocation0]]
  $region115: #{bright_a_forward.11} parent=0
    _
  %s12 = ssub.s32 1, %s10
  %s13 = scalar_select 0, %s12, %s10
  $region1: #{bright_a_forward.11} parent=0
    #allocation3 [shape = 'u8[262144]{0}', space=vmem, size = 0x40000, scoped, tag = 'input window, operand 1']
    loop: start=0, step=1, limit=6
    $region2: #{bright_a_forward.11} parent=1 // loop_pre_header
      _
    $region3: #{bright_a_forward.11} parent=1 // loop_header
      %s15 = sphi 0, %s19
      %p16 = scmp.ge.s32.totalorder %s15, 6
      %s22 = sphi 0, %s34
      %s23 = sphi 0, %s30
      %s24 = sphi 0, %s22
      %s25 = sphi 0, %s23
      %s26 = sphi 0, %s24
      %s27 = sphi 0, %s25
      %s35 = sphi 0, %s35
      %s37 = sphi 0, %s35
      %s38 = sphi 0, %s37
      %s52 = sphi 0, %s38
      %s60 = sphi 0, %s62
      %s63 = sphi 0, %s60
      %s64 = sphi 0, %s63
      %s80 = sphi 0, %s64
      %s86 = sphi 0, %s88
      %s89 = sphi 0, %s86
      %s90 = sphi 0, %s89
      %s106 = sphi 0, %s90
      %s110 = sphi 0, %s110
      %s112 = sphi 0, %s110
      %s113 = sphi 0, %s112
      %s127 = sphi 0, %s113
      %s131 = sphi 0, %s131
      %s133 = sphi 0, %s131
      %s134 = sphi 0, %s133
      %s148 = sphi 0, %s134
      %s152 = sphi 0, %s152
      %s154 = sphi 0, %s152
      %s155 = sphi 0, %s154
      %s169 = sphi 0, %s155
      %s173 = sphi 0, %s173
      %s175 = sphi 0, %s173
      %s176 = sphi 0, %s175
      %s190 = sphi 0, %s176
      %s194 = sphi 0, %s194
      %s196 = sphi 0, %s194
      %s197 = sphi 0, %s196
      %s211 = sphi 0, %s197
      %s215 = sphi 0, %s215
      %s217 = sphi 0, %s215
      %s218 = sphi 0, %s217
      %s232 = sphi 0, %s218
      %s238 = sphi 0, %s240
      %s241 = sphi 0, %s238
      %s242 = sphi 0, %s241
      %s258 = sphi 0, %s242
    $region4: #{bright_a_forward.11} parent=1 // loop_header_branch
      %18 = sbr.rel (%p16) target = $region8
    $region5: #{bright_a_forward.11} parent=1 // loop_body
      %s20 = ssub.s32 %s15, 1
      %s21 = ssub.s32 %s15, 2
      %s28 = sadd.s32 1, %s23
      %p29 = scmp.ge.s32.totalorder %s28, 2
      %s30 = scalar_select %p29, 0, %s28
      %s31 = sadd.s32 1, %s22
      %s32 = scalar_select %p29, %s31, %s22
      %p33 = scmp.ge.s32.totalorder %s32, 2
      %s34 = scalar_select %p33, 0, %s32
      %s36 = sadd.s32 %s35, 1
      %p39 = scmp.eq.s32.totalorder %s15, 3
      %p40 = scmp.ne.s32.totalorder %s35, %s37
      %p41 = scmp.eq.s32.totalorder %s15, 0
      %p42 = por %p40, %p41
      %p43 = scmp.ne.s32.totalorder %s35, %s37
      %p44 = scmp.eq.s32.totalorder %s20, 3
      %p45 = por %p43, %p44
      %p46 = scmp.ne.s32.totalorder %s37, %s38
      %p47 = scmp.eq.s32.totalorder %s20, 0
      %p48 = por %p46, %p47
      %p49 = scmp.ne.s32.totalorder %s37, %s38
      %p50 = scmp.eq.s32.totalorder %s21, 3
      %p51 = por %p49, %p50
      %p53 = scmp.ne.s32.totalorder %s38, %s52
      %p54 = scmp.eq.s32.totalorder %s21, 0
      %p55 = por %p53, %p54
      %s56 = ssub.s32 %s22, %s34
      %s57 = ssub.s32 %s23, %s30
      %s58 = sor.u32 %s56, %s57
      %p59 = scmp.eq.s32.totalorder %s58, 0
      %s61 = sadd.s32 %s60, 1
      %s62 = scalar_select %p59, %s60, %s61
      %p65 = pneg %p59
      %p66 = scmp.eq.s32.totalorder %s15, 3
      %p67 = por %p65, %p66
      %p68 = scmp.ne.s32.totalorder %s60, %s63
      %p69 = scmp.eq.s32.totalorder %s15, 0
      %p70 = por %p68, %p69
      %p71 = scmp.ne.s32.totalorder %s60, %s63
      %p72 = scmp.eq.s32.totalorder %s20, 3
      %p73 = por %p71, %p72
      %p74 = scmp.ne.s32.totalorder %s63, %s64
      %p75 = scmp.eq.s32.totalorder %s20, 0
      %p76 = por %p74, %p75
      %p77 = scmp.ne.s32.totalorder %s63, %s64
      %p78 = scmp.eq.s32.totalorder %s21, 3
      %p79 = por %p77, %p78
      %p81 = scmp.ne.s32.totalorder %s64, %s80
      %p82 = scmp.eq.s32.totalorder %s21, 0
      %p83 = por %p81, %p82
      %s84 = ssub.s32 %s22, %s34
      %p85 = scmp.eq.s32.totalorder %s84, 0
      %s87 = sadd.s32 %s86, 1
      %s88 = scalar_select %p85, %s86, %s87
      %p91 = pneg %p85
      %p92 = scmp.eq.s32.totalorder %s15, 3
      %p93 = por %p91, %p92
      %p94 = scmp.ne.s32.totalorder %s86, %s89
      %p95 = scmp.eq.s32.totalorder %s15, 0
      %p96 = por %p94, %p95
      %p97 = scmp.ne.s32.totalorder %s86, %s89
      %p98 = scmp.eq.s32.totalorder %s20, 3
      %p99 = por %p97, %p98
      %p100 = scmp.ne.s32.totalorder %s89, %s90
      %p101 = scmp.eq.s32.totalorder %s20, 0
      %p102 = por %p100, %p101
      %p103 = scmp.ne.s32.totalorder %s89, %s90
      %p104 = scmp.eq.s32.totalorder %s21, 3
      %p105 = por %p103, %p104
      %p107 = scmp.ne.s32.totalorder %s90, %s106
      %p108 = scmp.eq.s32.totalorder %s21, 0
      %p109 = por %p107, %p108
      %s111 = sadd.s32 %s110, 1
      %p114 = scmp.eq.s32.totalorder %s15, 3
      %p115 = scmp.ne.s32.totalorder %s110, %s112
      %p116 = scmp.eq.s32.totalorder %s15, 0
      %p117 = por %p115, %p116
      %p118 = scmp.ne.s32.totalorder %s110, %s112
      %p119 = scmp.eq.s32.totalorder %s20, 3
      %p120 = por %p118, %p119
      %p121 = scmp.ne.s32.totalorder %s112, %s113
      %p122 = scmp.eq.s32.totalorder %s20, 0
      %p123 = por %p121, %p122
      %p124 = scmp.ne.s32.totalorder %s112, %s113
      %p125 = scmp.eq.s32.totalorder %s21, 3
      %p126 = por %p124, %p125
      %p128 = scmp.ne.s32.totalorder %s113, %s127
      %p129 = scmp.eq.s32.totalorder %s21, 0
      %p130 = por %p128, %p129
      %s132 = sadd.s32 %s131, 1
      %p135 = scmp.eq.s32.totalorder %s15, 3
      %p136 = scmp.ne.s32.totalorder %s131, %s133
      %p137 = scmp.eq.s32.totalorder %s15, 0
      %p138 = por %p136, %p137
      %p139 = scmp.ne.s32.totalorder %s131, %s133
      %p140 = scmp.eq.s32.totalorder %s20, 3
      %p141 = por %p139, %p140
      %p142 = scmp.ne.s32.totalorder %s133, %s134
      %p143 = scmp.eq.s32.totalorder %s20, 0
      %p144 = por %p142, %p143
      %p145 = scmp.ne.s32.totalorder %s133, %s134
      %p146 = scmp.eq.s32.totalorder %s21, 3
      %p147 = por %p145, %p146
      %p149 = scmp.ne.s32.totalorder %s134, %s148
      %p150 = scmp.eq.s32.totalorder %s21, 0
      %p151 = por %p149, %p150
      %s153 = sadd.s32 %s152, 1
      %p156 = scmp.eq.s32.totalorder %s15, 3
      %p157 = scmp.ne.s32.totalorder %s152, %s154
      %p158 = scmp.eq.s32.totalorder %s15, 0
      %p159 = por %p157, %p158
      %p160 = scmp.ne.s32.totalorder %s152, %s154
      %p161 = scmp.eq.s32.totalorder %s20, 3
      %p162 = por %p160, %p161
      %p163 = scmp.ne.s32.totalorder %s154, %s155
      %p164 = scmp.eq.s32.totalorder %s20, 0
      %p165 = por %p163, %p164
      %p166 = scmp.ne.s32.totalorder %s154, %s155
      %p167 = scmp.eq.s32.totalorder %s21, 3
      %p168 = por %p166, %p167
      %p170 = scmp.ne.s32.totalorder %s155, %s169
      %p171 = scmp.eq.s32.totalorder %s21, 0
      %p172 = por %p170, %p171
      %s174 = sadd.s32 %s173, 1
      %p177 = scmp.eq.s32.totalorder %s15, 3
      %p178 = scmp.ne.s32.totalorder %s173, %s175
      %p179 = scmp.eq.s32.totalorder %s15, 0
      %p180 = por %p178, %p179
      %p181 = scmp.ne.s32.totalorder %s173, %s175
      %p182 = scmp.eq.s32.totalorder %s20, 3
      %p183 = por %p181, %p182
      %p184 = scmp.ne.s32.totalorder %s175, %s176
      %p185 = scmp.eq.s32.totalorder %s20, 0
      %p186 = por %p184, %p185
      %p187 = scmp.ne.s32.totalorder %s175, %s176
      %p188 = scmp.eq.s32.totalorder %s21, 3
      %p189 = por %p187, %p188
      %p191 = scmp.ne.s32.totalorder %s176, %s190
      %p192 = scmp.eq.s32.totalorder %s21, 0
      %p193 = por %p191, %p192
      %s195 = sadd.s32 %s194, 1
      %p198 = scmp.eq.s32.totalorder %s15, 3
      %p199 = scmp.ne.s32.totalorder %s194, %s196
      %p200 = scmp.eq.s32.totalorder %s15, 0
      %p201 = por %p199, %p200
      %p202 = scmp.ne.s32.totalorder %s194, %s196
      %p203 = scmp.eq.s32.totalorder %s20, 3
      %p204 = por %p202, %p203
      %p205 = scmp.ne.s32.totalorder %s196, %s197
      %p206 = scmp.eq.s32.totalorder %s20, 0
      %p207 = por %p205, %p206
      %p208 = scmp.ne.s32.totalorder %s196, %s197
      %p209 = scmp.eq.s32.totalorder %s21, 3
      %p210 = por %p208, %p209
      %p212 = scmp.ne.s32.totalorder %s197, %s211
      %p213 = scmp.eq.s32.totalorder %s21, 0
      %p214 = por %p212, %p213
      %s216 = sadd.s32 %s215, 1
      %p219 = scmp.eq.s32.totalorder %s15, 3
      %p220 = scmp.ne.s32.totalorder %s215, %s217
      %p221 = scmp.eq.s32.totalorder %s15, 0
      %p222 = por %p220, %p221
      %p223 = scmp.ne.s32.totalorder %s215, %s217
      %p224 = scmp.eq.s32.totalorder %s20, 3
      %p225 = por %p223, %p224
      %p226 = scmp.ne.s32.totalorder %s217, %s218
      %p227 = scmp.eq.s32.totalorder %s20, 0
      %p228 = por %p226, %p227
      %p229 = scmp.ne.s32.totalorder %s217, %s218
      %p230 = scmp.eq.s32.totalorder %s21, 3
      %p231 = por %p229, %p230
      %p233 = scmp.ne.s32.totalorder %s218, %s232
      %p234 = scmp.eq.s32.totalorder %s21, 0
      %p235 = por %p233, %p234
      %s236 = ssub.s32 %s22, %s34
      %p237 = scmp.eq.s32.totalorder %s236, 0
      %s239 = sadd.s32 %s238, 1
      %s240 = scalar_select %p237, %s238, %s239
      %p243 = pneg %p237
      %p244 = scmp.eq.s32.totalorder %s15, 3
      %p245 = por %p243, %p244
      %p246 = scmp.ne.s32.totalorder %s238, %s241
      %p247 = scmp.eq.s32.totalorder %s15, 0
      %p248 = por %p246, %p247
      %p249 = scmp.ne.s32.totalorder %s238, %s241
      %p250 = scmp.eq.s32.totalorder %s20, 3
      %p251 = por %p249, %p250
      %p252 = scmp.ne.s32.totalorder %s241, %s242
      %p253 = scmp.eq.s32.totalorder %s20, 0
      %p254 = por %p252, %p253
      %p255 = scmp.ne.s32.totalorder %s241, %s242
      %p256 = scmp.eq.s32.totalorder %s21, 3
      %p257 = por %p255, %p256
      %p259 = scmp.ne.s32.totalorder %s242, %s258
      %p260 = scmp.eq.s32.totalorder %s21, 0
      %p261 = por %p259, %p260
      %p262 = scmp.le.s32.totalorder 1, %s15
      %p263 = scmp.lt.s32.totalorder %s15, 5
      %p264 = pnand %p262, %p263
      %p265 = pneg %p264
      // Predicated region
      $region9: #{bright_a_forward.11} parent=5 // pred_check
        _
      $region10: #{bright_a_forward.11} parent=5 // pred_check_branch
        %267 = sbr.rel (%p264) target = $region12
      $region11: #{bright_a_forward.11} parent=5 // pred_region
        %s268 = ssub.s32 %s15, 1
        // Predicated region
        $region13: #{bright_a_forward.11} parent=11 // pred_check
          %p269 = pneg %p48
        $region14: #{bright_a_forward.11} parent=11 // pred_check_branch
          %271 = sbr.rel (%p269) target = $region16
        $region15: #{bright_a_forward.11} parent=11 // pred_region
          _
        $region16: #{bright_a_forward.11} parent=11 // pred_fallthru
          _
        // Predicated region
        $region17: #{bright_a_forward.11} parent=11 // pred_check
          %p272 = pneg %p123
        $region18: #{bright_a_forward.11} parent=11 // pred_check_branch
          %274 = sbr.rel (%p272) target = $region20
        $region19: #{bright_a_forward.11} parent=11 // pred_region
          _
        $region20: #{bright_a_forward.11} parent=11 // pred_fallthru
          _
        // Predicated region
        $region21: #{bright_a_forward.11} parent=11 // pred_check
          %p275 = pneg %p144
        $region22: #{bright_a_forward.11} parent=11 // pred_check_branch
          %277 = sbr.rel (%p275) target = $region24
        $region23: #{bright_a_forward.11} parent=11 // pred_region
          _
        $region24: #{bright_a_forward.11} parent=11 // pred_fallthru
          _
        // Predicated region
        $region25: #{bright_a_forward.11} parent=11 // pred_check
          %p278 = pneg %p165
        $region26: #{bright_a_forward.11} parent=11 // pred_check_branch
          %280 = sbr.rel (%p278) target = $region28
        $region27: #{bright_a_forward.11} parent=11 // pred_region
          _
        $region28: #{bright_a_forward.11} parent=11 // pred_fallthru
          _
        // Predicated region
        $region29: #{bright_a_forward.11} parent=11 // pred_check
          %p281 = pneg %p186
        $region30: #{bright_a_forward.11} parent=11 // pred_check_branch
          %283 = sbr.rel (%p281) target = $region32
        $region31: #{bright_a_forward.11} parent=11 // pred_region
          _
        $region32: #{bright_a_forward.11} parent=11 // pred_fallthru
          _
        // Predicated region
        $region33: #{bright_a_forward.11} parent=11 // pred_check
          %p284 = pneg %p207
        $region34: #{bright_a_forward.11} parent=11 // pred_check_branch
          %286 = sbr.rel (%p284) target = $region36
        $region35: #{bright_a_forward.11} parent=11 // pred_region
          _
        $region36: #{bright_a_forward.11} parent=11 // pred_fallthru
          _
        // Predicated region
        $region37: #{bright_a_forward.11} parent=11 // pred_check
          %p287 = pneg %p228
        $region38: #{bright_a_forward.11} parent=11 // pred_check_branch
          %289 = sbr.rel (%p287) target = $region40
        $region39: #{bright_a_forward.11} parent=11 // pred_region
          _
        $region40: #{bright_a_forward.11} parent=11 // pred_fallthru
          _
      $region12: #{bright_a_forward.11} parent=5 // pred_fallthru
        _
      %p290 = scmp.lt.s32.totalorder %s15, 4
      // Predicated region
      $region41: #{bright_a_forward.11} parent=5 // pred_check
        %p291 = pneg %p290
      $region42: #{bright_a_forward.11} parent=5 // pred_check_branch
        %293 = sbr.rel (%p291) target = $region44
      $region43: #{bright_a_forward.11} parent=5 // pred_region
        // Predicated region
        $region45: #{bright_a_forward.11} parent=43 // pred_check
          %p294 = pneg %p70
        $region46: #{bright_a_forward.11} parent=43 // pred_check_branch
          %296 = sbr.rel (%p294) target = $region48
        $region47: #{bright_a_forward.11} parent=43 // pred_region
          %s297 = sand.u32 %s60, 1
          %s298 = sand.u32 %s60, 1
          %s299 = smul.addr %s298, 256
          %s300 = scalar_lea.vmem [#allocation3], %s299
          %s301 = smul.u32 32, %s22
          %s302 = smul.u32 2, %s23
          %s303 = smul.addr %s301, 4
          %s304 = sadd.s32 %s302, %s303
          %s305 = smul.addr %s304, 4
          %s306 = scalar_lea.vmem %s1, %s305
          // Predicated region
          $region49: #{bright_a_forward.11} parent=47 // pred_check
            _
          $region50: #{bright_a_forward.11} parent=47 // pred_check_branch
            %308 = sbr.rel (0) target = $region52
          $region51: #{bright_a_forward.11} parent=47 // pred_region
            // Predicated region
            $region53: #{bright_a_forward.11} parent=51 // pred_check
              _
            $region54: #{bright_a_forward.11} parent=51 // pred_check_branch
              %310 = sbr.rel (0) target = $region56
            $region55: #{bright_a_forward.11} parent=51 // pred_region
              // Predicated region
              $region68: #{bright_a_forward.11} parent=55 // pred_check
                _
              $region69: #{bright_a_forward.11} parent=55 // pred_check_branch
                %387 = sbr.rel (0) target = $region71
              $region70: #{bright_a_forward.11} parent=55 // pred_region
                loop: start=0, step=1, limit=1
                $region72: #{bright_a_forward.11} parent=70 // loop_pre_header
                  _
                $region73: #{bright_a_forward.11} parent=70 // loop_header
                  %s389 = sphi 0, %s393
                  %p390 = scmp.ge.s32.totalorder %s389, 1
                  %s394 = sphi %s306, %s306
                  %s395 = sphi %s300, %s300
                $region74: #{bright_a_forward.11} parent=70 // loop_header_branch
                  %392 = sbr.rel (%p390) target = $region78
                $region75: #{bright_a_forward.11} parent=70 // loop_body
                  %v396 = vld [vmem:[%s394] sm:$0xff]
                  %397 = vst [vmem:[%s395] sm:$0xff] %v396
                  %v398 = vld [vmem:[%s394 + $0x10] sm:$0xff]
                  %399 = vst [vmem:[%s395 + $0x8] sm:$0xff] %v398
                  %v400 = vld [vmem:[%s394 + $0x20] sm:$0xff]
                  %401 = vst [vmem:[%s395 + $0x10] sm:$0xff] %v400
                  %v402 = vld [vmem:[%s394 + $0x30] sm:$0xff]
                  %403 = vst [vmem:[%s395 + $0x18] sm:$0xff] %v402
                  %v404 = vld [vmem:[%s394 + $0x40] sm:$0xff]
                  %405 = vst [vmem:[%s395 + $0x20] sm:$0xff] %v404
                  %v406 = vld [vmem:[%s394 + $0x50] sm:$0xff]
                  %407 = vst [vmem:[%s395 + $0x28] sm:$0xff] %v406
                  %v408 = vld [vmem:[%s394 + $0x60] sm:$0xff]
                  %409 = vst [vmem:[%s395 + $0x30] sm:$0xff] %v408
                  %v410 = vld [vmem:[%s394 + $0x70] sm:$0xff]
                  %411 = vst [vmem:[%s395 + $0x38] sm:$0xff] %v410
                  %v412 = vld [vmem:[%s394 + $0x80] sm:$0xff]
                  %413 = vst [vmem:[%s395 + $0x40] sm:$0xff] %v412
                  %v414 = vld [vmem:[%s394 + $0x90] sm:$0xff]
                  %415 = vst [vmem:[%s395 + $0x48] sm:$0xff] %v414
                  %v416 = vld [vmem:[%s394 + $0xa0] sm:$0xff]
                  %417 = vst [vmem:[%s395 + $0x50] sm:$0xff] %v416
                  %v418 = vld [vmem:[%s394 + $0xb0] sm:$0xff]
                  %419 = vst [vmem:[%s395 + $0x58] sm:$0xff] %v418
                  %v420 = vld [vmem:[%s394 + $0xc0] sm:$0xff]
                  %421 = vst [vmem:[%s395 + $0x60] sm:$0xff] %v420
                  %v422 = vld [vmem:[%s394 + $0xd0] sm:$0xff]
                  %423 = vst [vmem:[%s395 + $0x68] sm:$0xff] %v422
                  %v424 = vld [vmem:[%s394 + $0xe0] sm:$0xff]
                  %425 = vst [vmem:[%s395 + $0x70] sm:$0xff] %v424
                  %v426 = vld [vmem:[%s394 + $0xf0] sm:$0xff]
                  %427 = vst [vmem:[%s395 + $0x78] sm:$0xff] %v426
                  %v428 = vld [vmem:[%s394 + $0x100] sm:$0xff]
                  %429 = vst [vmem:[%s395 + $0x80] sm:$0xff] %v428
                  %v430 = vld [vmem:[%s394 + $0x110] sm:$0xff]
                  %431 = vst [vmem:[%s395 + $0x88] sm:$0xff] %v430
                  %v432 = vld [vmem:[%s394 + $0x120] sm:$0xff]
                  %433 = vst [vmem:[%s395 + $0x90] sm:$0xff] %v432
                  %v434 = vld [vmem:[%s394 + $0x130] sm:$0xff]
                  %435 = vst [vmem:[%s395 + $0x98] sm:$0xff] %v434
                  %v436 = vld [vmem:[%s394 + $0x140] sm:$0xff]
                  %437 = vst [vmem:[%s395 + $0xa0] sm:$0xff] %v436
                  %v438 = vld [vmem:[%s394 + $0x150] sm:$0xff]
                  %439 = vst [vmem:[%s395 + $0xa8] sm:$0xff] %v438
                  %v440 = vld [vmem:[%s394 + $0x160] sm:$0xff]
                  %441 = vst [vmem:[%s395 + $0xb0] sm:$0xff] %v440
                  %v442 = vld [vmem:[%s394 + $0x170] sm:$0xff]
                  %443 = vst [vmem:[%s395 + $0xb8] sm:$0xff] %v442
                  %v444 = vld [vmem:[%s394 + $0x180] sm:$0xff]
                  %445 = vst [vmem:[%s395 + $0xc0] sm:$0xff] %v444
                  %v446 = vld [vmem:[%s394 + $0x190] sm:$0xff]
                  %447 = vst [vmem:[%s395 + $0xc8] sm:$0xff] %v446
                  %v448 = vld [vmem:[%s394 + $0x1a0] sm:$0xff]
                  %449 = vst [vmem:[%s395 + $0xd0] sm:$0xff] %v448
                  %v450 = vld [vmem:[%s394 + $0x1b0] sm:$0xff]
                  %451 = vst [vmem:[%s395 + $0xd8] sm:$0xff] %v450
                  %v452 = vld [vmem:[%s394 + $0x1c0] sm:$0xff]
                  %453 = vst [vmem:[%s395 + $0xe0] sm:$0xff] %v452
                  %v454 = vld [vmem:[%s394 + $0x1d0] sm:$0xff]
                  %455 = vst [vmem:[%s395 + $0xe8] sm:$0xff] %v454
                  %v456 = vld [vmem:[%s394 + $0x1e0] sm:$0xff]
                  %457 = vst [vmem:[%s395 + $0xf0] sm:$0xff] %v456
                  %v458 = vld [vmem:[%s394 + $0x1f0] sm:$0xff]
                  %459 = vst [vmem:[%s395 + $0xf8] sm:$0xff] %v458
                $region76: #{bright_a_forward.11} parent=70 // loop_footer
                  %s393 = sadd.s32 1, %s389
                $region77: #{bright_a_forward.11} parent=70 // loop_footer_branch
                  %388 = sbr.rel target = $region73
                $region78: #{bright_a_forward.11} parent=70 // loop_exit
                  _
              $region71: #{bright_a_forward.11} parent=55 // pred_fallthru
                _
              // Predicated region
              $region79: #{bright_a_forward.11} parent=55 // pred_check
                _
              $region80: #{bright_a_forward.11} parent=55 // pred_check_branch
                %461 = sbr.rel target = $region82
              $region81: #{bright_a_forward.11} parent=55 // pred_region
                _
              $region82: #{bright_a_forward.11} parent=55 // pred_fallthru
                _
            $region56: #{bright_a_forward.11} parent=51 // pred_fallthru
              _
            // Predicated region
            $region57: #{bright_a_forward.11} parent=51 // pred_check
              _
            $region58: #{bright_a_forward.11} parent=51 // pred_check_branch
              %312 = sbr.rel target = $region60
            $region59: #{bright_a_forward.11} parent=51 // pred_region
              loop: start=0, step=1, limit=1
              $region61: #{bright_a_forward.11} parent=59 // loop_pre_header
                _
              $region62: #{bright_a_forward.11} parent=59 // loop_header
                %s315 = sphi 0, %s319
                %p316 = scmp.ge.s32.totalorder %s315, 1
                %s320 = sphi %s306, %s306
                %s321 = sphi %s300, %s300
              $region63: #{bright_a_forward.11} parent=59 // loop_header_branch
                %318 = sbr.rel (%p316) target = $region67
              $region64: #{bright_a_forward.11} parent=59 // loop_body
                %v322 = vld [vmem:[%s320] sm:$0xff]
                %323 = vst [vmem:[%s321] sm:$0xff] %v322
                %v324 = vld [vmem:[%s320 + $0x10] sm:$0xff]
                %325 = vst [vmem:[%s321 + $0x8] sm:$0xff] %v324
                %v326 = vld [vmem:[%s320 + $0x20] sm:$0xff]
                %327 = vst [vmem:[%s321 + $0x10] sm:$0xff] %v326
                %v328 = vld [vmem:[%s320 + $0x30] sm:$0xff]
                %329 = vst [vmem:[%s321 + $0x18] sm:$0xff] %v328
                %v330 = vld [vmem:[%s320 + $0x40] sm:$0xff]
                %331 = vst [vmem:[%s321 + $0x20] sm:$0xff] %v330
                %v332 = vld [vmem:[%s320 + $0x50] sm:$0xff]
                %333 = vst [vmem:[%s321 + $0x28] sm:$0xff] %v332
                %v334 = vld [vmem:[%s320 + $0x60] sm:$0xff]
                %335 = vst [vmem:[%s321 + $0x30] sm:$0xff] %v334
                %v336 = vld [vmem:[%s320 + $0x70] sm:$0xff]
                %337 = vst [vmem:[%s321 + $0x38] sm:$0xff] %v336
                %v338 = vld [vmem:[%s320 + $0x80] sm:$0xff]
                %339 = vst [vmem:[%s321 + $0x40] sm:$0xff] %v338
                %v340 = vld [vmem:[%s320 + $0x90] sm:$0xff]
                %341 = vst [vmem:[%s321 + $0x48] sm:$0xff] %v340
                %v342 = vld [vmem:[%s320 + $0xa0] sm:$0xff]
                %343 = vst [vmem:[%s321 + $0x50] sm:$0xff] %v342
                %v344 = vld [vmem:[%s320 + $0xb0] sm:$0xff]
                %345 = vst [vmem:[%s321 + $0x58] sm:$0xff] %v344
                %v346 = vld [vmem:[%s320 + $0xc0] sm:$0xff]
                %347 = vst [vmem:[%s321 + $0x60] sm:$0xff] %v346
                %v348 = vld [vmem:[%s320 + $0xd0] sm:$0xff]
                %349 = vst [vmem:[%s321 + $0x68] sm:$0xff] %v348
                %v350 = vld [vmem:[%s320 + $0xe0] sm:$0xff]
                %351 = vst [vmem:[%s321 + $0x70] sm:$0xff] %v350
                %v352 = vld [vmem:[%s320 + $0xf0] sm:$0xff]
                %353 = vst [vmem:[%s321 + $0x78] sm:$0xff] %v352
                %v354 = vld [vmem:[%s320 + $0x100] sm:$0xff]
                %355 = vst [vmem:[%s321 + $0x80] sm:$0xff] %v354
                %v356 = vld [vmem:[%s320 + $0x110] sm:$0xff]
                %357 = vst [vmem:[%s321 + $0x88] sm:$0xff] %v356
                %v358 = vld [vmem:[%s320 + $0x120] sm:$0xff]
                %359 = vst [vmem:[%s321 + $0x90] sm:$0xff] %v358
                %v360 = vld [vmem:[%s320 + $0x130] sm:$0xff]
                %361 = vst [vmem:[%s321 + $0x98] sm:$0xff] %v360
                %v362 = vld [vmem:[%s320 + $0x140] sm:$0xff]
                %363 = vst [vmem:[%s321 + $0xa0] sm:$0xff] %v362
                %v364 = vld [vmem:[%s320 + $0x150] sm:$0xff]
                %365 = vst [vmem:[%s321 + $0xa8] sm:$0xff] %v364
                %v366 = vld [vmem:[%s320 + $0x160] sm:$0xff]
                %367 = vst [vmem:[%s321 + $0xb0] sm:$0xff] %v366
                %v368 = vld [vmem:[%s320 + $0x170] sm:$0xff]
                %369 = vst [vmem:[%s321 + $0xb8] sm:$0xff] %v368
                %v370 = vld [vmem:[%s320 + $0x180] sm:$0xff]
                %371 = vst [vmem:[%s321 + $0xc0] sm:$0xff] %v370
                %v372 = vld [vmem:[%s320 + $0x190] sm:$0xff]
                %373 = vst [vmem:[%s321 + $0xc8] sm:$0xff] %v372
                %v374 = vld [vmem:[%s320 + $0x1a0] sm:$0xff]
                %375 = vst [vmem:[%s321 + $0xd0] sm:$0xff] %v374
                %v376 = vld [vmem:[%s320 + $0x1b0] sm:$0xff]
                %377 = vst [vmem:[%s321 + $0xd8] sm:$0xff] %v376
                %v378 = vld [vmem:[%s320 + $0x1c0] sm:$0xff]
                %379 = vst [vmem:[%s321 + $0xe0] sm:$0xff] %v378
                %v380 = vld [vmem:[%s320 + $0x1d0] sm:$0xff]
                %381 = vst [vmem:[%s321 + $0xe8] sm:$0xff] %v380
                %v382 = vld [vmem:[%s320 + $0x1e0] sm:$0xff]
                %383 = vst [vmem:[%s321 + $0xf0] sm:$0xff] %v382
                %v384 = vld [vmem:[%s320 + $0x1f0] sm:$0xff]
                %385 = vst [vmem:[%s321 + $0xf8] sm:$0xff] %v384
              $region65: #{bright_a_forward.11} parent=59 // loop_footer
                %s319 = sadd.s32 1, %s315
              $region66: #{bright_a_forward.11} parent=59 // loop_footer_branch
                %314 = sbr.rel target = $region62
              $region67: #{bright_a_forward.11} parent=59 // loop_exit
                _
            $region60: #{bright_a_forward.11} parent=51 // pred_fallthru
              _
          $region52: #{bright_a_forward.11} parent=47 // pred_fallthru
            _
          %462 = vnop
        $region48: #{bright_a_forward.11} parent=43 // pred_fallthru
          _
        // Predicated region
        $region83: #{bright_a_forward.11} parent=43 // pred_check
          %p463 = pneg %p96
        $region84: #{bright_a_forward.11} parent=43 // pred_check_branch
          %465 = sbr.rel (%p463) target = $region86
        $region85: #{bright_a_forward.11} parent=43 // pred_region
          %s466 = smul.u32 32, %s22
          %p467 = scmp.lt.s32.totalorder %s466, 63
          %s468 = scalar_select %p467, %s466, 63
          %s469 = smul.addr %s468, 4
          %s470 = scalar_lea.vmem %s2, %s469
          %s471 = smul.u32 32, %s22
        $region86: #{bright_a_forward.11} parent=43 // pred_fallthru
          _
      $region44: #{bright_a_forward.11} parent=5 // pred_fallthru
        _
      %p472 = scmp.le.s32.totalorder 1, %s15
      %p473 = scmp.lt.s32.totalorder %s15, 5
      %p474 = pnand %p472, %p473
      %p475 = pneg %p474
      // Predicated region
      $region87: #{bright_a_forward.11} parent=5 // pred_check
        _
      $region88: #{bright_a_forward.11} parent=5 // pred_check_branch
        %477 = sbr.rel (%p474) target = $region90
      $region89: #{bright_a_forward.11} parent=5 // pred_region
        %s478 = ssub.s32 %s15, 1
        %s479 = sand.u32 %s63, 1
        %s480 = sand.u32 %s63, 1
        %s481 = smul.addr %s480, 256
        %s482 = scalar_lea.vmem [#allocation3], %s481
        // Predicated region
        $region91: #{bright_a_forward.11} parent=89 // pred_check
          %p483 = pneg %p76
        $region92: #{bright_a_forward.11} parent=89 // pred_check_branch
          %485 = sbr.rel (%p483) target = $region94
        $region93: #{bright_a_forward.11} parent=89 // pred_region
          _
        $region94: #{bright_a_forward.11} parent=89 // pred_fallthru
          _
        %p486 = pneg %p48
        %p487 = pneg %p45
        %s488 = sand.u32 %s63, 1
        %s489 = sand.u32 %s63, 1
        %s490 = smul.addr %s489, 256
        %s491 = scalar_lea.vmem [#allocation3], %s490
        %p492 = pneg %p76
        %p493 = pneg %p73
        %s494 = smul.u32 32, %s24
        %p495 = scmp.lt.s32.totalorder %s494, 63
        %s496 = scalar_select %p495, %s494, 63
        %s497 = smul.addr %s496, 4
        %s498 = scalar_lea.vmem %s2, %s497
        %p499 = pneg %p102
        %p500 = pneg %p99
        %p501 = pneg %p123
        %p502 = pneg %p120
        %p503 = pneg %p144
        %p504 = pneg %p141
        %p505 = pneg %p165
        %p506 = pneg %p162
        %p507 = pneg %p186
        %p508 = pneg %p183
        %p509 = pneg %p207
        %p510 = pneg %p204
        %p511 = pneg %p228
        %p512 = pneg %p225
        %p513 = pneg %p254
        %p514 = pneg %p251
        %s515 = smul.u32 32, %s24
        %p516 = scmp.lt.s32.totalorder %s515, 63
        %s517 = scalar_select %p516, %s515, 63
        %s518 = smul.addr %s517, 8
        %s519 = scalar_lea.vmem %s9, %s518
        %s520 = smul.u32 32, %s24
        %s521 = smul.u32 2, %s25
        %s522 = smul.u32 32, %s24
        %p523 = scmp.lt.s32.totalorder %s522, 63
        %s524 = scalar_select %p523, %s522, 63
        %s525 = smul.addr %s524, 4
        %s526 = scalar_lea.vmem %s2, %s525
        %s527 = smul.u32 32, %s24
        %s528 = smul.u32 32, %s24
        %p529 = scmp.lt.s32.totalorder %s528, 63
        %s530 = scalar_select %p529, %s528, 63
        %s531 = smul.addr %s530, 8
        %s532 = scalar_lea.vmem %s9, %s531
        %s533 = smul.u32 32, %s24
        %p535 = scmp.eq.s32.totalorder %s25, 0
        // Predicated region
        $region95: #{bright_a_forward.11} parent=89 // pred_check
          %p536 = pneg %p535
        $region96: #{bright_a_forward.11} parent=89 // pred_check_branch
          %538 = sbr.rel (%p536) target = $region98
        $region97: #{bright_a_forward.11} parent=89 // pred_region
          %539 = vst [vmem:[#allocation2] sm:$0xff] 0.0
          %540 = vst [vmem:[#allocation2 + $0x8] sm:$0xff] 0.0
          %541 = vst [vmem:[#allocation2 + $0x10] sm:$0xff] 0.0
          %542 = vst [vmem:[#allocation2 + $0x18] sm:$0xff] 0.0
          %543 = vst [vmem:[#allocation2 + $0x20] sm:$0xff] 0.0
          %544 = vst [vmem:[#allocation2 + $0x28] sm:$0xff] 0.0
          %545 = vst [vmem:[#allocation2 + $0x30] sm:$0xff] 0.0
          %546 = vst [vmem:[#allocation2 + $0x38] sm:$0xff] 0.0
          %547 = vst [vmem:[#allocation2 + $0x40] sm:$0xff] 0.0
          %548 = vst [vmem:[#allocation2 + $0x48] sm:$0xff] 0.0
          %549 = vst [vmem:[#allocation2 + $0x50] sm:$0xff] 0.0
          %550 = vst [vmem:[#allocation2 + $0x58] sm:$0xff] 0.0
          %551 = vst [vmem:[#allocation2 + $0x60] sm:$0xff] 0.0
          %552 = vst [vmem:[#allocation2 + $0x68] sm:$0xff] 0.0
          %553 = vst [vmem:[#allocation2 + $0x70] sm:$0xff] 0.0
          %554 = vst [vmem:[#allocation2 + $0x78] sm:$0xff] 0.0
          %555 = vst [vmem:[#allocation2 + $0x80] sm:$0xff] 0.0
          %556 = vst [vmem:[#allocation2 + $0x88] sm:$0xff] 0.0
          %557 = vst [vmem:[#allocation2 + $0x90] sm:$0xff] 0.0
          %558 = vst [vmem:[#allocation2 + $0x98] sm:$0xff] 0.0
          %559 = vst [vmem:[#allocation2 + $0xa0] sm:$0xff] 0.0
          %560 = vst [vmem:[#allocation2 + $0xa8] sm:$0xff] 0.0
          %561 = vst [vmem:[#allocation2 + $0xb0] sm:$0xff] 0.0
          %562 = vst [vmem:[#allocation2 + $0xb8] sm:$0xff] 0.0
          %563 = vst [vmem:[#allocation2 + $0xc0] sm:$0xff] 0.0
          %564 = vst [vmem:[#allocation2 + $0xc8] sm:$0xff] 0.0
          %565 = vst [vmem:[#allocation2 + $0xd0] sm:$0xff] 0.0
          %566 = vst [vmem:[#allocation2 + $0xd8] sm:$0xff] 0.0
          %567 = vst [vmem:[#allocation2 + $0xe0] sm:$0xff] 0.0
          %568 = vst [vmem:[#allocation2 + $0xe8] sm:$0xff] 0.0
          %569 = vst [vmem:[#allocation2 + $0xf0] sm:$0xff] 0.0
          %570 = vst [vmem:[#allocation2 + $0xf8] sm:$0xff] 0.0
        $region98: #{bright_a_forward.11} parent=89 // pred_fallthru
          _
        %s571 = smul.u32 %s25, 256
        %v572 = vld [vmem:[#allocation2] sm:$0xff]
        %v573 = vld [vmem:[#allocation2 + $0x8] sm:$0xff]
        %v574 = vld [vmem:[#allocation2 + $0x10] sm:$0xff]
        %v575 = vld [vmem:[#allocation2 + $0x18] sm:$0xff]
        %v576 = vld [vmem:[#allocation2 + $0x20] sm:$0xff]
        %v577 = vld [vmem:[#allocation2 + $0x28] sm:$0xff]
        %v578 = vld [vmem:[#allocation2 + $0x30] sm:$0xff]
        %v579 = vld [vmem:[#allocation2 + $0x38] sm:$0xff]
        %v580 = vld [vmem:[#allocation2 + $0x40] sm:$0xff]
        %v581 = vld [vmem:[#allocation2 + $0x48] sm:$0xff]
        %v582 = vld [vmem:[#allocation2 + $0x50] sm:$0xff]
        %v583 = vld [vmem:[#allocation2 + $0x58] sm:$0xff]
        %v584 = vld [vmem:[#allocation2 + $0x60] sm:$0xff]
        %v585 = vld [vmem:[#allocation2 + $0x68] sm:$0xff]
        %v586 = vld [vmem:[#allocation2 + $0x70] sm:$0xff]
        %v587 = vld [vmem:[#allocation2 + $0x78] sm:$0xff]
        %v588 = vld [vmem:[#allocation2 + $0x80] sm:$0xff]
        %v589 = vld [vmem:[#allocation2 + $0x88] sm:$0xff]
        %v590 = vld [vmem:[#allocation2 + $0x90] sm:$0xff]
        %v591 = vld [vmem:[#allocation2 + $0x98] sm:$0xff]
        %v592 = vld [vmem:[#allocation2 + $0xa0] sm:$0xff]
        %v593 = vld [vmem:[#allocation2 + $0xa8] sm:$0xff]
        %v594 = vld [vmem:[#allocation2 + $0xb0] sm:$0xff]
        %v595 = vld [vmem:[#allocation2 + $0xb8] sm:$0xff]
        %v596 = vld [vmem:[#allocation2 + $0xc0] sm:$0xff]
        %v597 = vld [vmem:[#allocation2 + $0xc8] sm:$0xff]
        %v598 = vld [vmem:[#allocation2 + $0xd0] sm:$0xff]
        %v599 = vld [vmem:[#allocation2 + $0xd8] sm:$0xff]
        %v600 = vld [vmem:[#allocation2 + $0xe0] sm:$0xff]
        %v601 = vld [vmem:[#allocation2 + $0xe8] sm:$0xff]
        %v602 = vld [vmem:[#allocation2 + $0xf0] sm:$0xff]
        %v603 = vld [vmem:[#allocation2 + $0xf8] sm:$0xff]
        %v604 = vld [vmem:[%s482] sm:$0xff]
        %v605 = vld [vmem:[%s482 + $0x8] sm:$0xff]
        %v606 = vld [vmem:[%s482 + $0x10] sm:$0xff]
        %v607 = vld [vmem:[%s482 + $0x18] sm:$0xff]
        %v608 = vld [vmem:[%s482 + $0x20] sm:$0xff]
        %v609 = vld [vmem:[%s482 + $0x28] sm:$0xff]
        %v610 = vld [vmem:[%s482 + $0x30] sm:$0xff]
        %v611 = vld [vmem:[%s482 + $0x38] sm:$0xff]
        %v612 = vld [vmem:[%s482 + $0x40] sm:$0xff]
        %v613 = vld [vmem:[%s482 + $0x48] sm:$0xff]
        %v614 = vld [vmem:[%s482 + $0x50] sm:$0xff]
        %v615 = vld [vmem:[%s482 + $0x58] sm:$0xff]
        %v616 = vld [vmem:[%s482 + $0x60] sm:$0xff]
        %v617 = vld [vmem:[%s482 + $0x68] sm:$0xff]
        %v618 = vld [vmem:[%s482 + $0x70] sm:$0xff]
        %v619 = vld [vmem:[%s482 + $0x78] sm:$0xff]
        %v620 = vld [vmem:[%s482 + $0x80] sm:$0xff]
        %v621 = vld [vmem:[%s482 + $0x88] sm:$0xff]
        %v622 = vld [vmem:[%s482 + $0x90] sm:$0xff]
        %v623 = vld [vmem:[%s482 + $0x98] sm:$0xff]
        %v624 = vld [vmem:[%s482 + $0xa0] sm:$0xff]
        %v625 = vld [vmem:[%s482 + $0xa8] sm:$0xff]
        %v626 = vld [vmem:[%s482 + $0xb0] sm:$0xff]
        %v627 = vld [vmem:[%s482 + $0xb8] sm:$0xff]
        %v628 = vld [vmem:[%s482 + $0xc0] sm:$0xff]
        %v629 = vld [vmem:[%s482 + $0xc8] sm:$0xff]
        %v630 = vld [vmem:[%s482 + $0xd0] sm:$0xff]
        %v631 = vld [vmem:[%s482 + $0xd8] sm:$0xff]
        %v632 = vld [vmem:[%s482 + $0xe0] sm:$0xff]
        %v633 = vld [vmem:[%s482 + $0xe8] sm:$0xff]
        %v634 = vld [vmem:[%s482 + $0xf0] sm:$0xff]
        %v635 = vld [vmem:[%s482 + $0xf8] sm:$0xff]
        %s636 = sshra.s32 %s571, 3
        %s637 = sand.u32 %s571, 7
        %s638 = smul.addr %s636, 4
        %s639 = scalar_lea.vmem %s0, %s638
        %v640 = vld [vmem:[%s639] sm:$0xf]
        %v641 = vld [vmem:[%s639 + $0x4] sm:$0xf]
        %v642 = vld [vmem:[%s639 + $0x8] sm:$0xf]
        %v643 = vld [vmem:[%s639 + $0xc] sm:$0xf]
        %v644 = vld [vmem:[%s639 + $0x10] sm:$0xf]
        %v645 = vld [vmem:[%s639 + $0x14] sm:$0xf]
        %v646 = vld [vmem:[%s639 + $0x18] sm:$0xf]
        %v647 = vld [vmem:[%s639 + $0x1c] sm:$0xf]
        %v648 = vld [vmem:[%s639 + $0x20] sm:$0xf]
        %v649 = vld [vmem:[%s639 + $0x24] sm:$0xf]
        %v650 = vld [vmem:[%s639 + $0x28] sm:$0xf]
        %v651 = vld [vmem:[%s639 + $0x2c] sm:$0xf]
        %v652 = vld [vmem:[%s639 + $0x30] sm:$0xf]
        %v653 = vld [vmem:[%s639 + $0x34] sm:$0xf]
        %v654 = vld [vmem:[%s639 + $0x38] sm:$0xf]
        %v655 = vld [vmem:[%s639 + $0x3c] sm:$0xf]
        %v656 = vld [vmem:[%s639 + $0x40] sm:$0xf]
        %v657 = vld [vmem:[%s639 + $0x44] sm:$0xf]
        %v658 = vld [vmem:[%s639 + $0x48] sm:$0xf]
        %v659 = vld [vmem:[%s639 + $0x4c] sm:$0xf]
        %v660 = vld [vmem:[%s639 + $0x50] sm:$0xf]
        %v661 = vld [vmem:[%s639 + $0x54] sm:$0xf]
        %v662 = vld [vmem:[%s639 + $0x58] sm:$0xf]
        %v663 = vld [vmem:[%s639 + $0x5c] sm:$0xf]
        %v664 = vld [vmem:[%s639 + $0x60] sm:$0xf]
        %v665 = vld [vmem:[%s639 + $0x64] sm:$0xf]
        %v666 = vld [vmem:[%s639 + $0x68] sm:$0xf]
        %v667 = vld [vmem:[%s639 + $0x6c] sm:$0xf]
        %v668 = vld [vmem:[%s639 + $0x70] sm:$0xf]
        %v669 = vld [vmem:[%s639 + $0x74] sm:$0xf]
        %v670 = vld [vmem:[%s639 + $0x78] sm:$0xf]
        %v671 = vld [vmem:[%s639 + $0x7c] sm:$0xf]
        %v704 = vunpack.c.l.b16 %v604
        %v705 = vunpack.c.h.b16 %v604
        %v706 = vunpack.c.l.b16 %v605
        %v707 = vunpack.c.h.b16 %v605
        %v708 = vunpack.c.l.b16 %v606
        %v709 = vunpack.c.h.b16 %v606
        %v710 = vunpack.c.l.b16 %v607
        %v711 = vunpack.c.h.b16 %v607
        %v712 = vunpack.c.l.b16 %v608
        %v713 = vunpack.c.h.b16 %v608
        %v714 = vunpack.c.l.b16 %v609
        %v715 = vunpack.c.h.b16 %v609
        %v716 = vunpack.c.l.b16 %v610
        %v717 = vunpack.c.h.b16 %v610
        %v718 = vunpack.c.l.b16 %v611
        %v719 = vunpack.c.h.b16 %v611
        %v720 = vunpack.c.l.b16 %v612
        %v721 = vunpack.c.h.b16 %v612
        %v722 = vunpack.c.l.b16 %v613
        %v723 = vunpack.c.h.b16 %v613
        %v724 = vunpack.c.l.b16 %v614
        %v725 = vunpack.c.h.b16 %v614
        %v726 = vunpack.c.l.b16 %v615
        %v727 = vunpack.c.h.b16 %v615
        %v728 = vunpack.c.l.b16 %v616
        %v729 = vunpack.c.h.b16 %v616
        %v730 = vunpack.c.l.b16 %v617
        %v731 = vunpack.c.h.b16 %v617
        %v732 = vunpack.c.l.b16 %v618
        %v733 = vunpack.c.h.b16 %v618
        %v734 = vunpack.c.l.b16 %v619
        %v735 = vunpack.c.h.b16 %v619
        %v736 = vunpack.c.l.b16 %v620
        %v737 = vunpack.c.h.b16 %v620
        %v738 = vunpack.c.l.b16 %v621
        %v739 = vunpack.c.h.b16 %v621
        %v740 = vunpack.c.l.b16 %v622
        %v741 = vunpack.c.h.b16 %v622
        %v742 = vunpack.c.l.b16 %v623
        %v743 = vunpack.c.h.b16 %v623
        %v744 = vunpack.c.l.b16 %v624
        %v745 = vunpack.c.h.b16 %v624
        %v746 = vunpack.c.l.b16 %v625
        %v747 = vunpack.c.h.b16 %v625
        %v748 = vunpack.c.l.b16 %v626
        %v749 = vunpack.c.h.b16 %v626
        %v750 = vunpack.c.l.b16 %v627
        %v751 = vunpack.c.h.b16 %v627
        %v752 = vunpack.c.l.b16 %v628
        %v753 = vunpack.c.h.b16 %v628
        %v754 = vunpack.c.l.b16 %v629
        %v755 = vunpack.c.h.b16 %v629
        %v756 = vunpack.c.l.b16 %v630
        %v757 = vunpack.c.h.b16 %v630
        %v758 = vunpack.c.l.b16 %v631
        %v759 = vunpack.c.h.b16 %v631
        %v760 = vunpack.c.l.b16 %v632
        %v761 = vunpack.c.h.b16 %v632
        %v762 = vunpack.c.l.b16 %v633
        %v763 = vunpack.c.h.b16 %v633
        %v764 = vunpack.c.l.b16 %v634
        %v765 = vunpack.c.h.b16 %v634
        %v766 = vunpack.c.l.b16 %v635
        %v767 = vunpack.c.h.b16 %v635
        %v768 = vpack.c.b16 %v706, %v704
        %v769 = vpack.c.b16 %v707, %v705
        %v770 = vpack.c.b16 %v710, %v708
        %v771 = vpack.c.b16 %v711, %v709
        %v772 = vpack.c.b16 %v714, %v712
        %v773 = vpack.c.b16 %v715, %v713
        %v774 = vpack.c.b16 %v718, %v716
        %v775 = vpack.c.b16 %v719, %v717
        %v776 = vpack.c.b16 %v722, %v720
        %v777 = vpack.c.b16 %v723, %v721
        %v778 = vpack.c.b16 %v726, %v724
        %v779 = vpack.c.b16 %v727, %v725
        %v780 = vpack.c.b16 %v730, %v728
        %v781 = vpack.c.b16 %v731, %v729
        %v782 = vpack.c.b16 %v734, %v732
        %v783 = vpack.c.b16 %v735, %v733
        %v784 = vpack.c.b16 %v738, %v736
        %v785 = vpack.c.b16 %v739, %v737
        %v786 = vpack.c.b16 %v742, %v740
        %v787 = vpack.c.b16 %v743, %v741
        %v788 = vpack.c.b16 %v746, %v744
        %v789 = vpack.c.b16 %v747, %v745
        %v790 = vpack.c.b16 %v750, %v748
        %v791 = vpack.c.b16 %v751, %v749
        %v792 = vpack.c.b16 %v754, %v752
        %v793 = vpack.c.b16 %v755, %v753
        %v794 = vpack.c.b16 %v758, %v756
        %v795 = vpack.c.b16 %v759, %v757
        %v796 = vpack.c.b16 %v762, %v760
        %v797 = vpack.c.b16 %v763, %v761
        %v798 = vpack.c.b16 %v766, %v764
        %v799 = vpack.c.b16 %v767, %v765
        %v864 = vunpack.c.l.b16 %v640
        %v865 = vunpack.c.l.b16 %v641
        %v866 = vunpack.c.l.b16 %v642
        %v867 = vunpack.c.l.b16 %v643
        %v868 = vunpack.c.l.b16 %v644
        %v869 = vunpack.c.l.b16 %v645
        %v870 = vunpack.c.l.b16 %v646
        %v871 = vunpack.c.l.b16 %v647
        %v872 = vunpack.c.l.b16 %v648
        %v873 = vunpack.c.l.b16 %v649
        %v874 = vunpack.c.l.b16 %v650
        %v875 = vunpack.c.l.b16 %v651
        %v876 = vunpack.c.l.b16 %v652
        %v877 = vunpack.c.l.b16 %v653
        %v878 = vunpack.c.l.b16 %v654
        %v879 = vunpack.c.l.b16 %v655
        %v880 = vunpack.c.l.b16 %v656
        %v881 = vunpack.c.l.b16 %v657
        %v882 = vunpack.c.l.b16 %v658
        %v883 = vunpack.c.l.b16 %v659
        %v884 = vunpack.c.l.b16 %v660
        %v885 = vunpack.c.l.b16 %v661
        %v886 = vunpack.c.l.b16 %v662
        %v887 = vunpack.c.l.b16 %v663
        %v888 = vunpack.c.l.b16 %v664
        %v889 = vunpack.c.l.b16 %v665
        %v890 = vunpack.c.l.b16 %v666
        %v891 = vunpack.c.l.b16 %v667
        %v892 = vunpack.c.l.b16 %v668
        %v893 = vunpack.c.l.b16 %v669
        %v894 = vunpack.c.l.b16 %v670
        %v895 = vunpack.c.l.b16 %v671
        %v896 = vpack.c.b16 %v865, %v864
        %v897 = vpack.c.b16 %v867, %v866
        %v898 = vpack.c.b16 %v869, %v868
        %v899 = vpack.c.b16 %v871, %v870
        %v900 = vpack.c.b16 %v873, %v872
        %v901 = vpack.c.b16 %v875, %v874
        %v902 = vpack.c.b16 %v877, %v876
        %v903 = vpack.c.b16 %v879, %v878
        %v904 = vpack.c.b16 %v881, %v880
        %v905 = vpack.c.b16 %v883, %v882
        %v906 = vpack.c.b16 %v885, %v884
        %v907 = vpack.c.b16 %v887, %v886
        %v908 = vpack.c.b16 %v889, %v888
        %v909 = vpack.c.b16 %v891, %v890
        %v910 = vpack.c.b16 %v893, %v892
        %v911 = vpack.c.b16 %v895, %v894
        %928 = vmatprep.subr.bf16.mxu0 0
        %929 = vmatpush1.bf16.msra.mxu0 %v896
        %930 = vmatprep.subr.bf16.mxu0 0
        %931 = vmatpush1.bf16.msra.mxu0 %v897
        %932 = vmatprep.subr.bf16.mxu0 0
        %933 = vmatpush1.bf16.msra.mxu0 %v898
        %934 = vmatprep.subr.bf16.mxu0 0
        %935 = vmatpush1.bf16.msra.mxu0 %v899
        %936 = vmatprep.subr.bf16.mxu0 0
        %937 = vmatpush1.bf16.msra.mxu0 %v900
        %938 = vmatprep.subr.bf16.mxu0 0
        %939 = vmatpush1.bf16.msra.mxu0 %v901
        %940 = vmatprep.subr.bf16.mxu0 0
        %941 = vmatpush1.bf16.msra.mxu0 %v902
        %942 = vmatprep.subr.bf16.mxu0 0
        %943 = vmatpush1.bf16.msra.mxu0 %v903
        %944 = vmatprep.subr.bf16.mxu0 0
        %945 = vmatpush1.bf16.msra.mxu0 %v904
        %946 = vmatprep.subr.bf16.mxu0 0
        %947 = vmatpush1.bf16.msra.mxu0 %v905
        %948 = vmatprep.subr.bf16.mxu0 0
        %949 = vmatpush1.bf16.msra.mxu0 %v906
        %950 = vmatprep.subr.bf16.mxu0 0
        %951 = vmatpush1.bf16.msra.mxu0 %v907
        %952 = vmatprep.subr.bf16.mxu0 0
        %953 = vmatpush1.bf16.msra.mxu0 %v908
        %954 = vmatprep.subr.bf16.mxu0 0
        %955 = vmatpush1.bf16.msra.mxu0 %v909
        %956 = vmatprep.subr.bf16.mxu0 0
        %957 = vmatpush1.bf16.msra.mxu0 %v910
        %958 = vmatprep.subr.bf16.mxu0 0
        %959 = vmatpush1.bf16.msra.mxu0 %v911
        %960 = vmatprep.mubr.bf16.mxu0 %v769
        %961 = vmatmul.mubr.bf16.gmra.mrb[0].mxu0 %v768
        %v962 = vpop.f32.mrb[0].mxu0
        %v963 = vadd.f32 0.0, %v962
        %v964 = vpop.f32.mrb[0].mxu0
        %v965 = vpop.f32.mrb[0].mxu0
        %v966 = vadd.f32 0.0, %v965
        %v967 = vpop.f32.mrb[0].mxu0
        %968 = vmatprep.mubr.bf16.mxu0 %v771
        %969 = vmatmul.mubr.bf16.gmra.mrb[0].mxu0 %v770
        %v970 = vpop.f32.mrb[0].mxu0
        %v971 = vadd.f32 0.0, %v970
        %v972 = vpop.f32.mrb[0].mxu0
        %v973 = vpop.f32.mrb[0].mxu0
        %v974 = vadd.f32 0.0, %v973
        %v975 = vpop.f32.mrb[0].mxu0
        %976 = vmatprep.mubr.bf16.mxu0 %v773
        %977 = vmatmul.mubr.bf16.gmra.mrb[0].mxu0 %v772
        %v978 = vpop.f32.mrb[0].mxu0
        %v979 = vadd.f32 0.0, %v978
        %v980 = vpop.f32.mrb[0].mxu0
        %v981 = vpop.f32.mrb[0].mxu0
        %v982 = vadd.f32 0.0, %v981
        %v983 = vpop.f32.mrb[0].mxu0
        %984 = vmatprep.mubr.bf16.mxu0 %v775
        %985 = vmatmul.mubr.bf16.gmra.mrb[0].mxu0 %v774
        %v986 = vpop.f32.mrb[0].mxu0
        %v987 = vadd.f32 0.0, %v986
        %v988 = vpop.f32.mrb[0].mxu0
        %v989 = vpop.f32.mrb[0].mxu0
        %v990 = vadd.f32 0.0, %v989
        %v991 = vpop.f32.mrb[0].mxu0
        %992 = vmatprep.mubr.bf16.mxu0 %v777
        %993 = vmatmul.mubr.bf16.gmra.mrb[0].mxu0 %v776
        %v994 = vpop.f32.mrb[0].mxu0
        %v995 = vadd.f32 0.0, %v994
        %v996 = vpop.f32.mrb[0].mxu0
        %v997 = vpop.f32.mrb[0].mxu0
        %v998 = vadd.f32 0.0, %v997
        %v999 = vpop.f32.mrb[0].mxu0
        %1000 = vmatprep.mubr.bf16.mxu0 %v779
        %1001 = vmatmul.mubr.bf16.gmra.mrb[0].mxu0 %v778
        %v1002 = vpop.f32.mrb[0].mxu0
        %v1003 = vadd.f32 0.0, %v1002
        %v1004 = vpop.f32.mrb[0].mxu0
        %v1005 = vpop.f32.mrb[0].mxu0
        %v1006 = vadd.f32 0.0, %v1005
        %v1007 = vpop.f32.mrb[0].mxu0
        %1008 = vmatprep.mubr.bf16.mxu0 %v781
        %1009 = vmatmul.mubr.bf16.gmra.mrb[0].mxu0 %v780
        %v1010 = vpop.f32.mrb[0].mxu0
        %v1011 = vadd.f32 0.0, %v1010
        %v1012 = vpop.f32.mrb[0].mxu0
        %v1013 = vpop.f32.mrb[0].mxu0
        %v1014 = vadd.f32 0.0, %v1013
        %v1015 = vpop.f32.mrb[0].mxu0
        %1016 = vmatprep.mubr.bf16.mxu0 %v783
        %1017 = vmatmul.mubr.bf16.gmra.mrb[0].mxu0 %v782
        %v1018 = vpop.f32.mrb[0].mxu0
        %v1019 = vadd.f32 0.0, %v1018
        %v1020 = vpop.f32.mrb[0].mxu0
        %v1021 = vpop.f32.mrb[0].mxu0
        %v1022 = vadd.f32 0.0, %v1021
        %v1023 = vpop.f32.mrb[0].mxu0
        %1024 = vmatprep.mubr.bf16.mxu0 %v785
        %1025 = vmatmul.mubr.bf16.gmra.mrb[0].mxu0 %v784
        %v1026 = vpop.f32.mrb[0].mxu0
        %v1027 = vadd.f32 0.0, %v1026
        %v1028 = vpop.f32.mrb[0].mxu0
        %v1029 = vpop.f32.mrb[0].mxu0
        %v1030 = vadd.f32 0.0, %v1029
        %v1031 = vpop.f32.mrb[0].mxu0
        %1032 = vmatprep.mubr.bf16.mxu0 %v787
        %1033 = vmatmul.mubr.bf16.gmra.mrb[0].mxu0 %v786
        %v1034 = vpop.f32.mrb[0].mxu0
        %v1035 = vadd.f32 0.0, %v1034
        %v1036 = vpop.f32.mrb[0].mxu0
        %v1037 = vpop.f32.mrb[0].mxu0
        %v1038 = vadd.f32 0.0, %v1037
        %v1039 = vpop.f32.mrb[0].mxu0
        %1040 = vmatprep.mubr.bf16.mxu0 %v789
        %1041 = vmatmul.mubr.bf16.gmra.mrb[0].mxu0 %v788
        %v1042 = vpop.f32.mrb[0].mxu0
        %v1043 = vadd.f32 0.0, %v1042
        %v1044 = vpop.f32.mrb[0].mxu0
        %v1045 = vpop.f32.mrb[0].mxu0
        %v1046 = vadd.f32 0.0, %v1045
        %v1047 = vpop.f32.mrb[0].mxu0
        %1048 = vmatprep.mubr.bf16.mxu0 %v791
        %1049 = vmatmul.mubr.bf16.gmra.mrb[0].mxu0 %v790
        %v1050 = vpop.f32.mrb[0].mxu0
        %v1051 = vadd.f32 0.0, %v1050
        %v1052 = vpop.f32.mrb[0].mxu0
        %v1053 = vpop.f32.mrb[0].mxu0
        %v1054 = vadd.f32 0.0, %v1053
        %v1055 = vpop.f32.mrb[0].mxu0
        %1056 = vmatprep.mubr.bf16.mxu0 %v793
        %1057 = vmatmul.mubr.bf16.gmra.mrb[0].mxu0 %v792
        %v1058 = vpop.f32.mrb[0].mxu0
        %v1059 = vadd.f32 0.0, %v1058
        %v1060 = vpop.f32.mrb[0].mxu0
        %v1061 = vpop.f32.mrb[0].mxu0
        %v1062 = vadd.f32 0.0, %v1061
        %v1063 = vpop.f32.mrb[0].mxu0
        %1064 = vmatprep.mubr.bf16.mxu0 %v795
        %1065 = vmatmul.mubr.bf16.gmra.mrb[0].mxu0 %v794
        %v1066 = vpop.f32.mrb[0].mxu0
        %v1067 = vadd.f32 0.0, %v1066
        %v1068 = vpop.f32.mrb[0].mxu0
        %v1069 = vpop.f32.mrb[0].mxu0
        %v1070 = vadd.f32 0.0, %v1069
        %v1071 = vpop.f32.mrb[0].mxu0
        %1072 = vmatprep.mubr.bf16.mxu0 %v797
        %1073 = vmatmul.mubr.bf16.gmra.mrb[0].mxu0 %v796
        %v1074 = vpop.f32.mrb[0].mxu0
        %v1075 = vadd.f32 0.0, %v1074
        %v1076 = vpop.f32.mrb[0].mxu0
        %v1077 = vpop.f32.mrb[0].mxu0
        %v1078 = vadd.f32 0.0, %v1077
        %v1079 = vpop.f32.mrb[0].mxu0
        %1080 = vmatprep.mubr.bf16.mxu0 %v799
        %1081 = vmatmul.mubr.bf16.gmra.mrb[0].mxu0 %v798
        %v1082 = vpop.f32.mrb[0].mxu0
        %v1083 = vadd.f32 0.0, %v1082
        %v1084 = vpop.f32.mrb[0].mxu0
        %v1085 = vpop.f32.mrb[0].mxu0
        %v1086 = vadd.f32 0.0, %v1085
        %v1087 = vpop.f32.mrb[0].mxu0
        %1088 = vdwg.mxu0
        %v1089 = vadd.f32 %v572, %v963
        %v1090 = vadd.f32 %v573, %v966
        %v1091 = vadd.f32 %v574, %v971
        %v1092 = vadd.f32 %v575, %v974
        %v1093 = vadd.f32 %v576, %v979
        %v1094 = vadd.f32 %v577, %v982
        %v1095 = vadd.f32 %v578, %v987
        %v1096 = vadd.f32 %v579, %v990
        %v1097 = vadd.f32 %v580, %v995
        %v1098 = vadd.f32 %v581, %v998
        %v1099 = vadd.f32 %v582, %v1003
        %v1100 = vadd.f32 %v583, %v1006
        %v1101 = vadd.f32 %v584, %v1011
        %v1102 = vadd.f32 %v585, %v1014
        %v1103 = vadd.f32 %v586, %v1019
        %v1104 = vadd.f32 %v587, %v1022
        %v1105 = vadd.f32 %v588, %v1027
        %v1106 = vadd.f32 %v589, %v1030
        %v1107 = vadd.f32 %v590, %v1035
        %v1108 = vadd.f32 %v591, %v1038
        %v1109 = vadd.f32 %v592, %v1043
        %v1110 = vadd.f32 %v593, %v1046
        %v1111 = vadd.f32 %v594, %v1051
        %v1112 = vadd.f32 %v595, %v1054
        %v1113 = vadd.f32 %v596, %v1059
        %v1114 = vadd.f32 %v597, %v1062
        %v1115 = vadd.f32 %v598, %v1067
        %v1116 = vadd.f32 %v599, %v1070
        %v1117 = vadd.f32 %v600, %v1075
        %v1118 = vadd.f32 %v601, %v1078
        %v1119 = vadd.f32 %v602, %v1083
        %v1120 = vadd.f32 %v603, %v1086
        %1121 = vst [vmem:[#allocation2] sm:$0xff] %v1089
        %1122 = vst [vmem:[#allocation2 + $0x8] sm:$0xff] %v1090
        %1123 = vst [vmem:[#allocation2 + $0x10] sm:$0xff] %v1091
        %1124 = vst [vmem:[#allocation2 + $0x18] sm:$0xff] %v1092
        %1125 = vst [vmem:[#allocation2 + $0x20] sm:$0xff] %v1093
        %1126 = vst [vmem:[#allocation2 + $0x28] sm:$0xff] %v1094
        %1127 = vst [vmem:[#allocation2 + $0x30] sm:$0xff] %v1095
        %1128 = vst [vmem:[#allocation2 + $0x38] sm:$0xff] %v1096
        %1129 = vst [vmem:[#allocation2 + $0x40] sm:$0xff] %v1097
        %1130 = vst [vmem:[#allocation2 + $0x48] sm:$0xff] %v1098
        %1131 = vst [vmem:[#allocation2 + $0x50] sm:$0xff] %v1099
        %1132 = vst [vmem:[#allocation2 + $0x58] sm:$0xff] %v1100
        %1133 = vst [vmem:[#allocation2 + $0x60] sm:$0xff] %v1101
        %1134 = vst [vmem:[#allocation2 + $0x68] sm:$0xff] %v1102
        %1135 = vst [vmem:[#allocation2 + $0x70] sm:$0xff] %v1103
        %1136 = vst [vmem:[#allocation2 + $0x78] sm:$0xff] %v1104
        %1137 = vst [vmem:[#allocation2 + $0x80] sm:$0xff] %v1105
        %1138 = vst [vmem:[#allocation2 + $0x88] sm:$0xff] %v1106
        %1139 = vst [vmem:[#allocation2 + $0x90] sm:$0xff] %v1107
        %1140 = vst [vmem:[#allocation2 + $0x98] sm:$0xff] %v1108
        %1141 = vst [vmem:[#allocation2 + $0xa0] sm:$0xff] %v1109
        %1142 = vst [vmem:[#allocation2 + $0xa8] sm:$0xff] %v1110
        %1143 = vst [vmem:[#allocation2 + $0xb0] sm:$0xff] %v1111
        %1144 = vst [vmem:[#allocation2 + $0xb8] sm:$0xff] %v1112
        %1145 = vst [vmem:[#allocation2 + $0xc0] sm:$0xff] %v1113
        %1146 = vst [vmem:[#allocation2 + $0xc8] sm:$0xff] %v1114
        %1147 = vst [vmem:[#allocation2 + $0xd0] sm:$0xff] %v1115
        %1148 = vst [vmem:[#allocation2 + $0xd8] sm:$0xff] %v1116
        %1149 = vst [vmem:[#allocation2 + $0xe0] sm:$0xff] %v1117
        %1150 = vst [vmem:[#allocation2 + $0xe8] sm:$0xff] %v1118
        %1151 = vst [vmem:[#allocation2 + $0xf0] sm:$0xff] %v1119
        %1152 = vst [vmem:[#allocation2 + $0xf8] sm:$0xff] %v1120
        %p1153 = scmp.eq.s32.totalorder %s25, 1
        // Predicated region
        $region99: #{bright_a_forward.11} parent=89 // pred_check
          %p1154 = pneg %p1153
        $region100: #{bright_a_forward.11} parent=89 // pred_check_branch
          %1156 = sbr.rel (%p1154) target = $region102
        $region101: #{bright_a_forward.11} parent=89 // pred_region
          %v1157 = vld [vmem:[#allocation2] sm:$0xff]
          %v1158 = vld [vmem:[#allocation2 + $0x8] sm:$0xff]
          %v1159 = vld [vmem:[#allocation2 + $0x10] sm:$0xff]
          %v1160 = vld [vmem:[#allocation2 + $0x18] sm:$0xff]
          %v1161 = vld [vmem:[#allocation2 + $0x20] sm:$0xff]
          %v1162 = vld [vmem:[#allocation2 + $0x28] sm:$0xff]
          %v1163 = vld [vmem:[#allocation2 + $0x30] sm:$0xff]
          %v1164 = vld [vmem:[#allocation2 + $0x38] sm:$0xff]
          %v1165 = vld [vmem:[#allocation2 + $0x40] sm:$0xff]
          %v1166 = vld [vmem:[#allocation2 + $0x48] sm:$0xff]
          %v1167 = vld [vmem:[#allocation2 + $0x50] sm:$0xff]
          %v1168 = vld [vmem:[#allocation2 + $0x58] sm:$0xff]
          %v1169 = vld [vmem:[#allocation2 + $0x60] sm:$0xff]
          %v1170 = vld [vmem:[#allocation2 + $0x68] sm:$0xff]
          %v1171 = vld [vmem:[#allocation2 + $0x70] sm:$0xff]
          %v1172 = vld [vmem:[#allocation2 + $0x78] sm:$0xff]
          %v1173 = vld [vmem:[#allocation2 + $0x80] sm:$0xff]
          %v1174 = vld [vmem:[#allocation2 + $0x88] sm:$0xff]
          %v1175 = vld [vmem:[#allocation2 + $0x90] sm:$0xff]
          %v1176 = vld [vmem:[#allocation2 + $0x98] sm:$0xff]
          %v1177 = vld [vmem:[#allocation2 + $0xa0] sm:$0xff]
          %v1178 = vld [vmem:[#allocation2 + $0xa8] sm:$0xff]
          %v1179 = vld [vmem:[#allocation2 + $0xb0] sm:$0xff]
          %v1180 = vld [vmem:[#allocation2 + $0xb8] sm:$0xff]
          %v1181 = vld [vmem:[#allocation2 + $0xc0] sm:$0xff]
          %v1182 = vld [vmem:[#allocation2 + $0xc8] sm:$0xff]
          %v1183 = vld [vmem:[#allocation2 + $0xd0] sm:$0xff]
          %v1184 = vld [vmem:[#allocation2 + $0xd8] sm:$0xff]
          %v1185 = vld [vmem:[#allocation2 + $0xe0] sm:$0xff]
          %v1186 = vld [vmem:[#allocation2 + $0xe8] sm:$0xff]
          %v1187 = vld [vmem:[#allocation2 + $0xf0] sm:$0xff]
          %v1188 = vld [vmem:[#allocation2 + $0xf8] sm:$0xff]
          %v1189 = vld [vmem:[%s5] sm:$0x1]
          %v1191 = vlaneseq
          %v1192 = vshrl.u32 %v1191, 7
          %v1193 = vsub.s32 0, %v1192
          %v1194 = vrot.slane %v1189, %v1193
          %v1196 = vadd.f32 %v1157, %v1194
          %v1197 = vadd.f32 %v1158, %v1194
          %v1198 = vadd.f32 %v1159, %v1194
          %v1199 = vadd.f32 %v1160, %v1194
          %v1200 = vadd.f32 %v1161, %v1194
          %v1201 = vadd.f32 %v1162, %v1194
          %v1202 = vadd.f32 %v1163, %v1194
          %v1203 = vadd.f32 %v1164, %v1194
          %v1204 = vadd.f32 %v1165, %v1194
          %v1205 = vadd.f32 %v1166, %v1194
          %v1206 = vadd.f32 %v1167, %v1194
          %v1207 = vadd.f32 %v1168, %v1194
          %v1208 = vadd.f32 %v1169, %v1194
          %v1209 = vadd.f32 %v1170, %v1194
          %v1210 = vadd.f32 %v1171, %v1194
          %v1211 = vadd.f32 %v1172, %v1194
          %v1212 = vadd.f32 %v1173, %v1194
          %v1213 = vadd.f32 %v1174, %v1194
          %v1214 = vadd.f32 %v1175, %v1194
          %v1215 = vadd.f32 %v1176, %v1194
          %v1216 = vadd.f32 %v1177, %v1194
          %v1217 = vadd.f32 %v1178, %v1194
          %v1218 = vadd.f32 %v1179, %v1194
          %v1219 = vadd.f32 %v1180, %v1194
          %v1220 = vadd.f32 %v1181, %v1194
          %v1221 = vadd.f32 %v1182, %v1194
          %v1222 = vadd.f32 %v1183, %v1194
          %v1223 = vadd.f32 %v1184, %v1194
          %v1224 = vadd.f32 %v1185, %v1194
          %v1225 = vadd.f32 %v1186, %v1194
          %v1226 = vadd.f32 %v1187, %v1194
          %v1227 = vadd.f32 %v1188, %v1194
          %v1228 = vld [vmem:[%s526] sm:$0xf]
          %v1229 = vld [vmem:[%s526 + $0x4] sm:$0xf]
          %v1230 = vld [vmem:[%s526 + $0x8] sm:$0xf]
          %v1231 = vld [vmem:[%s526 + $0xc] sm:$0xf]
          %v1232 = vld [vmem:[%s526 + $0x10] sm:$0xf]
          %v1233 = vld [vmem:[%s526 + $0x14] sm:$0xf]
          %v1234 = vld [vmem:[%s526 + $0x18] sm:$0xf]
          %v1235 = vld [vmem:[%s526 + $0x1c] sm:$0xf]
          %v1236 = vld [vmem:[%s526 + $0x20] sm:$0xf]
          %v1237 = vld [vmem:[%s526 + $0x24] sm:$0xf]
          %v1238 = vld [vmem:[%s526 + $0x28] sm:$0xf]
          %v1239 = vld [vmem:[%s526 + $0x2c] sm:$0xf]
          %v1240 = vld [vmem:[%s526 + $0x30] sm:$0xf]
          %v1241 = vld [vmem:[%s526 + $0x34] sm:$0xf]
          %v1242 = vld [vmem:[%s526 + $0x38] sm:$0xf]
          %v1243 = vld [vmem:[%s526 + $0x3c] sm:$0xf]
          %v1244 = vld [vmem:[%s526 + $0x40] sm:$0xf]
          %v1245 = vld [vmem:[%s526 + $0x44] sm:$0xf]
          %v1246 = vld [vmem:[%s526 + $0x48] sm:$0xf]
          %v1247 = vld [vmem:[%s526 + $0x4c] sm:$0xf]
          %v1248 = vld [vmem:[%s526 + $0x50] sm:$0xf]
          %v1249 = vld [vmem:[%s526 + $0x54] sm:$0xf]
          %v1250 = vld [vmem:[%s526 + $0x58] sm:$0xf]
          %v1251 = vld [vmem:[%s526 + $0x5c] sm:$0xf]
          %v1252 = vld [vmem:[%s526 + $0x60] sm:$0xf]
          %v1253 = vld [vmem:[%s526 + $0x64] sm:$0xf]
          %v1254 = vld [vmem:[%s526 + $0x68] sm:$0xf]
          %v1255 = vld [vmem:[%s526 + $0x6c] sm:$0xf]
          %v1256 = vld [vmem:[%s526 + $0x70] sm:$0xf]
          %v1257 = vld [vmem:[%s526 + $0x74] sm:$0xf]
          %v1258 = vld [vmem:[%s526 + $0x78] sm:$0xf]
          %v1259 = vld [vmem:[%s526 + $0x7c] sm:$0xf]
          %v1260 = vld [vmem:[%s3] sm:$0xf]
          %v1261 = vld [vmem:[%s3 + $0x4] sm:$0xf]
          %v1262 = vld [vmem:[%s3 + $0x8] sm:$0xf]
          %v1263 = vld [vmem:[%s3 + $0xc] sm:$0xf]
          %v1264 = vld [vmem:[%s3 + $0x10] sm:$0xf]
          %v1265 = vld [vmem:[%s3 + $0x14] sm:$0xf]
          %v1266 = vld [vmem:[%s3 + $0x18] sm:$0xf]
          %v1267 = vld [vmem:[%s3 + $0x1c] sm:$0xf]
          %v1268 = vld [vmem:[%s3 + $0x20] sm:$0xf]
          %v1269 = vld [vmem:[%s3 + $0x24] sm:$0xf]
          %v1270 = vld [vmem:[%s3 + $0x28] sm:$0xf]
          %v1271 = vld [vmem:[%s3 + $0x2c] sm:$0xf]
          %v1272 = vld [vmem:[%s3 + $0x30] sm:$0xf]
          %v1273 = vld [vmem:[%s3 + $0x34] sm:$0xf]
          %v1274 = vld [vmem:[%s3 + $0x38] sm:$0xf]
          %v1275 = vld [vmem:[%s3 + $0x3c] sm:$0xf]
          %v1276 = vld [vmem:[%s4] sm:$0x1]
          %v1278 = vlaneseq
          %v1279 = vshrl.u32 %v1278, 7
          %v1280 = vsub.s32 0, %v1279
          %v1281 = vrot.slane %v1276, %v1280
          %v1315 = vunpack.c.l.b16 %v1228
          %v1316 = vunpack.c.l.b16 %v1229
          %v1317 = vunpack.c.l.b16 %v1230
          %v1318 = vunpack.c.l.b16 %v1231
          %v1319 = vunpack.c.l.b16 %v1232
          %v1320 = vunpack.c.l.b16 %v1233
          %v1321 = vunpack.c.l.b16 %v1234
          %v1322 = vunpack.c.l.b16 %v1235
          %v1323 = vunpack.c.l.b16 %v1236
          %v1324 = vunpack.c.l.b16 %v1237
          %v1325 = vunpack.c.l.b16 %v1238
          %v1326 = vunpack.c.l.b16 %v1239
          %v1327 = vunpack.c.l.b16 %v1240
          %v1328 = vunpack.c.l.b16 %v1241
          %v1329 = vunpack.c.l.b16 %v1242
          %v1330 = vunpack.c.l.b16 %v1243
          %v1331 = vunpack.c.l.b16 %v1244
          %v1332 = vunpack.c.l.b16 %v1245
          %v1333 = vunpack.c.l.b16 %v1246
          %v1334 = vunpack.c.l.b16 %v1247
          %v1335 = vunpack.c.l.b16 %v1248
          %v1336 = vunpack.c.l.b16 %v1249
          %v1337 = vunpack.c.l.b16 %v1250
          %v1338 = vunpack.c.l.b16 %v1251
          %v1339 = vunpack.c.l.b16 %v1252
          %v1340 = vunpack.c.l.b16 %v1253
          %v1341 = vunpack.c.l.b16 %v1254
          %v1342 = vunpack.c.l.b16 %v1255
          %v1343 = vunpack.c.l.b16 %v1256
          %v1344 = vunpack.c.l.b16 %v1257
          %v1345 = vunpack.c.l.b16 %v1258
          %v1346 = vunpack.c.l.b16 %v1259
          %v1347 = vpack.c.b16 %v1316, %v1315
          %v1348 = vpack.c.b16 %v1318, %v1317
          %v1349 = vpack.c.b16 %v1320, %v1319
          %v1350 = vpack.c.b16 %v1322, %v1321
          %v1351 = vpack.c.b16 %v1324, %v1323
          %v1352 = vpack.c.b16 %v1326, %v1325
          %v1353 = vpack.c.b16 %v1328, %v1327
          %v1354 = vpack.c.b16 %v1330, %v1329
          %v1355 = vpack.c.b16 %v1332, %v1331
          %v1356 = vpack.c.b16 %v1334, %v1333
          %v1357 = vpack.c.b16 %v1336, %v1335
          %v1358 = vpack.c.b16 %v1338, %v1337
          %v1359 = vpack.c.b16 %v1340, %v1339
          %v1360 = vpack.c.b16 %v1342, %v1341
          %v1361 = vpack.c.b16 %v1344, %v1343
          %v1362 = vpack.c.b16 %v1346, %v1345
          %v1395 = vunpack.c.l.b16 %v1260
          %v1396 = vunpack.c.l.b16 %v1261
          %v1397 = vunpack.c.l.b16 %v1262
          %v1398 = vunpack.c.l.b16 %v1263
          %v1399 = vunpack.c.l.b16 %v1264
          %v1400 = vunpack.c.l.b16 %v1265
          %v1401 = vunpack.c.l.b16 %v1266
          %v1402 = vunpack.c.l.b16 %v1267
          %v1403 = vunpack.c.l.b16 %v1268
          %v1404 = vunpack.c.l.b16 %v1269
          %v1405 = vunpack.c.l.b16 %v1270
          %v1406 = vunpack.c.l.b16 %v1271
          %v1407 = vunpack.c.l.b16 %v1272
          %v1408 = vunpack.c.l.b16 %v1273
          %v1409 = vunpack.c.l.b16 %v1274
          %v1410 = vunpack.c.l.b16 %v1275
          %v1411 = vpack.c.b16 %v1396, %v1395
          %v1412 = vpack.c.b16 %v1398, %v1397
          %v1413 = vpack.c.b16 %v1400, %v1399
          %v1414 = vpack.c.b16 %v1402, %v1401
          %v1415 = vpack.c.b16 %v1404, %v1403
          %v1416 = vpack.c.b16 %v1406, %v1405
          %v1417 = vpack.c.b16 %v1408, %v1407
          %v1418 = vpack.c.b16 %v1410, %v1409
          %1427 = vmatprep.subr.bf16.mxu0 0
          %1428 = vmatpush1.bf16.msra.mxu0 %v1411
          %1429 = vmatprep.subr.bf16.mxu0 0
          %1430 = vmatpush1.bf16.msra.mxu0 %v1412
          %1431 = vmatprep.subr.bf16.mxu0 0
          %1432 = vmatpush1.bf16.msra.mxu0 %v1413
          %1433 = vmatprep.subr.bf16.mxu0 0
          %1434 = vmatpush1.bf16.msra.mxu0 %v1414
          %1435 = vmatprep.subr.bf16.mxu0 0
          %1436 = vmatpush1.bf16.msra.mxu0 %v1415
          %1437 = vmatprep.subr.bf16.mxu0 0
          %1438 = vmatpush1.bf16.msra.mxu0 %v1416
          %1439 = vmatprep.subr.bf16.mxu0 0
          %1440 = vmatpush1.bf16.msra.mxu0 %v1417
          %1441 = vmatprep.subr.bf16.mxu0 0
          %1442 = vmatpush1.bf16.msra.mxu0 %v1418
          %1443 = vmatprep.subr.bf16.mxu0 0
          %1444 = vmatpush1.bf16.msra.mxu0 0
          %1445 = vmatprep.subr.bf16.mxu0 0
          %1446 = vmatpush1.bf16.msra.mxu0 0
          %1447 = vmatprep.subr.bf16.mxu0 0
          %1448 = vmatpush1.bf16.msra.mxu0 0
          %1449 = vmatprep.subr.bf16.mxu0 0
          %1450 = vmatpush1.bf16.msra.mxu0 0
          %1451 = vmatprep.subr.bf16.mxu0 0
          %1452 = vmatpush1.bf16.msra.mxu0 0
          %1453 = vmatprep.subr.bf16.mxu0 0
          %1454 = vmatpush1.bf16.msra.mxu0 0
          %1455 = vmatprep.subr.bf16.mxu0 0
          %1456 = vmatpush1.bf16.msra.mxu0 0
          %1457 = vmatprep.subr.bf16.mxu0 0
          %1458 = vmatpush1.bf16.msra.mxu0 0
          %1459 = vmatprep.mubr.bf16.mxu0 0
          %1460 = vmatmul.mubr.bf16.gmra.mrb[0].mxu0 %v1347
          %v1461 = vpop.f32.mrb[0].mxu0
          %v1462 = vadd.f32 %v1281, %v1461
          %v1463 = vpop.f32.mrb[0].mxu0
          %v1464 = vpop.f32.mrb[0].mxu0
          %v1465 = vadd.f32 %v1281, %v1464
          %v1466 = vpop.f32.mrb[0].mxu0
          %1467 = vmatprep.mubr.bf16.mxu0 0
          %1468 = vmatmul.mubr.bf16.gmra.mrb[0].mxu0 %v1348
          %v1469 = vpop.f32.mrb[0].mxu0
          %v1470 = vadd.f32 %v1281, %v1469
          %v1471 = vpop.f32.mrb[0].mxu0
          %v1472 = vpop.f32.mrb[0].mxu0
          %v1473 = vadd.f32 %v1281, %v1472
          %v1474 = vpop.f32.mrb[0].mxu0
          %1475 = vmatprep.mubr.bf16.mxu0 0
          %1476 = vmatmul.mubr.bf16.gmra.mrb[0].mxu0 %v1349
          %v1477 = vpop.f32.mrb[0].mxu0
          %v1478 = vadd.f32 %v1281, %v1477
          %v1479 = vpop.f32.mrb[0].mxu0
          %v1480 = vpop.f32.mrb[0].mxu0
          %v1481 = vadd.f32 %v1281, %v1480
          %v1482 = vpop.f32.mrb[0].mxu0
          %1483 = vmatprep.mubr.bf16.mxu0 0
          %1484 = vmatmul.mubr.bf16.gmra.mrb[0].mxu0 %v1350
          %v1485 = vpop.f32.mrb[0].mxu0
          %v1486 = vadd.f32 %v1281, %v1485
          %v1487 = vpop.f32.mrb[0].mxu0
          %v1488 = vpop.f32.mrb[0].mxu0
          %v1489 = vadd.f32 %v1281, %v1488
          %v1490 = vpop.f32.mrb[0].mxu0
          %1491 = vmatprep.mubr.bf16.mxu0 0
          %1492 = vmatmul.mubr.bf16.gmra.mrb[0].mxu0 %v1351
          %v1493 = vpop.f32.mrb[0].mxu0
          %v1494 = vadd.f32 %v1281, %v1493
          %v1495 = vpop.f32.mrb[0].mxu0
          %v1496 = vpop.f32.mrb[0].mxu0
          %v1497 = vadd.f32 %v1281, %v1496
          %v1498 = vpop.f32.mrb[0].mxu0
          %1499 = vmatprep.mubr.bf16.mxu0 0
          %1500 = vmatmul.mubr.bf16.gmra.mrb[0].mxu0 %v1352
          %v1501 = vpop.f32.mrb[0].mxu0
          %v1502 = vadd.f32 %v1281, %v1501
          %v1503 = vpop.f32.mrb[0].mxu0
          %v1504 = vpop.f32.mrb[0].mxu0
          %v1505 = vadd.f32 %v1281, %v1504
          %v1506 = vpop.f32.mrb[0].mxu0
          %1507 = vmatprep.mubr.bf16.mxu0 0
          %1508 = vmatmul.mubr.bf16.gmra.mrb[0].mxu0 %v1353
          %v1509 = vpop.f32.mrb[0].mxu0
          %v1510 = vadd.f32 %v1281, %v1509
          %v1511 = vpop.f32.mrb[0].mxu0
          %v1512 = vpop.f32.mrb[0].mxu0
          %v1513 = vadd.f32 %v1281, %v1512
          %v1514 = vpop.f32.mrb[0].mxu0
          %1515 = vmatprep.mubr.bf16.mxu0 0
          %1516 = vmatmul.mubr.bf16.gmra.mrb[0].mxu0 %v1354
          %v1517 = vpop.f32.mrb[0].mxu0
          %v1518 = vadd.f32 %v1281, %v1517
          %v1519 = vpop.f32.mrb[0].mxu0
          %v1520 = vpop.f32.mrb[0].mxu0
          %v1521 = vadd.f32 %v1281, %v1520
          %v1522 = vpop.f32.mrb[0].mxu0
          %1523 = vmatprep.mubr.bf16.mxu0 0
          %1524 = vmatmul.mubr.bf16.gmra.mrb[0].mxu0 %v1355
          %v1525 = vpop.f32.mrb[0].mxu0
          %v1526 = vadd.f32 %v1281, %v1525
          %v1527 = vpop.f32.mrb[0].mxu0
          %v1528 = vpop.f32.mrb[0].mxu0
          %v1529 = vadd.f32 %v1281, %v1528
          %v1530 = vpop.f32.mrb[0].mxu0
          %1531 = vmatprep.mubr.bf16.mxu0 0
          %1532 = vmatmul.mubr.bf16.gmra.mrb[0].mxu0 %v1356
          %v1533 = vpop.f32.mrb[0].mxu0
          %v1534 = vadd.f32 %v1281, %v1533
          %v1535 = vpop.f32.mrb[0].mxu0
          %v1536 = vpop.f32.mrb[0].mxu0
          %v1537 = vadd.f32 %v1281, %v1536
          %v1538 = vpop.f32.mrb[0].mxu0
          %1539 = vmatprep.mubr.bf16.mxu0 0
          %1540 = vmatmul.mubr.bf16.gmra.mrb[0].mxu0 %v1357
          %v1541 = vpop.f32.mrb[0].mxu0
          %v1542 = vadd.f32 %v1281, %v1541
          %v1543 = vpop.f32.mrb[0].mxu0
          %v1544 = vpop.f32.mrb[0].mxu0
          %v1545 = vadd.f32 %v1281, %v1544
          %v1546 = vpop.f32.mrb[0].mxu0
          %1547 = vmatprep.mubr.bf16.mxu0 0
          %1548 = vmatmul.mubr.bf16.gmra.mrb[0].mxu0 %v1358
          %v1549 = vpop.f32.mrb[0].mxu0
          %v1550 = vadd.f32 %v1281, %v1549
          %v1551 = vpop.f32.mrb[0].mxu0
          %v1552 = vpop.f32.mrb[0].mxu0
          %v1553 = vadd.f32 %v1281, %v1552
          %v1554 = vpop.f32.mrb[0].mxu0
          %1555 = vmatprep.mubr.bf16.mxu0 0
          %1556 = vmatmul.mubr.bf16.gmra.mrb[0].mxu0 %v1359
          %v1557 = vpop.f32.mrb[0].mxu0
          %v1558 = vadd.f32 %v1281, %v1557
          %v1559 = vpop.f32.mrb[0].mxu0
          %v1560 = vpop.f32.mrb[0].mxu0
          %v1561 = vadd.f32 %v1281, %v1560
          %v1562 = vpop.f32.mrb[0].mxu0
          %1563 = vmatprep.mubr.bf16.mxu0 0
          %1564 = vmatmul.mubr.bf16.gmra.mrb[0].mxu0 %v1360
          %v1565 = vpop.f32.mrb[0].mxu0
          %v1566 = vadd.f32 %v1281, %v1565
          %v1567 = vpop.f32.mrb[0].mxu0
          %v1568 = vpop.f32.mrb[0].mxu0
          %v1569 = vadd.f32 %v1281, %v1568
          %v1570 = vpop.f32.mrb[0].mxu0
          %1571 = vmatprep.mubr.bf16.mxu0 0
          %1572 = vmatmul.mubr.bf16.gmra.mrb[0].mxu0 %v1361
          %v1573 = vpop.f32.mrb[0].mxu0
          %v1574 = vadd.f32 %v1281, %v1573
          %v1575 = vpop.f32.mrb[0].mxu0
          %v1576 = vpop.f32.mrb[0].mxu0
          %v1577 = vadd.f32 %v1281, %v1576
          %v1578 = vpop.f32.mrb[0].mxu0
          %1579 = vmatprep.mubr.bf16.mxu0 0
          %1580 = vmatmul.mubr.bf16.gmra.mrb[0].mxu0 %v1362
          %v1581 = vpop.f32.mrb[0].mxu0
          %v1582 = vadd.f32 %v1281, %v1581
          %v1583 = vpop.f32.mrb[0].mxu0
          %v1584 = vpop.f32.mrb[0].mxu0
          %v1585 = vadd.f32 %v1281, %v1584
          %v1586 = vpop.f32.mrb[0].mxu0
          %1587 = vdwg.mxu0
          %v1588 = vand.u32 2147483647, %v1462
          %v1589 = vand.u32 2147483647, %v1465
          %v1590 = vand.u32 2147483647, %v1470
          %v1591 = vand.u32 2147483647, %v1473
          %v1592 = vand.u32 2147483647, %v1478
          %v1593 = vand.u32 2147483647, %v1481
          %v1594 = vand.u32 2147483647, %v1486
          %v1595 = vand.u32 2147483647, %v1489
          %v1596 = vand.u32 2147483647, %v1494
          %v1597 = vand.u32 2147483647, %v1497
          %v1598 = vand.u32 2147483647, %v1502
          %v1599 = vand.u32 2147483647, %v1505
          %v1600 = vand.u32 2147483647, %v1510
          %v1601 = vand.u32 2147483647, %v1513
          %v1602 = vand.u32 2147483647, %v1518
          %v1603 = vand.u32 2147483647, %v1521
          %v1604 = vand.u32 2147483647, %v1526
          %v1605 = vand.u32 2147483647, %v1529
          %v1606 = vand.u32 2147483647, %v1534
          %v1607 = vand.u32 2147483647, %v1537
          %v1608 = vand.u32 2147483647, %v1542
          %v1609 = vand.u32 2147483647, %v1545
          %v1610 = vand.u32 2147483647, %v1550
          %v1611 = vand.u32 2147483647, %v1553
          %v1612 = vand.u32 2147483647, %v1558
          %v1613 = vand.u32 2147483647, %v1561
          %v1614 = vand.u32 2147483647, %v1566
          %v1615 = vand.u32 2147483647, %v1569
          %v1616 = vand.u32 2147483647, %v1574
          %v1617 = vand.u32 2147483647, %v1577
          %v1618 = vand.u32 2147483647, %v1582
          %v1619 = vand.u32 2147483647, %v1585
          %1620 = vadd.xlane.f32.xlu0 %v1588
          %v1621 = vpop.xlane.xlu0 %1620
          %1622 = vadd.xlane.f32.xlu0 %v1589
          %v1623 = vpop.xlane.xlu0 %1622
          %1624 = vadd.xlane.f32.xlu0 %v1590
          %v1625 = vpop.xlane.xlu0 %1624
          %1626 = vadd.xlane.f32.xlu0 %v1591
          %v1627 = vpop.xlane.xlu0 %1626
          %1628 = vadd.xlane.f32.xlu0 %v1592
          %v1629 = vpop.xlane.xlu0 %1628
          %1630 = vadd.xlane.f32.xlu0 %v1593
          %v1631 = vpop.xlane.xlu0 %1630
          %1632 = vadd.xlane.f32.xlu0 %v1594
          %v1633 = vpop.xlane.xlu0 %1632
          %1634 = vadd.xlane.f32.xlu0 %v1595
          %v1635 = vpop.xlane.xlu0 %1634
          %1636 = vadd.xlane.f32.xlu0 %v1596
          %v1637 = vpop.xlane.xlu0 %1636
          %1638 = vadd.xlane.f32.xlu0 %v1597
          %v1639 = vpop.xlane.xlu0 %1638
          %1640 = vadd.xlane.f32.xlu0 %v1598
          %v1641 = vpop.xlane.xlu0 %1640
          %1642 = vadd.xlane.f32.xlu0 %v1599
          %v1643 = vpop.xlane.xlu0 %1642
          %1644 = vadd.xlane.f32.xlu0 %v1600
          %v1645 = vpop.xlane.xlu0 %1644
          %1646 = vadd.xlane.f32.xlu0 %v1601
          %v1647 = vpop.xlane.xlu0 %1646
          %1648 = vadd.xlane.f32.xlu0 %v1602
          %v1649 = vpop.xlane.xlu0 %1648
          %1650 = vadd.xlane.f32.xlu0 %v1603
          %v1651 = vpop.xlane.xlu0 %1650
          %1652 = vadd.xlane.f32.xlu0 %v1604
          %v1653 = vpop.xlane.xlu0 %1652
          %1654 = vadd.xlane.f32.xlu0 %v1605
          %v1655 = vpop.xlane.xlu0 %1654
          %1656 = vadd.xlane.f32.xlu0 %v1606
          %v1657 = vpop.xlane.xlu0 %1656
          %1658 = vadd.xlane.f32.xlu0 %v1607
          %v1659 = vpop.xlane.xlu0 %1658
          %1660 = vadd.xlane.f32.xlu0 %v1608
          %v1661 = vpop.xlane.xlu0 %1660
          %1662 = vadd.xlane.f32.xlu0 %v1609
          %v1663 = vpop.xlane.xlu0 %1662
          %1664 = vadd.xlane.f32.xlu0 %v1610
          %v1665 = vpop.xlane.xlu0 %1664
          %1666 = vadd.xlane.f32.xlu0 %v1611
          %v1667 = vpop.xlane.xlu0 %1666
          %1668 = vadd.xlane.f32.xlu0 %v1612
          %v1669 = vpop.xlane.xlu0 %1668
          %1670 = vadd.xlane.f32.xlu0 %v1613
          %v1671 = vpop.xlane.xlu0 %1670
          %1672 = vadd.xlane.f32.xlu0 %v1614
          %v1673 = vpop.xlane.xlu0 %1672
          %1674 = vadd.xlane.f32.xlu0 %v1615
          %v1675 = vpop.xlane.xlu0 %1674
          %1676 = vadd.xlane.f32.xlu0 %v1616
          %v1677 = vpop.xlane.xlu0 %1676
          %1678 = vadd.xlane.f32.xlu0 %v1617
          %v1679 = vpop.xlane.xlu0 %1678
          %1680 = vadd.xlane.f32.xlu0 %v1618
          %v1681 = vpop.xlane.xlu0 %1680
          %1682 = vadd.xlane.f32.xlu0 %v1619
          %v1683 = vpop.xlane.xlu0 %1682
          %v1684 = vmax.f32 %v1621, 1e-12
          %v1685 = vmax.f32 %v1623, 1e-12
          %v1686 = vmax.f32 %v1625, 1e-12
          %v1687 = vmax.f32 %v1627, 1e-12
          %v1688 = vmax.f32 %v1629, 1e-12
          %v1689 = vmax.f32 %v1631, 1e-12
          %v1690 = vmax.f32 %v1633, 1e-12
          %v1691 = vmax.f32 %v1635, 1e-12
          %v1692 = vmax.f32 %v1637, 1e-12
          %v1693 = vmax.f32 %v1639, 1e-12
          %v1694 = vmax.f32 %v1641, 1e-12
          %v1695 = vmax.f32 %v1643, 1e-12
          %v1696 = vmax.f32 %v1645, 1e-12
          %v1697 = vmax.f32 %v1647, 1e-12
          %v1698 = vmax.f32 %v1649, 1e-12
          %v1699 = vmax.f32 %v1651, 1e-12
          %v1700 = vmax.f32 %v1653, 1e-12
          %v1701 = vmax.f32 %v1655, 1e-12
          %v1702 = vmax.f32 %v1657, 1e-12
          %v1703 = vmax.f32 %v1659, 1e-12
          %v1704 = vmax.f32 %v1661, 1e-12
          %v1705 = vmax.f32 %v1663, 1e-12
          %v1706 = vmax.f32 %v1665, 1e-12
          %v1707 = vmax.f32 %v1667, 1e-12
          %v1708 = vmax.f32 %v1669, 1e-12
          %v1709 = vmax.f32 %v1671, 1e-12
          %v1710 = vmax.f32 %v1673, 1e-12
          %v1711 = vmax.f32 %v1675, 1e-12
          %v1712 = vmax.f32 %v1677, 1e-12
          %v1713 = vmax.f32 %v1679, 1e-12
          %v1714 = vmax.f32 %v1681, 1e-12
          %v1715 = vmax.f32 %v1683, 1e-12
          %v1716 = vrcp.pop %v1684
          %v1717 = vmul.f32 %v1462, %v1716
          %v1718 = vrcp.pop %v1685
          %v1719 = vmul.f32 %v1465, %v1718
          %v1720 = vrcp.pop %v1686
          %v1721 = vmul.f32 %v1470, %v1720
          %v1722 = vrcp.pop %v1687
          %v1723 = vmul.f32 %v1473, %v1722
          %v1724 = vrcp.pop %v1688
          %v1725 = vmul.f32 %v1478, %v1724
          %v1726 = vrcp.pop %v1689
          %v1727 = vmul.f32 %v1481, %v1726
          %v1728 = vrcp.pop %v1690
          %v1729 = vmul.f32 %v1486, %v1728
          %v1730 = vrcp.pop %v1691
          %v1731 = vmul.f32 %v1489, %v1730
          %v1732 = vrcp.pop %v1692
          %v1733 = vmul.f32 %v1494, %v1732
          %v1734 = vrcp.pop %v1693
          %v1735 = vmul.f32 %v1497, %v1734
          %v1736 = vrcp.pop %v1694
          %v1737 = vmul.f32 %v1502, %v1736
          %v1738 = vrcp.pop %v1695
          %v1739 = vmul.f32 %v1505, %v1738
          %v1740 = vrcp.pop %v1696
          %v1741 = vmul.f32 %v1510, %v1740
          %v1742 = vrcp.pop %v1697
          %v1743 = vmul.f32 %v1513, %v1742
          %v1744 = vrcp.pop %v1698
          %v1745 = vmul.f32 %v1518, %v1744
          %v1746 = vrcp.pop %v1699
          %v1747 = vmul.f32 %v1521, %v1746
          %v1748 = vrcp.pop %v1700
          %v1749 = vmul.f32 %v1526, %v1748
          %v1750 = vrcp.pop %v1701
          %v1751 = vmul.f32 %v1529, %v1750
          %v1752 = vrcp.pop %v1702
          %v1753 = vmul.f32 %v1534, %v1752
          %v1754 = vrcp.pop %v1703
          %v1755 = vmul.f32 %v1537, %v1754
          %v1756 = vrcp.pop %v1704
          %v1757 = vmul.f32 %v1542, %v1756
          %v1758 = vrcp.pop %v1705
          %v1759 = vmul.f32 %v1545, %v1758
          %v1760 = vrcp.pop %v1706
          %v1761 = vmul.f32 %v1550, %v1760
          %v1762 = vrcp.pop %v1707
          %v1763 = vmul.f32 %v1553, %v1762
          %v1764 = vrcp.pop %v1708
          %v1765 = vmul.f32 %v1558, %v1764
          %v1766 = vrcp.pop %v1709
          %v1767 = vmul.f32 %v1561, %v1766
          %v1768 = vrcp.pop %v1710
          %v1769 = vmul.f32 %v1566, %v1768
          %v1770 = vrcp.pop %v1711
          %v1771 = vmul.f32 %v1569, %v1770
          %v1772 = vrcp.pop %v1712
          %v1773 = vmul.f32 %v1574, %v1772
          %v1774 = vrcp.pop %v1713
          %v1775 = vmul.f32 %v1577, %v1774
          %v1776 = vrcp.pop %v1714
          %v1777 = vmul.f32 %v1582, %v1776
          %v1778 = vrcp.pop %v1715
          %v1779 = vmul.f32 %v1585, %v1778
          %v1780 = vand.u32 2147483647, %v1196
          %v1781 = vand.u32 2147483647, %v1197
          %v1782 = vand.u32 2147483647, %v1198
          %v1783 = vand.u32 2147483647, %v1199
          %v1784 = vand.u32 2147483647, %v1200
          %v1785 = vand.u32 2147483647, %v1201
          %v1786 = vand.u32 2147483647, %v1202
          %v1787 = vand.u32 2147483647, %v1203
          %v1788 = vand.u32 2147483647, %v1204
          %v1789 = vand.u32 2147483647, %v1205
          %v1790 = vand.u32 2147483647, %v1206
          %v1791 = vand.u32 2147483647, %v1207
          %v1792 = vand.u32 2147483647, %v1208
          %v1793 = vand.u32 2147483647, %v1209
          %v1794 = vand.u32 2147483647, %v1210
          %v1795 = vand.u32 2147483647, %v1211
          %v1796 = vand.u32 2147483647, %v1212
          %v1797 = vand.u32 2147483647, %v1213
          %v1798 = vand.u32 2147483647, %v1214
          %v1799 = vand.u32 2147483647, %v1215
          %v1800 = vand.u32 2147483647, %v1216
          %v1801 = vand.u32 2147483647, %v1217
          %v1802 = vand.u32 2147483647, %v1218
          %v1803 = vand.u32 2147483647, %v1219
          %v1804 = vand.u32 2147483647, %v1220
          %v1805 = vand.u32 2147483647, %v1221
          %v1806 = vand.u32 2147483647, %v1222
          %v1807 = vand.u32 2147483647, %v1223
          %v1808 = vand.u32 2147483647, %v1224
          %v1809 = vand.u32 2147483647, %v1225
          %v1810 = vand.u32 2147483647, %v1226
          %v1811 = vand.u32 2147483647, %v1227
          %1812 = vadd.xlane.f32.xlu0 %v1780
          %v1813 = vpop.xlane.xlu0 %1812
          %1814 = vadd.xlane.f32.xlu0 %v1781
          %v1815 = vpop.xlane.xlu0 %1814
          %1816 = vadd.xlane.f32.xlu0 %v1782
          %v1817 = vpop.xlane.xlu0 %1816
          %1818 = vadd.xlane.f32.xlu0 %v1783
          %v1819 = vpop.xlane.xlu0 %1818
          %1820 = vadd.xlane.f32.xlu0 %v1784
          %v1821 = vpop.xlane.xlu0 %1820
          %1822 = vadd.xlane.f32.xlu0 %v1785
          %v1823 = vpop.xlane.xlu0 %1822
          %1824 = vadd.xlane.f32.xlu0 %v1786
          %v1825 = vpop.xlane.xlu0 %1824
          %1826 = vadd.xlane.f32.xlu0 %v1787
          %v1827 = vpop.xlane.xlu0 %1826
          %1828 = vadd.xlane.f32.xlu0 %v1788
          %v1829 = vpop.xlane.xlu0 %1828
          %1830 = vadd.xlane.f32.xlu0 %v1789
          %v1831 = vpop.xlane.xlu0 %1830
          %1832 = vadd.xlane.f32.xlu0 %v1790
          %v1833 = vpop.xlane.xlu0 %1832
          %1834 = vadd.xlane.f32.xlu0 %v1791
          %v1835 = vpop.xlane.xlu0 %1834
          %1836 = vadd.xlane.f32.xlu0 %v1792
          %v1837 = vpop.xlane.xlu0 %1836
          %1838 = vadd.xlane.f32.xlu0 %v1793
          %v1839 = vpop.xlane.xlu0 %1838
          %1840 = vadd.xlane.f32.xlu0 %v1794
          %v1841 = vpop.xlane.xlu0 %1840
          %1842 = vadd.xlane.f32.xlu0 %v1795
          %v1843 = vpop.xlane.xlu0 %1842
          %1844 = vadd.xlane.f32.xlu0 %v1796
          %v1845 = vpop.xlane.xlu0 %1844
          %1846 = vadd.xlane.f32.xlu0 %v1797
          %v1847 = vpop.xlane.xlu0 %1846
          %1848 = vadd.xlane.f32.xlu0 %v1798
          %v1849 = vpop.xlane.xlu0 %1848
          %1850 = vadd.xlane.f32.xlu0 %v1799
          %v1851 = vpop.xlane.xlu0 %1850
          %1852 = vadd.xlane.f32.xlu0 %v1800
          %v1853 = vpop.xlane.xlu0 %1852
          %1854 = vadd.xlane.f32.xlu0 %v1801
          %v1855 = vpop.xlane.xlu0 %1854
          %1856 = vadd.xlane.f32.xlu0 %v1802
          %v1857 = vpop.xlane.xlu0 %1856
          %1858 = vadd.xlane.f32.xlu0 %v1803
          %v1859 = vpop.xlane.xlu0 %1858
          %1860 = vadd.xlane.f32.xlu0 %v1804
          %v1861 = vpop.xlane.xlu0 %1860
          %1862 = vadd.xlane.f32.xlu0 %v1805
          %v1863 = vpop.xlane.xlu0 %1862
          %1864 = vadd.xlane.f32.xlu0 %v1806
          %v1865 = vpop.xlane.xlu0 %1864
          %1866 = vadd.xlane.f32.xlu0 %v1807
          %v1867 = vpop.xlane.xlu0 %1866
          %1868 = vadd.xlane.f32.xlu0 %v1808
          %v1869 = vpop.xlane.xlu0 %1868
          %1870 = vadd.xlane.f32.xlu0 %v1809
          %v1871 = vpop.xlane.xlu0 %1870
          %1872 = vadd.xlane.f32.xlu0 %v1810
          %v1873 = vpop.xlane.xlu0 %1872
          %1874 = vadd.xlane.f32.xlu0 %v1811
          %v1875 = vpop.xlane.xlu0 %1874
          %v1876 = vmax.f32 %v1813, 1e-12
          %v1877 = vmax.f32 %v1815, 1e-12
          %v1878 = vmax.f32 %v1817, 1e-12
          %v1879 = vmax.f32 %v1819, 1e-12
          %v1880 = vmax.f32 %v1821, 1e-12
          %v1881 = vmax.f32 %v1823, 1e-12
          %v1882 = vmax.f32 %v1825, 1e-12
          %v1883 = vmax.f32 %v1827, 1e-12
          %v1884 = vmax.f32 %v1829, 1e-12
          %v1885 = vmax.f32 %v1831, 1e-12
          %v1886 = vmax.f32 %v1833, 1e-12
          %v1887 = vmax.f32 %v1835, 1e-12
          %v1888 = vmax.f32 %v1837, 1e-12
          %v1889 = vmax.f32 %v1839, 1e-12
          %v1890 = vmax.f32 %v1841, 1e-12
          %v1891 = vmax.f32 %v1843, 1e-12
          %v1892 = vmax.f32 %v1845, 1e-12
          %v1893 = vmax.f32 %v1847, 1e-12
          %v1894 = vmax.f32 %v1849, 1e-12
          %v1895 = vmax.f32 %v1851, 1e-12
          %v1896 = vmax.f32 %v1853, 1e-12
          %v1897 = vmax.f32 %v1855, 1e-12
          %v1898 = vmax.f32 %v1857, 1e-12
          %v1899 = vmax.f32 %v1859, 1e-12
          %v1900 = vmax.f32 %v1861, 1e-12
          %v1901 = vmax.f32 %v1863, 1e-12
          %v1902 = vmax.f32 %v1865, 1e-12
          %v1903 = vmax.f32 %v1867, 1e-12
          %v1904 = vmax.f32 %v1869, 1e-12
          %v1905 = vmax.f32 %v1871, 1e-12
          %v1906 = vmax.f32 %v1873, 1e-12
          %v1907 = vmax.f32 %v1875, 1e-12
          %v1908 = vrcp.pop %v1876
          %v1909 = vmul.f32 %v1196, %v1908
          %v1910 = vrcp.pop %v1877
          %v1911 = vmul.f32 %v1197, %v1910
          %v1912 = vrcp.pop %v1878
          %v1913 = vmul.f32 %v1198, %v1912
          %v1914 = vrcp.pop %v1879
          %v1915 = vmul.f32 %v1199, %v1914
          %v1916 = vrcp.pop %v1880
          %v1917 = vmul.f32 %v1200, %v1916
          %v1918 = vrcp.pop %v1881
          %v1919 = vmul.f32 %v1201, %v1918
          %v1920 = vrcp.pop %v1882
          %v1921 = vmul.f32 %v1202, %v1920
          %v1922 = vrcp.pop %v1883
          %v1923 = vmul.f32 %v1203, %v1922
          %v1924 = vrcp.pop %v1884
          %v1925 = vmul.f32 %v1204, %v1924
          %v1926 = vrcp.pop %v1885
          %v1927 = vmul.f32 %v1205, %v1926
          %v1928 = vrcp.pop %v1886
          %v1929 = vmul.f32 %v1206, %v1928
          %v1930 = vrcp.pop %v1887
          %v1931 = vmul.f32 %v1207, %v1930
          %v1932 = vrcp.pop %v1888
          %v1933 = vmul.f32 %v1208, %v1932
          %v1934 = vrcp.pop %v1889
          %v1935 = vmul.f32 %v1209, %v1934
          %v1936 = vrcp.pop %v1890
          %v1937 = vmul.f32 %v1210, %v1936
          %v1938 = vrcp.pop %v1891
          %v1939 = vmul.f32 %v1211, %v1938
          %v1940 = vrcp.pop %v1892
          %v1941 = vmul.f32 %v1212, %v1940
          %v1942 = vrcp.pop %v1893
          %v1943 = vmul.f32 %v1213, %v1942
          %v1944 = vrcp.pop %v1894
          %v1945 = vmul.f32 %v1214, %v1944
          %v1946 = vrcp.pop %v1895
          %v1947 = vmul.f32 %v1215, %v1946
          %v1948 = vrcp.pop %v1896
          %v1949 = vmul.f32 %v1216, %v1948
          %v1950 = vrcp.pop %v1897
          %v1951 = vmul.f32 %v1217, %v1950
          %v1952 = vrcp.pop %v1898
          %v1953 = vmul.f32 %v1218, %v1952
          %v1954 = vrcp.pop %v1899
          %v1955 = vmul.f32 %v1219, %v1954
          %v1956 = vrcp.pop %v1900
          %v1957 = vmul.f32 %v1220, %v1956
          %v1958 = vrcp.pop %v1901
          %v1959 = vmul.f32 %v1221, %v1958
          %v1960 = vrcp.pop %v1902
          %v1961 = vmul.f32 %v1222, %v1960
          %v1962 = vrcp.pop %v1903
          %v1963 = vmul.f32 %v1223, %v1962
          %v1964 = vrcp.pop %v1904
          %v1965 = vmul.f32 %v1224, %v1964
          %v1966 = vrcp.pop %v1905
          %v1967 = vmul.f32 %v1225, %v1966
          %v1968 = vrcp.pop %v1906
          %v1969 = vmul.f32 %v1226, %v1968
          %v1970 = vrcp.pop %v1907
          %v1971 = vmul.f32 %v1227, %v1970
          %v1972 = vpack.c.bf16 %v1719, %v1717
          %v1973 = vpack.c.bf16 %v1723, %v1721
          %v1974 = vpack.c.bf16 %v1727, %v1725
          %v1975 = vpack.c.bf16 %v1731, %v1729
          %v1976 = vpack.c.bf16 %v1735, %v1733
          %v1977 = vpack.c.bf16 %v1739, %v1737
          %v1978 = vpack.c.bf16 %v1743, %v1741
          %v1979 = vpack.c.bf16 %v1747, %v1745
          %v1980 = vpack.c.bf16 %v1751, %v1749
          %v1981 = vpack.c.bf16 %v1755, %v1753
          %v1982 = vpack.c.bf16 %v1759, %v1757
          %v1983 = vpack.c.bf16 %v1763, %v1761
          %v1984 = vpack.c.bf16 %v1767, %v1765
          %v1985 = vpack.c.bf16 %v1771, %v1769
          %v1986 = vpack.c.bf16 %v1775, %v1773
          %v1987 = vpack.c.bf16 %v1779, %v1777
          %v1988 = vld [vmem:[%s6] sm:$0xf]
          %v1989 = vld [vmem:[%s6 + $0x4] sm:$0xf]
          %v1990 = vld [vmem:[%s6 + $0x8] sm:$0xf]
          %v1991 = vld [vmem:[%s6 + $0xc] sm:$0xf]
          %v1992 = vld [vmem:[%s6 + $0x10] sm:$0xf]
          %v1993 = vld [vmem:[%s6 + $0x14] sm:$0xf]
          %v1994 = vld [vmem:[%s6 + $0x18] sm:$0xf]
          %v1995 = vld [vmem:[%s6 + $0x1c] sm:$0xf]
          %v1996 = vld [vmem:[%s6 + $0x20] sm:$0xf]
          %v1997 = vld [vmem:[%s6 + $0x24] sm:$0xf]
          %v1998 = vld [vmem:[%s6 + $0x28] sm:$0xf]
          %v1999 = vld [vmem:[%s6 + $0x2c] sm:$0xf]
          %v2000 = vld [vmem:[%s6 + $0x30] sm:$0xf]
          %v2001 = vld [vmem:[%s6 + $0x34] sm:$0xf]
          %v2002 = vld [vmem:[%s6 + $0x38] sm:$0xf]
          %v2003 = vld [vmem:[%s6 + $0x3c] sm:$0xf]
          %v2004 = vpack.c.bf16 %v1911, %v1909
          %v2005 = vpack.c.bf16 %v1915, %v1913
          %v2006 = vpack.c.bf16 %v1919, %v1917
          %v2007 = vpack.c.bf16 %v1923, %v1921
          %v2008 = vpack.c.bf16 %v1927, %v1925
          %v2009 = vpack.c.bf16 %v1931, %v1929
          %v2010 = vpack.c.bf16 %v1935, %v1933
          %v2011 = vpack.c.bf16 %v1939, %v1937
          %v2012 = vpack.c.bf16 %v1943, %v1941
          %v2013 = vpack.c.bf16 %v1947, %v1945
          %v2014 = vpack.c.bf16 %v1951, %v1949
          %v2015 = vpack.c.bf16 %v1955, %v1953
          %v2016 = vpack.c.bf16 %v1959, %v1957
          %v2017 = vpack.c.bf16 %v1963, %v1961
          %v2018 = vpack.c.bf16 %v1967, %v1965
          %v2019 = vpack.c.bf16 %v1971, %v1969
          %v2020 = vld [vmem:[%s7] sm:$0xf]
          %v2021 = vld [vmem:[%s7 + $0x4] sm:$0xf]
          %v2022 = vld [vmem:[%s7 + $0x8] sm:$0xf]
          %v2023 = vld [vmem:[%s7 + $0xc] sm:$0xf]
          %v2024 = vld [vmem:[%s7 + $0x10] sm:$0xf]
          %v2025 = vld [vmem:[%s7 + $0x14] sm:$0xf]
          %v2026 = vld [vmem:[%s7 + $0x18] sm:$0xf]
          %v2027 = vld [vmem:[%s7 + $0x1c] sm:$0xf]
          %v2028 = vld [vmem:[%s7 + $0x20] sm:$0xf]
          %v2029 = vld [vmem:[%s7 + $0x24] sm:$0xf]
          %v2030 = vld [vmem:[%s7 + $0x28] sm:$0xf]
          %v2031 = vld [vmem:[%s7 + $0x2c] sm:$0xf]
          %v2032 = vld [vmem:[%s7 + $0x30] sm:$0xf]
          %v2033 = vld [vmem:[%s7 + $0x34] sm:$0xf]
          %v2034 = vld [vmem:[%s7 + $0x38] sm:$0xf]
          %v2035 = vld [vmem:[%s7 + $0x3c] sm:$0xf]
          %v2052 = vunpack.c.l.b16 %v2020
          %v2053 = vunpack.c.l.b16 %v2021
          %v2054 = vunpack.c.l.b16 %v2022
          %v2055 = vunpack.c.l.b16 %v2023
          %v2056 = vunpack.c.l.b16 %v2024
          %v2057 = vunpack.c.l.b16 %v2025
          %v2058 = vunpack.c.l.b16 %v2026
          %v2059 = vunpack.c.l.b16 %v2027
          %v2060 = vunpack.c.l.b16 %v2028
          %v2061 = vunpack.c.l.b16 %v2029
          %v2062 = vunpack.c.l.b16 %v2030
          %v2063 = vunpack.c.l.b16 %v2031
          %v2064 = vunpack.c.l.b16 %v2032
          %v2065 = vunpack.c.l.b16 %v2033
          %v2066 = vunpack.c.l.b16 %v2034
          %v2067 = vunpack.c.l.b16 %v2035
          %v2068 = vpack.c.b16 %v2053, %v2052
          %v2069 = vpack.c.b16 %v2055, %v2054
          %v2070 = vpack.c.b16 %v2057, %v2056
          %v2071 = vpack.c.b16 %v2059, %v2058
          %v2072 = vpack.c.b16 %v2061, %v2060
          %v2073 = vpack.c.b16 %v2063, %v2062
          %v2074 = vpack.c.b16 %v2065, %v2064
          %v2075 = vpack.c.b16 %v2067, %v2066
          %2084 = vmatprep.subr.bf16.mxu0 0
          %2085 = vmatpush1.bf16.msra.mxu0 %v2068
          %2086 = vmatprep.subr.bf16.mxu0 0
          %2087 = vmatpush1.bf16.msra.mxu0 %v2069
          %2088 = vmatprep.subr.bf16.mxu0 0
          %2089 = vmatpush1.bf16.msra.mxu0 %v2070
          %2090 = vmatprep.subr.bf16.mxu0 0
          %2091 = vmatpush1.bf16.msra.mxu0 %v2071
          %2092 = vmatprep.subr.bf16.mxu0 0
          %2093 = vmatpush1.bf16.msra.mxu0 %v2072
          %2094 = vmatprep.subr.bf16.mxu0 0
          %2095 = vmatpush1.bf16.msra.mxu0 %v2073
          %2096 = vmatprep.subr.bf16.mxu0 0
          %2097 = vmatpush1.bf16.msra.mxu0 %v2074
          %2098 = vmatprep.subr.bf16.mxu0 0
          %2099 = vmatpush1.bf16.msra.mxu0 %v2075
          %2100 = vmatprep.subr.bf16.mxu0 0
          %2101 = vmatpush1.bf16.msra.mxu0 0
          %2102 = vmatprep.subr.bf16.mxu0 0
          %2103 = vmatpush1.bf16.msra.mxu0 0
          %2104 = vmatprep.subr.bf16.mxu0 0
          %2105 = vmatpush1.bf16.msra.mxu0 0
          %2106 = vmatprep.subr.bf16.mxu0 0
          %2107 = vmatpush1.bf16.msra.mxu0 0
          %2108 = vmatprep.subr.bf16.mxu0 0
          %2109 = vmatpush1.bf16.msra.mxu0 0
          %2110 = vmatprep.subr.bf16.mxu0 0
          %2111 = vmatpush1.bf16.msra.mxu0 0
          %2112 = vmatprep.subr.bf16.mxu0 0
          %2113 = vmatpush1.bf16.msra.mxu0 0
          %2114 = vmatprep.subr.bf16.mxu0 0
          %2115 = vmatpush1.bf16.msra.mxu0 0
          %2116 = vmatprep.mubr.bf16.mxu0 0
          %2117 = vmatmul.mubr.bf16.gmra.mrb[0].mxu0 %v2004
          %v2118 = vpop.f32.mrb[0].mxu0
          %v2119 = vadd.f32 0.0, %v2118
          %v2120 = vpop.f32.mrb[0].mxu0
          %v2121 = vpop.f32.mrb[0].mxu0
          %v2122 = vadd.f32 0.0, %v2121
          %v2123 = vpop.f32.mrb[0].mxu0
          %2124 = vmatprep.mubr.bf16.mxu0 0
          %2125 = vmatmul.mubr.bf16.gmra.mrb[0].mxu0 %v2005
          %v2126 = vpop.f32.mrb[0].mxu0
          %v2127 = vadd.f32 0.0, %v2126
          %v2128 = vpop.f32.mrb[0].mxu0
          %v2129 = vpop.f32.mrb[0].mxu0
          %v2130 = vadd.f32 0.0, %v2129
          %v2131 = vpop.f32.mrb[0].mxu0
          %2132 = vmatprep.mubr.bf16.mxu0 0
          %2133 = vmatmul.mubr.bf16.gmra.mrb[0].mxu0 %v2006
          %v2134 = vpop.f32.mrb[0].mxu0
          %v2135 = vadd.f32 0.0, %v2134
          %v2136 = vpop.f32.mrb[0].mxu0
          %v2137 = vpop.f32.mrb[0].mxu0
          %v2138 = vadd.f32 0.0, %v2137
          %v2139 = vpop.f32.mrb[0].mxu0
          %2140 = vmatprep.mubr.bf16.mxu0 0
          %2141 = vmatmul.mubr.bf16.gmra.mrb[0].mxu0 %v2007
          %v2142 = vpop.f32.mrb[0].mxu0
          %v2143 = vadd.f32 0.0, %v2142
          %v2144 = vpop.f32.mrb[0].mxu0
          %v2145 = vpop.f32.mrb[0].mxu0
          %v2146 = vadd.f32 0.0, %v2145
          %v2147 = vpop.f32.mrb[0].mxu0
          %2148 = vmatprep.mubr.bf16.mxu0 0
          %2149 = vmatmul.mubr.bf16.gmra.mrb[0].mxu0 %v2008
          %v2150 = vpop.f32.mrb[0].mxu0
          %v2151 = vadd.f32 0.0, %v2150
          %v2152 = vpop.f32.mrb[0].mxu0
          %v2153 = vpop.f32.mrb[0].mxu0
          %v2154 = vadd.f32 0.0, %v2153
          %v2155 = vpop.f32.mrb[0].mxu0
          %2156 = vmatprep.mubr.bf16.mxu0 0
          %2157 = vmatmul.mubr.bf16.gmra.mrb[0].mxu0 %v2009
          %v2158 = vpop.f32.mrb[0].mxu0
          %v2159 = vadd.f32 0.0, %v2158
          %v2160 = vpop.f32.mrb[0].mxu0
          %v2161 = vpop.f32.mrb[0].mxu0
          %v2162 = vadd.f32 0.0, %v2161
          %v2163 = vpop.f32.mrb[0].mxu0
          %2164 = vmatprep.mubr.bf16.mxu0 0
          %2165 = vmatmul.mubr.bf16.gmra.mrb[0].mxu0 %v2010
          %v2166 = vpop.f32.mrb[0].mxu0
          %v2167 = vadd.f32 0.0, %v2166
          %v2168 = vpop.f32.mrb[0].mxu0
          %v2169 = vpop.f32.mrb[0].mxu0
          %v2170 = vadd.f32 0.0, %v2169
          %v2171 = vpop.f32.mrb[0].mxu0
          %2172 = vmatprep.mubr.bf16.mxu0 0
          %2173 = vmatmul.mubr.bf16.gmra.mrb[0].mxu0 %v2011
          %v2174 = vpop.f32.mrb[0].mxu0
          %v2175 = vadd.f32 0.0, %v2174
          %v2176 = vpop.f32.mrb[0].mxu0
          %v2177 = vpop.f32.mrb[0].mxu0
          %v2178 = vadd.f32 0.0, %v2177
          %v2179 = vpop.f32.mrb[0].mxu0
          %2180 = vmatprep.mubr.bf16.mxu0 0
          %2181 = vmatmul.mubr.bf16.gmra.mrb[0].mxu0 %v2012
          %v2182 = vpop.f32.mrb[0].mxu0
          %v2183 = vadd.f32 0.0, %v2182
          %v2184 = vpop.f32.mrb[0].mxu0
          %v2185 = vpop.f32.mrb[0].mxu0
          %v2186 = vadd.f32 0.0, %v2185
          %v2187 = vpop.f32.mrb[0].mxu0
          %2188 = vmatprep.mubr.bf16.mxu0 0
          %2189 = vmatmul.mubr.bf16.gmra.mrb[0].mxu0 %v2013
          %v2190 = vpop.f32.mrb[0].mxu0
          %v2191 = vadd.f32 0.0, %v2190
          %v2192 = vpop.f32.mrb[0].mxu0
          %v2193 = vpop.f32.mrb[0].mxu0
          %v2194 = vadd.f32 0.0, %v2193
          %v2195 = vpop.f32.mrb[0].mxu0
          %2196 = vmatprep.mubr.bf16.mxu0 0
          %2197 = vmatmul.mubr.bf16.gmra.mrb[0].mxu0 %v2014
          %v2198 = vpop.f32.mrb[0].mxu0
          %v2199 = vadd.f32 0.0, %v2198
          %v2200 = vpop.f32.mrb[0].mxu0
          %v2201 = vpop.f32.mrb[0].mxu0
          %v2202 = vadd.f32 0.0, %v2201
          %v2203 = vpop.f32.mrb[0].mxu0
          %2204 = vmatprep.mubr.bf16.mxu0 0
          %2205 = vmatmul.mubr.bf16.gmra.mrb[0].mxu0 %v2015
          %v2206 = vpop.f32.mrb[0].mxu0
          %v2207 = vadd.f32 0.0, %v2206
          %v2208 = vpop.f32.mrb[0].mxu0
          %v2209 = vpop.f32.mrb[0].mxu0
          %v2210 = vadd.f32 0.0, %v2209
          %v2211 = vpop.f32.mrb[0].mxu0
          %2212 = vmatprep.mubr.bf16.mxu0 0
          %2213 = vmatmul.mubr.bf16.gmra.mrb[0].mxu0 %v2016
          %v2214 = vpop.f32.mrb[0].mxu0
          %v2215 = vadd.f32 0.0, %v2214
          %v2216 = vpop.f32.mrb[0].mxu0
          %v2217 = vpop.f32.mrb[0].mxu0
          %v2218 = vadd.f32 0.0, %v2217
          %v2219 = vpop.f32.mrb[0].mxu0
          %2220 = vmatprep.mubr.bf16.mxu0 0
          %2221 = vmatmul.mubr.bf16.gmra.mrb[0].mxu0 %v2017
          %v2222 = vpop.f32.mrb[0].mxu0
          %v2223 = vadd.f32 0.0, %v2222
          %v2224 = vpop.f32.mrb[0].mxu0
          %v2225 = vpop.f32.mrb[0].mxu0
          %v2226 = vadd.f32 0.0, %v2225
          %v2227 = vpop.f32.mrb[0].mxu0
          %2228 = vmatprep.mubr.bf16.mxu0 0
          %2229 = vmatmul.mubr.bf16.gmra.mrb[0].mxu0 %v2018
          %v2230 = vpop.f32.mrb[0].mxu0
          %v2231 = vadd.f32 0.0, %v2230
          %v2232 = vpop.f32.mrb[0].mxu0
          %v2233 = vpop.f32.mrb[0].mxu0
          %v2234 = vadd.f32 0.0, %v2233
          %v2235 = vpop.f32.mrb[0].mxu0
          %2236 = vmatprep.mubr.bf16.mxu0 0
          %2237 = vmatmul.mubr.bf16.gmra.mrb[0].mxu0 %v2019
          %v2238 = vpop.f32.mrb[0].mxu0
          %v2239 = vadd.f32 0.0, %v2238
          %v2240 = vpop.f32.mrb[0].mxu0
          %v2241 = vpop.f32.mrb[0].mxu0
          %v2242 = vadd.f32 0.0, %v2241
          %v2243 = vpop.f32.mrb[0].mxu0
          %2244 = vdwg.mxu0
          %v2261 = vunpack.c.l.b16 %v1988
          %v2262 = vunpack.c.l.b16 %v1989
          %v2263 = vunpack.c.l.b16 %v1990
          %v2264 = vunpack.c.l.b16 %v1991
          %v2265 = vunpack.c.l.b16 %v1992
          %v2266 = vunpack.c.l.b16 %v1993
          %v2267 = vunpack.c.l.b16 %v1994
          %v2268 = vunpack.c.l.b16 %v1995
          %v2269 = vunpack.c.l.b16 %v1996
          %v2270 = vunpack.c.l.b16 %v1997
          %v2271 = vunpack.c.l.b16 %v1998
          %v2272 = vunpack.c.l.b16 %v1999
          %v2273 = vunpack.c.l.b16 %v2000
          %v2274 = vunpack.c.l.b16 %v2001
          %v2275 = vunpack.c.l.b16 %v2002
          %v2276 = vunpack.c.l.b16 %v2003
          %v2277 = vpack.c.b16 %v2262, %v2261
          %v2278 = vpack.c.b16 %v2264, %v2263
          %v2279 = vpack.c.b16 %v2266, %v2265
          %v2280 = vpack.c.b16 %v2268, %v2267
          %v2281 = vpack.c.b16 %v2270, %v2269
          %v2282 = vpack.c.b16 %v2272, %v2271
          %v2283 = vpack.c.b16 %v2274, %v2273
          %v2284 = vpack.c.b16 %v2276, %v2275
          %2293 = vmatprep.subr.bf16.mxu0 0
          %2294 = vmatpush1.bf16.msra.mxu0 %v2277
          %2295 = vmatprep.subr.bf16.mxu0 0
          %2296 = vmatpush1.bf16.msra.mxu0 %v2278
          %2297 = vmatprep.subr.bf16.mxu0 0
          %2298 = vmatpush1.bf16.msra.mxu0 %v2279
          %2299 = vmatprep.subr.bf16.mxu0 0
          %2300 = vmatpush1.bf16.msra.mxu0 %v2280
          %2301 = vmatprep.subr.bf16.mxu0 0
          %2302 = vmatpush1.bf16.msra.mxu0 %v2281
          %2303 = vmatprep.subr.bf16.mxu0 0
          %2304 = vmatpush1.bf16.msra.mxu0 %v2282
          %2305 = vmatprep.subr.bf16.mxu0 0
          %2306 = vmatpush1.bf16.msra.mxu0 %v2283
          %2307 = vmatprep.subr.bf16.mxu0 0
          %2308 = vmatpush1.bf16.msra.mxu0 %v2284
          %2309 = vmatprep.subr.bf16.mxu0 0
          %2310 = vmatpush1.bf16.msra.mxu0 0
          %2311 = vmatprep.subr.bf16.mxu0 0
          %2312 = vmatpush1.bf16.msra.mxu0 0
          %2313 = vmatprep.subr.bf16.mxu0 0
          %2314 = vmatpush1.bf16.msra.mxu0 0
          %2315 = vmatprep.subr.bf16.mxu0 0
          %2316 = vmatpush1.bf16.msra.mxu0 0
          %2317 = vmatprep.subr.bf16.mxu0 0
          %2318 = vmatpush1.bf16.msra.mxu0 0
          %2319 = vmatprep.subr.bf16.mxu0 0
          %2320 = vmatpush1.bf16.msra.mxu0 0
          %2321 = vmatprep.subr.bf16.mxu0 0
          %2322 = vmatpush1.bf16.msra.mxu0 0
          %2323 = vmatprep.subr.bf16.mxu0 0
          %2324 = vmatpush1.bf16.msra.mxu0 0
          %2325 = vmatprep.mubr.bf16.mxu0 0
          %2326 = vmatmul.mubr.bf16.gmra.mrb[0].mxu0 %v1972
          %v2327 = vpop.f32.mrb[0].mxu0
          %v2328 = vadd.f32 %v2119, %v2327
          %v2329 = vpop.f32.mrb[0].mxu0
          %v2330 = vpop.f32.mrb[0].mxu0
          %v2331 = vadd.f32 %v2122, %v2330
          %v2332 = vpop.f32.mrb[0].mxu0
          %2333 = vmatprep.mubr.bf16.mxu0 0
          %2334 = vmatmul.mubr.bf16.gmra.mrb[0].mxu0 %v1973
          %v2335 = vpop.f32.mrb[0].mxu0
          %v2336 = vadd.f32 %v2127, %v2335
          %v2337 = vpop.f32.mrb[0].mxu0
          %v2338 = vpop.f32.mrb[0].mxu0
          %v2339 = vadd.f32 %v2130, %v2338
          %v2340 = vpop.f32.mrb[0].mxu0
          %2341 = vmatprep.mubr.bf16.mxu0 0
          %2342 = vmatmul.mubr.bf16.gmra.mrb[0].mxu0 %v1974
          %v2343 = vpop.f32.mrb[0].mxu0
          %v2344 = vadd.f32 %v2135, %v2343
          %v2345 = vpop.f32.mrb[0].mxu0
          %v2346 = vpop.f32.mrb[0].mxu0
          %v2347 = vadd.f32 %v2138, %v2346
          %v2348 = vpop.f32.mrb[0].mxu0
          %2349 = vmatprep.mubr.bf16.mxu0 0
          %2350 = vmatmul.mubr.bf16.gmra.mrb[0].mxu0 %v1975
          %v2351 = vpop.f32.mrb[0].mxu0
          %v2352 = vadd.f32 %v2143, %v2351
          %v2353 = vpop.f32.mrb[0].mxu0
          %v2354 = vpop.f32.mrb[0].mxu0
          %v2355 = vadd.f32 %v2146, %v2354
          %v2356 = vpop.f32.mrb[0].mxu0
          %2357 = vmatprep.mubr.bf16.mxu0 0
          %2358 = vmatmul.mubr.bf16.gmra.mrb[0].mxu0 %v1976
          %v2359 = vpop.f32.mrb[0].mxu0
          %v2360 = vadd.f32 %v2151, %v2359
          %v2361 = vpop.f32.mrb[0].mxu0
          %v2362 = vpop.f32.mrb[0].mxu0
          %v2363 = vadd.f32 %v2154, %v2362
          %v2364 = vpop.f32.mrb[0].mxu0
          %2365 = vmatprep.mubr.bf16.mxu0 0
          %2366 = vmatmul.mubr.bf16.gmra.mrb[0].mxu0 %v1977
          %v2367 = vpop.f32.mrb[0].mxu0
          %v2368 = vadd.f32 %v2159, %v2367
          %v2369 = vpop.f32.mrb[0].mxu0
          %v2370 = vpop.f32.mrb[0].mxu0
          %v2371 = vadd.f32 %v2162, %v2370
          %v2372 = vpop.f32.mrb[0].mxu0
          %2373 = vmatprep.mubr.bf16.mxu0 0
          %2374 = vmatmul.mubr.bf16.gmra.mrb[0].mxu0 %v1978
          %v2375 = vpop.f32.mrb[0].mxu0
          %v2376 = vadd.f32 %v2167, %v2375
          %v2377 = vpop.f32.mrb[0].mxu0
          %v2378 = vpop.f32.mrb[0].mxu0
          %v2379 = vadd.f32 %v2170, %v2378
          %v2380 = vpop.f32.mrb[0].mxu0
          %2381 = vmatprep.mubr.bf16.mxu0 0
          %2382 = vmatmul.mubr.bf16.gmra.mrb[0].mxu0 %v1979
          %v2383 = vpop.f32.mrb[0].mxu0
          %v2384 = vadd.f32 %v2175, %v2383
          %v2385 = vpop.f32.mrb[0].mxu0
          %v2386 = vpop.f32.mrb[0].mxu0
          %v2387 = vadd.f32 %v2178, %v2386
          %v2388 = vpop.f32.mrb[0].mxu0
          %2389 = vmatprep.mubr.bf16.mxu0 0
          %2390 = vmatmul.mubr.bf16.gmra.mrb[0].mxu0 %v1980
          %v2391 = vpop.f32.mrb[0].mxu0
          %v2392 = vadd.f32 %v2183, %v2391
          %v2393 = vpop.f32.mrb[0].mxu0
          %v2394 = vpop.f32.mrb[0].mxu0
          %v2395 = vadd.f32 %v2186, %v2394
          %v2396 = vpop.f32.mrb[0].mxu0
          %2397 = vmatprep.mubr.bf16.mxu0 0
          %2398 = vmatmul.mubr.bf16.gmra.mrb[0].mxu0 %v1981
          %v2399 = vpop.f32.mrb[0].mxu0
          %v2400 = vadd.f32 %v2191, %v2399
          %v2401 = vpop.f32.mrb[0].mxu0
          %v2402 = vpop.f32.mrb[0].mxu0
          %v2403 = vadd.f32 %v2194, %v2402
          %v2404 = vpop.f32.mrb[0].mxu0
          %2405 = vmatprep.mubr.bf16.mxu0 0
          %2406 = vmatmul.mubr.bf16.gmra.mrb[0].mxu0 %v1982
          %v2407 = vpop.f32.mrb[0].mxu0
          %v2408 = vadd.f32 %v2199, %v2407
          %v2409 = vpop.f32.mrb[0].mxu0
          %v2410 = vpop.f32.mrb[0].mxu0
          %v2411 = vadd.f32 %v2202, %v2410
          %v2412 = vpop.f32.mrb[0].mxu0
          %2413 = vmatprep.mubr.bf16.mxu0 0
          %2414 = vmatmul.mubr.bf16.gmra.mrb[0].mxu0 %v1983
          %v2415 = vpop.f32.mrb[0].mxu0
          %v2416 = vadd.f32 %v2207, %v2415
          %v2417 = vpop.f32.mrb[0].mxu0
          %v2418 = vpop.f32.mrb[0].mxu0
          %v2419 = vadd.f32 %v2210, %v2418
          %v2420 = vpop.f32.mrb[0].mxu0
          %2421 = vmatprep.mubr.bf16.mxu0 0
          %2422 = vmatmul.mubr.bf16.gmra.mrb[0].mxu0 %v1984
          %v2423 = vpop.f32.mrb[0].mxu0
          %v2424 = vadd.f32 %v2215, %v2423
          %v2425 = vpop.f32.mrb[0].mxu0
          %v2426 = vpop.f32.mrb[0].mxu0
          %v2427 = vadd.f32 %v2218, %v2426
          %v2428 = vpop.f32.mrb[0].mxu0
          %2429 = vmatprep.mubr.bf16.mxu0 0
          %2430 = vmatmul.mubr.bf16.gmra.mrb[0].mxu0 %v1985
          %v2431 = vpop.f32.mrb[0].mxu0
          %v2432 = vadd.f32 %v2223, %v2431
          %v2433 = vpop.f32.mrb[0].mxu0
          %v2434 = vpop.f32.mrb[0].mxu0
          %v2435 = vadd.f32 %v2226, %v2434
          %v2436 = vpop.f32.mrb[0].mxu0
          %2437 = vmatprep.mubr.bf16.mxu0 0
          %2438 = vmatmul.mubr.bf16.gmra.mrb[0].mxu0 %v1986
          %v2439 = vpop.f32.mrb[0].mxu0
          %v2440 = vadd.f32 %v2231, %v2439
          %v2441 = vpop.f32.mrb[0].mxu0
          %v2442 = vpop.f32.mrb[0].mxu0
          %v2443 = vadd.f32 %v2234, %v2442
          %v2444 = vpop.f32.mrb[0].mxu0
          %2445 = vmatprep.mubr.bf16.mxu0 0
          %2446 = vmatmul.mubr.bf16.gmra.mrb[0].mxu0 %v1987
          %v2447 = vpop.f32.mrb[0].mxu0
          %v2448 = vadd.f32 %v2239, %v2447
          %v2449 = vpop.f32.mrb[0].mxu0
          %v2450 = vpop.f32.mrb[0].mxu0
          %v2451 = vadd.f32 %v2242, %v2450
          %v2452 = vpop.f32.mrb[0].mxu0
          %2453 = vdwg.mxu0
          %v2454 = vld [vmem:[%s8] sm:$0x1]
          %v2456 = vlaneseq
          %v2457 = vshrl.u32 %v2456, 7
          %v2458 = vsub.s32 0, %v2457
          %v2459 = vrot.slane %v2454, %v2458
          %v2461 = vadd.f32 %v2328, %v2459
          %v2462 = vadd.f32 %v2331, %v2459
          %v2463 = vadd.f32 %v2336, %v2459
          %v2464 = vadd.f32 %v2339, %v2459
          %v2465 = vadd.f32 %v2344, %v2459
          %v2466 = vadd.f32 %v2347, %v2459
          %v2467 = vadd.f32 %v2352, %v2459
          %v2468 = vadd.f32 %v2355, %v2459
          %v2469 = vadd.f32 %v2360, %v2459
          %v2470 = vadd.f32 %v2363, %v2459
          %v2471 = vadd.f32 %v2368, %v2459
          %v2472 = vadd.f32 %v2371, %v2459
          %v2473 = vadd.f32 %v2376, %v2459
          %v2474 = vadd.f32 %v2379, %v2459
          %v2475 = vadd.f32 %v2384, %v2459
          %v2476 = vadd.f32 %v2387, %v2459
          %v2477 = vadd.f32 %v2392, %v2459
          %v2478 = vadd.f32 %v2395, %v2459
          %v2479 = vadd.f32 %v2400, %v2459
          %v2480 = vadd.f32 %v2403, %v2459
          %v2481 = vadd.f32 %v2408, %v2459
          %v2482 = vadd.f32 %v2411, %v2459
          %v2483 = vadd.f32 %v2416, %v2459
          %v2484 = vadd.f32 %v2419, %v2459
          %v2485 = vadd.f32 %v2424, %v2459
          %v2486 = vadd.f32 %v2427, %v2459
          %v2487 = vadd.f32 %v2432, %v2459
          %v2488 = vadd.f32 %v2435, %v2459
          %v2489 = vadd.f32 %v2440, %v2459
          %v2490 = vadd.f32 %v2443, %v2459
          %v2491 = vadd.f32 %v2448, %v2459
          %v2492 = vadd.f32 %v2451, %v2459
          %v2493 = vand.u32 2147483647, %v2461
          %v2494 = vand.u32 2147483647, %v2462
          %v2495 = vand.u32 2147483647, %v2463
          %v2496 = vand.u32 2147483647, %v2464
          %v2497 = vand.u32 2147483647, %v2465
          %v2498 = vand.u32 2147483647, %v2466
          %v2499 = vand.u32 2147483647, %v2467
          %v2500 = vand.u32 2147483647, %v2468
          %v2501 = vand.u32 2147483647, %v2469
          %v2502 = vand.u32 2147483647, %v2470
          %v2503 = vand.u32 2147483647, %v2471
          %v2504 = vand.u32 2147483647, %v2472
          %v2505 = vand.u32 2147483647, %v2473
          %v2506 = vand.u32 2147483647, %v2474
          %v2507 = vand.u32 2147483647, %v2475
          %v2508 = vand.u32 2147483647, %v2476
          %v2509 = vand.u32 2147483647, %v2477
          %v2510 = vand.u32 2147483647, %v2478
          %v2511 = vand.u32 2147483647, %v2479
          %v2512 = vand.u32 2147483647, %v2480
          %v2513 = vand.u32 2147483647, %v2481
          %v2514 = vand.u32 2147483647, %v2482
          %v2515 = vand.u32 2147483647, %v2483
          %v2516 = vand.u32 2147483647, %v2484
          %v2517 = vand.u32 2147483647, %v2485
          %v2518 = vand.u32 2147483647, %v2486
          %v2519 = vand.u32 2147483647, %v2487
          %v2520 = vand.u32 2147483647, %v2488
          %v2521 = vand.u32 2147483647, %v2489
          %v2522 = vand.u32 2147483647, %v2490
          %v2523 = vand.u32 2147483647, %v2491
          %v2524 = vand.u32 2147483647, %v2492
          %2525 = vadd.xlane.f32.xlu0 %v2493
          %v2526 = vpop.xlane.xlu0 %2525
          %2527 = vadd.xlane.f32.xlu0 %v2494
          %v2528 = vpop.xlane.xlu0 %2527
          %2529 = vadd.xlane.f32.xlu0 %v2495
          %v2530 = vpop.xlane.xlu0 %2529
          %2531 = vadd.xlane.f32.xlu0 %v2496
          %v2532 = vpop.xlane.xlu0 %2531
          %2533 = vadd.xlane.f32.xlu0 %v2497
          %v2534 = vpop.xlane.xlu0 %2533
          %2535 = vadd.xlane.f32.xlu0 %v2498
          %v2536 = vpop.xlane.xlu0 %2535
          %2537 = vadd.xlane.f32.xlu0 %v2499
          %v2538 = vpop.xlane.xlu0 %2537
          %2539 = vadd.xlane.f32.xlu0 %v2500
          %v2540 = vpop.xlane.xlu0 %2539
          %2541 = vadd.xlane.f32.xlu0 %v2501
          %v2542 = vpop.xlane.xlu0 %2541
          %2543 = vadd.xlane.f32.xlu0 %v2502
          %v2544 = vpop.xlane.xlu0 %2543
          %2545 = vadd.xlane.f32.xlu0 %v2503
          %v2546 = vpop.xlane.xlu0 %2545
          %2547 = vadd.xlane.f32.xlu0 %v2504
          %v2548 = vpop.xlane.xlu0 %2547
          %2549 = vadd.xlane.f32.xlu0 %v2505
          %v2550 = vpop.xlane.xlu0 %2549
          %2551 = vadd.xlane.f32.xlu0 %v2506
          %v2552 = vpop.xlane.xlu0 %2551
          %2553 = vadd.xlane.f32.xlu0 %v2507
          %v2554 = vpop.xlane.xlu0 %2553
          %2555 = vadd.xlane.f32.xlu0 %v2508
          %v2556 = vpop.xlane.xlu0 %2555
          %2557 = vadd.xlane.f32.xlu0 %v2509
          %v2558 = vpop.xlane.xlu0 %2557
          %2559 = vadd.xlane.f32.xlu0 %v2510
          %v2560 = vpop.xlane.xlu0 %2559
          %2561 = vadd.xlane.f32.xlu0 %v2511
          %v2562 = vpop.xlane.xlu0 %2561
          %2563 = vadd.xlane.f32.xlu0 %v2512
          %v2564 = vpop.xlane.xlu0 %2563
          %2565 = vadd.xlane.f32.xlu0 %v2513
          %v2566 = vpop.xlane.xlu0 %2565
          %2567 = vadd.xlane.f32.xlu0 %v2514
          %v2568 = vpop.xlane.xlu0 %2567
          %2569 = vadd.xlane.f32.xlu0 %v2515
          %v2570 = vpop.xlane.xlu0 %2569
          %2571 = vadd.xlane.f32.xlu0 %v2516
          %v2572 = vpop.xlane.xlu0 %2571
          %2573 = vadd.xlane.f32.xlu0 %v2517
          %v2574 = vpop.xlane.xlu0 %2573
          %2575 = vadd.xlane.f32.xlu0 %v2518
          %v2576 = vpop.xlane.xlu0 %2575
          %2577 = vadd.xlane.f32.xlu0 %v2519
          %v2578 = vpop.xlane.xlu0 %2577
          %2579 = vadd.xlane.f32.xlu0 %v2520
          %v2580 = vpop.xlane.xlu0 %2579
          %2581 = vadd.xlane.f32.xlu0 %v2521
          %v2582 = vpop.xlane.xlu0 %2581
          %2583 = vadd.xlane.f32.xlu0 %v2522
          %v2584 = vpop.xlane.xlu0 %2583
          %2585 = vadd.xlane.f32.xlu0 %v2523
          %v2586 = vpop.xlane.xlu0 %2585
          %2587 = vadd.xlane.f32.xlu0 %v2524
          %v2588 = vpop.xlane.xlu0 %2587
          %v2589 = vmax.f32 %v2526, 1e-12
          %v2590 = vmax.f32 %v2528, 1e-12
          %v2591 = vmax.f32 %v2530, 1e-12
          %v2592 = vmax.f32 %v2532, 1e-12
          %v2593 = vmax.f32 %v2534, 1e-12
          %v2594 = vmax.f32 %v2536, 1e-12
          %v2595 = vmax.f32 %v2538, 1e-12
          %v2596 = vmax.f32 %v2540, 1e-12
          %v2597 = vmax.f32 %v2542, 1e-12
          %v2598 = vmax.f32 %v2544, 1e-12
          %v2599 = vmax.f32 %v2546, 1e-12
          %v2600 = vmax.f32 %v2548, 1e-12
          %v2601 = vmax.f32 %v2550, 1e-12
          %v2602 = vmax.f32 %v2552, 1e-12
          %v2603 = vmax.f32 %v2554, 1e-12
          %v2604 = vmax.f32 %v2556, 1e-12
          %v2605 = vmax.f32 %v2558, 1e-12
          %v2606 = vmax.f32 %v2560, 1e-12
          %v2607 = vmax.f32 %v2562, 1e-12
          %v2608 = vmax.f32 %v2564, 1e-12
          %v2609 = vmax.f32 %v2566, 1e-12
          %v2610 = vmax.f32 %v2568, 1e-12
          %v2611 = vmax.f32 %v2570, 1e-12
          %v2612 = vmax.f32 %v2572, 1e-12
          %v2613 = vmax.f32 %v2574, 1e-12
          %v2614 = vmax.f32 %v2576, 1e-12
          %v2615 = vmax.f32 %v2578, 1e-12
          %v2616 = vmax.f32 %v2580, 1e-12
          %v2617 = vmax.f32 %v2582, 1e-12
          %v2618 = vmax.f32 %v2584, 1e-12
          %v2619 = vmax.f32 %v2586, 1e-12
          %v2620 = vmax.f32 %v2588, 1e-12
          %v2621 = vrcp.pop %v2589
          %v2622 = vmul.f32 %v2461, %v2621
          %v2623 = vrcp.pop %v2590
          %v2624 = vmul.f32 %v2462, %v2623
          %v2625 = vrcp.pop %v2591
          %v2626 = vmul.f32 %v2463, %v2625
          %v2627 = vrcp.pop %v2592
          %v2628 = vmul.f32 %v2464, %v2627
          %v2629 = vrcp.pop %v2593
          %v2630 = vmul.f32 %v2465, %v2629
          %v2631 = vrcp.pop %v2594
          %v2632 = vmul.f32 %v2466, %v2631
          %v2633 = vrcp.pop %v2595
          %v2634 = vmul.f32 %v2467, %v2633
          %v2635 = vrcp.pop %v2596
          %v2636 = vmul.f32 %v2468, %v2635
          %v2637 = vrcp.pop %v2597
          %v2638 = vmul.f32 %v2469, %v2637
          %v2639 = vrcp.pop %v2598
          %v2640 = vmul.f32 %v2470, %v2639
          %v2641 = vrcp.pop %v2599
          %v2642 = vmul.f32 %v2471, %v2641
          %v2643 = vrcp.pop %v2600
          %v2644 = vmul.f32 %v2472, %v2643
          %v2645 = vrcp.pop %v2601
          %v2646 = vmul.f32 %v2473, %v2645
          %v2647 = vrcp.pop %v2602
          %v2648 = vmul.f32 %v2474, %v2647
          %v2649 = vrcp.pop %v2603
          %v2650 = vmul.f32 %v2475, %v2649
          %v2651 = vrcp.pop %v2604
          %v2652 = vmul.f32 %v2476, %v2651
          %v2653 = vrcp.pop %v2605
          %v2654 = vmul.f32 %v2477, %v2653
          %v2655 = vrcp.pop %v2606
          %v2656 = vmul.f32 %v2478, %v2655
          %v2657 = vrcp.pop %v2607
          %v2658 = vmul.f32 %v2479, %v2657
          %v2659 = vrcp.pop %v2608
          %v2660 = vmul.f32 %v2480, %v2659
          %v2661 = vrcp.pop %v2609
          %v2662 = vmul.f32 %v2481, %v2661
          %v2663 = vrcp.pop %v2610
          %v2664 = vmul.f32 %v2482, %v2663
          %v2665 = vrcp.pop %v2611
          %v2666 = vmul.f32 %v2483, %v2665
          %v2667 = vrcp.pop %v2612
          %v2668 = vmul.f32 %v2484, %v2667
          %v2669 = vrcp.pop %v2613
          %v2670 = vmul.f32 %v2485, %v2669
          %v2671 = vrcp.pop %v2614
          %v2672 = vmul.f32 %v2486, %v2671
          %v2673 = vrcp.pop %v2615
          %v2674 = vmul.f32 %v2487, %v2673
          %v2675 = vrcp.pop %v2616
          %v2676 = vmul.f32 %v2488, %v2675
          %v2677 = vrcp.pop %v2617
          %v2678 = vmul.f32 %v2489, %v2677
          %v2679 = vrcp.pop %v2618
          %v2680 = vmul.f32 %v2490, %v2679
          %v2681 = vrcp.pop %v2619
          %v2682 = vmul.f32 %v2491, %v2681
          %v2683 = vrcp.pop %v2620
          %v2684 = vmul.f32 %v2492, %v2683
          %2685 = vst [vmem:[%s532] sm:$0xff] %v2622
          %2686 = vst [vmem:[%s532 + $0x8] sm:$0xff] %v2624
          %2687 = vst [vmem:[%s532 + $0x10] sm:$0xff] %v2626
          %2688 = vst [vmem:[%s532 + $0x18] sm:$0xff] %v2628
          %2689 = vst [vmem:[%s532 + $0x20] sm:$0xff] %v2630
          %2690 = vst [vmem:[%s532 + $0x28] sm:$0xff] %v2632
          %2691 = vst [vmem:[%s532 + $0x30] sm:$0xff] %v2634
          %2692 = vst [vmem:[%s532 + $0x38] sm:$0xff] %v2636
          %2693 = vst [vmem:[%s532 + $0x40] sm:$0xff] %v2638
          %2694 = vst [vmem:[%s532 + $0x48] sm:$0xff] %v2640
          %2695 = vst [vmem:[%s532 + $0x50] sm:$0xff] %v2642
          %2696 = vst [vmem:[%s532 + $0x58] sm:$0xff] %v2644
          %2697 = vst [vmem:[%s532 + $0x60] sm:$0xff] %v2646
          %2698 = vst [vmem:[%s532 + $0x68] sm:$0xff] %v2648
          %2699 = vst [vmem:[%s532 + $0x70] sm:$0xff] %v2650
          %2700 = vst [vmem:[%s532 + $0x78] sm:$0xff] %v2652
          %2701 = vst [vmem:[%s532 + $0x80] sm:$0xff] %v2654
          %2702 = vst [vmem:[%s532 + $0x88] sm:$0xff] %v2656
          %2703 = vst [vmem:[%s532 + $0x90] sm:$0xff] %v2658
          %2704 = vst [vmem:[%s532 + $0x98] sm:$0xff] %v2660
          %2705 = vst [vmem:[%s532 + $0xa0] sm:$0xff] %v2662
          %2706 = vst [vmem:[%s532 + $0xa8] sm:$0xff] %v2664
          %2707 = vst [vmem:[%s532 + $0xb0] sm:$0xff] %v2666
          %2708 = vst [vmem:[%s532 + $0xb8] sm:$0xff] %v2668
          %2709 = vst [vmem:[%s532 + $0xc0] sm:$0xff] %v2670
          %2710 = vst [vmem:[%s532 + $0xc8] sm:$0xff] %v2672
          %2711 = vst [vmem:[%s532 + $0xd0] sm:$0xff] %v2674
          %2712 = vst [vmem:[%s532 + $0xd8] sm:$0xff] %v2676
          %2713 = vst [vmem:[%s532 + $0xe0] sm:$0xff] %v2678
          %2714 = vst [vmem:[%s532 + $0xe8] sm:$0xff] %v2680
          %2715 = vst [vmem:[%s532 + $0xf0] sm:$0xff] %v2682
          %2716 = vst [vmem:[%s532 + $0xf8] sm:$0xff] %v2684
        $region102: #{bright_a_forward.11} parent=89 // pred_fallthru
          _
        %s2717 = smul.u32 32, %s24
        %p2718 = scmp.lt.s32.totalorder %s2717, 63
        %s2719 = scalar_select %p2718, %s2717, 63
        %s2720 = smul.addr %s2719, 8
        %s2721 = scalar_lea.vmem %s9, %s2720
        // Predicated region
        $region103: #{bright_a_forward.11} parent=89 // pred_check
          %p2722 = pneg %p251
        $region104: #{bright_a_forward.11} parent=89 // pred_check_branch
          %2724 = sbr.rel (%p2722) target = $region106
        $region105: #{bright_a_forward.11} parent=89 // pred_region
          %s2725 = smul.u32 32, %s24
        $region106: #{bright_a_forward.11} parent=89 // pred_fallthru
          _
      $region90: #{bright_a_forward.11} parent=5 // pred_fallthru
        _
      %p2726 = scmp.le.s32.totalorder 2, %s15
      // Predicated region
      $region107: #{bright_a_forward.11} parent=5 // pred_check
        %p2727 = pneg %p2726
      $region108: #{bright_a_forward.11} parent=5 // pred_check_branch
        %2729 = sbr.rel (%p2727) target = $region110
      $region109: #{bright_a_forward.11} parent=5 // pred_region
        %s2730 = ssub.s32 %s15, 2
        // Predicated region
        $region111: #{bright_a_forward.11} parent=109 // pred_check
          %p2731 = pneg %p257
        $region112: #{bright_a_forward.11} parent=109 // pred_check_branch
          %2733 = sbr.rel (%p2731) target = $region114
        $region113: #{bright_a_forward.11} parent=109 // pred_region
          %s2734 = smul.u32 32, %s26
          %p2735 = scmp.lt.s32.totalorder %s2734, 63
          %s2736 = scalar_select %p2735, %s2734, 63
          %s2737 = smul.addr %s2736, 8
          %s2738 = scalar_lea.vmem %s9, %s2737
        $region114: #{bright_a_forward.11} parent=109 // pred_fallthru
          _
      $region110: #{bright_a_forward.11} parent=5 // pred_fallthru
        _
    $region6: #{bright_a_forward.11} parent=1 // loop_footer
      %s19 = sadd.s32 1, %s15
    $region7: #{bright_a_forward.11} parent=1 // loop_footer_branch
      %14 = sbr.rel target = $region3
    $region8: #{bright_a_forward.11} parent=1 // loop_exit
      _

</llo_original>
